<compile_context>
chip_gen: v7x
topology: tpu7x:2x2x1
jax: 0.10.0
libtpu: 0.0.40
codegen_flags: <defaults>
</compile_context>

<pallas_src>
import jax
import jax.numpy as jnp
from jax.experimental import pallas as pl
from jax.experimental.pallas import tpu as pltpu

# Logical (PyTorch) dims
C_IN = 28 * 28      # 784
C_OUT = 256
H2 = 2 * C_OUT      # 512
F_OUT = 20
DEC_H = 400

# Internal lane-padded dims (multiples of 128) -- these never touch HBM activations
LAT_PAD = 128       # 20  -> 128 (each of the mean / logvar halves of the fused fc3)
DEC_PAD = 512       # 400 -> 512 (decoder hidden)

MAX_TB = 512        # max batch rows per grid step


def _round_up(n, m):
    return (n + m - 1) // m * m


def _vae_kernel(x_ref,
                w1_ref, b1_ref,
                w2_ref, b2_ref,
                w3_ref, b3_ref,
                w4_ref, b4_ref,
                w5_ref, b5_ref,
                eps_ref,
                mean_ref, logvar_ref, recon_ref):
    bf16 = jnp.bfloat16
    f32 = jnp.float32

    x = x_ref[...]                                                     # [TB, 784] bf16

    # ---- encoder ----
    h1 = jnp.dot(x, w1_ref[...], preferred_element_type=f32) + b1_ref[...]
    h1 = jnp.maximum(h1, 0.0)                                          # [TB, 256]

    h2 = jnp.dot(h1.astype(bf16), w2_ref[...], preferred_element_type=f32) + b2_ref[...]
    h2 = jnp.maximum(h2, 0.0)                                          # [TB, 512]

    # fused fc31/fc32: mean in lanes [0:128), logvar in [128:256); real data in 20 lanes each
    lat = jnp.dot(h2.astype(bf16), w3_ref[...], preferred_element_type=f32) + b3_ref[...]
    mean_p = lat[:, :LAT_PAD]                                          # [TB, 128]
    logvar_p = lat[:, LAT_PAD:]                                        # [TB, 128]
    mean_ref[...] = mean_p[:, :F_OUT]                                  # [TB, 20] f32
    logvar_ref[...] = logvar_p[:, :F_OUT]                              # [TB, 20] f32

    # ---- reparameterize (eps ~ U[0,1) like torch.rand_like) ----
    std_p = jnp.exp(0.5 * logvar_p)
    z = mean_p + eps_ref[...] * std_p                                  # [TB, 128]

    # ---- decoder ----
    h3 = jnp.dot(z.astype(bf16), w4_ref[...], preferred_element_type=f32) + b4_ref[...]
    h3 = jnp.maximum(h3, 0.0)                                          # [TB, 512]

    logits = jnp.dot(h3.astype(bf16), w5_ref[...], preferred_element_type=f32) + b5_ref[...]
    recon_ref[...] = jax.nn.sigmoid(logits).astype(bf16)               # [TB, 784] bf16


def vae_forward(x_flat, packed, eps_pad):
    """x_flat: [B, 784] (any float dtype; consumed as bf16).
    packed: bf16 weights ([in, out], fused/padded) + f32 (1, N) biases.
    eps_pad: [B, 128] f32 U[0,1) noise; only lanes [0, 20) are used."""
    B = x_flat.shape[0]
    B8 = _round_up(max(B, 1), 8)

    if B8 <= 8:
        TB = B8                                   # single tiny tile
    else:
        # >= 2 grid steps (keeps both v7x TensorCores busy); cap tile at MAX_TB rows and
        # pick the tile that minimises batch padding.
        n_steps = max(2, pl.cdiv(B8, MAX_TB))
        TB = _round_up(pl.cdiv(B8, n_steps), 8)
    Bp = _round_up(B8, TB)

    x_p = x_flat.astype(jnp.bfloat16)
    eps_p = eps_pad.astype(jnp.float32)
    if Bp != B:
        x_p = jnp.pad(x_p, ((0, Bp - B), (0, 0)))
        eps_p = jnp.pad(eps_p, ((0, Bp - B), (0, 0)))

    def batch_spec(n):
        return pl.BlockSpec((TB, n), lambda i: (i, 0))

    def const_spec(shape):
        return pl.BlockSpec(shape, lambda i: (0, 0))

    in_specs = [
        batch_spec(C_IN),                                               # x (bf16, 784 lanes)
        const_spec((C_IN, C_OUT)), const_spec((1, C_OUT)),              # fc1
        const_spec((C_OUT, H2)), const_spec((1, H2)),                   # fc2
        const_spec((H2, 2 * LAT_PAD)), const_spec((1, 2 * LAT_PAD)),    # fused fc31/fc32
        const_spec((LAT_PAD, DEC_PAD)), const_spec((1, DEC_PAD)),       # fc4
        const_spec((DEC_PAD, C_IN)), const_spec((1, C_IN)),             # fc5
        batch_spec(LAT_PAD),                                            # eps
    ]
    out_specs = (batch_spec(F_OUT), batch_spec(F_OUT), batch_spec(C_IN))
    out_shape = (jax.ShapeDtypeStruct((Bp, F_OUT), jnp.float32),        # mean
                 jax.ShapeDtypeStruct((Bp, F_OUT), jnp.float32),        # logvar
                 jax.ShapeDtypeStruct((Bp, C_IN), jnp.bfloat16))        # recon (bf16)

    mean_p, logvar_p, recon_p = pl.pallas_call(
        _vae_kernel,
        grid=(Bp // TB,),
        in_specs=in_specs,
        out_specs=out_specs,
        out_shape=out_shape,
        compiler_params=pltpu.CompilerParams(
            dimension_semantics=("parallel",),
            vmem_limit_bytes=32 << 20,
        ),
    )(x_p,
      packed["w1"], packed["b1"],
      packed["w2"], packed["b2"],
      packed["w3"], packed["b3"],
      packed["w4"], packed["b4"],
      packed["w5"], packed["b5"],
      eps_p)

    if Bp != B:
        return recon_p[:B], mean_p[:B], logvar_p[:B]
    return recon_p, mean_p, logvar_p


vae_forward = jax.jit(vae_forward)


def init_params(key):
    """Deterministic synthetic parameters; weights stored as [in, out] (transposed vs torch)."""
    def linear(k, fan_in, fan_out):
        kw, kb = jax.random.split(k)
        bound = 1.0 / jnp.sqrt(fan_in)
        w = jax.random.uniform(kw, (fan_in, fan_out), jnp.float32, -bound, bound)
        b = jax.random.uniform(kb, (fan_out,), jnp.float32, -bound, bound)
        return w, b

    keys = jax.random.split(key, 6)
    p = {}
    p["w1"], p["b1"] = linear(keys[0], C_IN, C_OUT)          # 784 -> 256
    p["w2"], p["b2"] = linear(keys[1], C_OUT, H2)            # 256 -> 512
    p["w31"], p["b31"] = linear(keys[2], H2, F_OUT)          # 512 -> 20
    p["w32"], p["b32"] = linear(keys[3], H2, F_OUT)          # 512 -> 20
    p["w4"], p["b4"] = linear(keys[4], F_OUT, DEC_H)         # 20  -> 400
    p["w5"], p["b5"] = linear(keys[5], DEC_H, C_IN)          # 400 -> 784
    return p


def pack_params(p):
    """Fuse fc31/fc32, zero-pad the small internal dims, cast weights to bf16 (biases f32)."""
    bf16 = jnp.bfloat16
    f32 = jnp.float32

    def padw(w, rows, cols):
        return jnp.pad(w, ((0, rows - w.shape[0]), (0, cols - w.shape[1]))).astype(bf16)

    def padb(b, cols):
        return jnp.pad(b, (0, cols - b.shape[0])).astype(f32).reshape(1, cols)

    # fused fc31/fc32: mean cols -> [0:20), logvar cols -> [128:148); padded cols are zero
    w3 = jnp.zeros((H2, 2 * LAT_PAD), f32)
    w3 = w3.at[:, :F_OUT].set(p["w31"]).at[:, LAT_PAD:LAT_PAD + F_OUT].set(p["w32"])
    b3 = jnp.zeros((2 * LAT_PAD,), f32)
    b3 = b3.at[:F_OUT].set(p["b31"]).at[LAT_PAD:LAT_PAD + F_OUT].set(p["b32"])

    return {
        "w1": p["w1"].astype(bf16),             "b1": padb(p["b1"], C_OUT),
        "w2": p["w2"].astype(bf16),             "b2": padb(p["b2"], H2),
        "w3": w3.astype(bf16),                  "b3": b3.reshape(1, 2 * LAT_PAD),
        "w4": padw(p["w4"], LAT_PAD, DEC_PAD),  "b4": padb(p["b4"], DEC_PAD),
        "w5": padw(p["w5"], DEC_PAD, C_IN),     "b5": padb(p["b5"], C_IN),
    }


def vae_reference(x_flat, p, eps):
    """Pure-JAX reference of the PyTorch forward, using the same bf16-matmul precision."""
    bf16 = jnp.bfloat16
    f32 = jnp.float32

    def mm(a, w):
        return jnp.dot(a.astype(bf16), w.astype(bf16), preferred_element_type=f32)

    h1 = jnp.maximum(mm(x_flat, p["w1"]) + p["b1"], 0.0)
    h2 = jnp.maximum(mm(h1, p["w2"]) + p["b2"], 0.0)
    mean = mm(h2, p["w31"]) + p["b31"]
    logvar = mm(h2, p["w32"]) + p["b32"]
    z = mean + eps * jnp.exp(0.5 * logvar)
    h3 = jnp.maximum(mm(z, p["w4"]) + p["b4"], 0.0)
    recon = jax.nn.sigmoid(mm(h3, p["w5"]) + p["b5"])
    return recon, mean, logvar


if __name__ == "__main__":
    key = jax.random.PRNGKey(0)
    k_x, k_p, k_eps = jax.random.split(key, 3)

    B = 2
    x = jax.random.uniform(k_x, (B, 1, 28, 28), jnp.float32)        # NCHW input
    x_flat = x.reshape(-1, C_IN).astype(jnp.bfloat16)               # x.view(-1, 784), bf16 interface

    params = init_params(k_p)
    packed = pack_params(params)
    # torch.rand_like -> U[0,1); generated directly at 128 lanes (only [:, :20] is real noise)
    eps_pad = jax.random.uniform(k_eps, (B, LAT_PAD), jnp.float32)

    recon, mean, logvar = jax.block_until_ready(vae_forward(x_flat, packed, eps_pad))

    recon_r, mean_r, logvar_r = vae_reference(x_flat, params, eps_pad[:, :F_OUT])
    assert recon.dtype == jnp.bfloat16
    assert jnp.allclose(recon.astype(jnp.float32), recon_r, atol=8e-3), "recon mismatch"
    assert jnp.allclose(mean, mean_r, atol=2e-3), "mean mismatch"
    assert jnp.allclose(logvar, logvar_r, atol=2e-3), "logvar mismatch"

    print("KERNEL_OK")
</pallas_src>

<mosaic_0001>
module attributes {stable_mosaic.version = 11 : i64} {
  func.func @_vae_kernel(%arg0: i32, %arg1: memref<8x784xbf16, #tpu.memory_space<vmem>>, %arg2: memref<784x256xbf16, #tpu.memory_space<vmem>>, %arg3: memref<1x256xf32, #tpu.memory_space<vmem>>, %arg4: memref<256x512xbf16, #tpu.memory_space<vmem>>, %arg5: memref<1x512xf32, #tpu.memory_space<vmem>>, %arg6: memref<512x256xbf16, #tpu.memory_space<vmem>>, %arg7: memref<1x256xf32, #tpu.memory_space<vmem>>, %arg8: memref<128x512xbf16, #tpu.memory_space<vmem>>, %arg9: memref<1x512xf32, #tpu.memory_space<vmem>>, %arg10: memref<512x784xbf16, #tpu.memory_space<vmem>>, %arg11: memref<1x784xf32, #tpu.memory_space<vmem>>, %arg12: memref<8x128xf32, #tpu.memory_space<vmem>>, %arg13: memref<8x20xf32, #tpu.memory_space<vmem>>, %arg14: memref<8x20xf32, #tpu.memory_space<vmem>>, %arg15: memref<8x784xbf16, #tpu.memory_space<vmem>>) attributes {dimension_semantics = [#tpu.dimension_semantics<parallel>], iteration_bounds = array<i64: 1>, scalar_prefetch = 0 : i64, scratch_operands = 0 : i64, tpu.core_type = #tpu.core_type<tc>, window_params = [{transform_indices = @transform_0, window_bounds = array<i64: 8, 784>}, {pipeline_mode = #tpu.pipeline_mode<synchronous>, transform_indices = @transform_1, window_bounds = array<i64: 784, 256>}, {pipeline_mode = #tpu.pipeline_mode<synchronous>, transform_indices = @transform_2, window_bounds = array<i64: 1, 256>}, {pipeline_mode = #tpu.pipeline_mode<synchronous>, transform_indices = @transform_3, window_bounds = array<i64: 256, 512>}, {pipeline_mode = #tpu.pipeline_mode<synchronous>, transform_indices = @transform_4, window_bounds = array<i64: 1, 512>}, {pipeline_mode = #tpu.pipeline_mode<synchronous>, transform_indices = @transform_5, window_bounds = array<i64: 512, 256>}, {pipeline_mode = #tpu.pipeline_mode<synchronous>, transform_indices = @transform_6, window_bounds = array<i64: 1, 256>}, {pipeline_mode = #tpu.pipeline_mode<synchronous>, transform_indices = @transform_7, window_bounds = array<i64: 128, 512>}, {pipeline_mode = #tpu.pipeline_mode<synchronous>, transform_indices = @transform_8, window_bounds = array<i64: 1, 512>}, {pipeline_mode = #tpu.pipeline_mode<synchronous>, transform_indices = @transform_9, window_bounds = array<i64: 512, 784>}, {pipeline_mode = #tpu.pipeline_mode<synchronous>, transform_indices = @transform_10, window_bounds = array<i64: 1, 784>}, {transform_indices = @transform_11, window_bounds = array<i64: 8, 128>}, {transform_indices = @transform_12, window_bounds = array<i64: 8, 20>}, {transform_indices = @transform_13, window_bounds = array<i64: 8, 20>}, {transform_indices = @transform_14, window_bounds = array<i64: 8, 784>}]} {
    %c0 = arith.constant 0 : index
    %c0_0 = arith.constant 0 : index
    %0 = vector.load %arg1[%c0, %c0_0] : memref<8x784xbf16, #tpu.memory_space<vmem>>, vector<8x784xbf16>
    %c0_1 = arith.constant 0 : index
    %c0_2 = arith.constant 0 : index
    %1 = vector.load %arg2[%c0_1, %c0_2] : memref<784x256xbf16, #tpu.memory_space<vmem>>, vector<784x256xbf16>
    %cst = arith.constant dense<0.000000e+00> : vector<8x256xf32>
    %2 = tpu.matmul %0, %1, %cst {dimension_numbers = #tpu.dot_dimension_numbers<[1], [0], [0], [1], [0, 0, 1, 1], [], []>} : vector<8x784xbf16>, vector<784x256xbf16>, vector<8x256xf32> -> vector<8x256xf32>
    %c0_3 = arith.constant 0 : index
    %c0_4 = arith.constant 0 : index
    %3 = vector.load %arg3[%c0_3, %c0_4] : memref<1x256xf32, #tpu.memory_space<vmem>>, vector<1x256xf32>
    %4 = vector.broadcast %3 : vector<1x256xf32> to vector<8x256xf32>
    %5 = arith.addf %2, %4 : vector<8x256xf32>
    %cst_5 = arith.constant 0.000000e+00 : f32
    %6 = vector.broadcast %cst_5 : f32 to vector<8x256xf32>
    %7 = arith.maximumf %5, %6 : vector<8x256xf32>
    %8 = arith.truncf %7 : vector<8x256xf32> to vector<8x256xbf16>
    %c0_6 = arith.constant 0 : index
    %c0_7 = arith.constant 0 : index
    %9 = vector.load %arg4[%c0_6, %c0_7] : memref<256x512xbf16, #tpu.memory_space<vmem>>, vector<256x512xbf16>
    %cst_8 = arith.constant dense<0.000000e+00> : vector<8x512xf32>
    %10 = tpu.matmul %8, %9, %cst_8 {dimension_numbers = #tpu.dot_dimension_numbers<[1], [0], [0], [1], [0, 0, 1, 1], [], []>} : vector<8x256xbf16>, vector<256x512xbf16>, vector<8x512xf32> -> vector<8x512xf32>
    %c0_9 = arith.constant 0 : index
    %c0_10 = arith.constant 0 : index
    %11 = vector.load %arg5[%c0_9, %c0_10] : memref<1x512xf32, #tpu.memory_space<vmem>>, vector<1x512xf32>
    %12 = vector.broadcast %11 : vector<1x512xf32> to vector<8x512xf32>
    %13 = arith.addf %10, %12 : vector<8x512xf32>
    %cst_11 = arith.constant 0.000000e+00 : f32
    %14 = vector.broadcast %cst_11 : f32 to vector<8x512xf32>
    %15 = arith.maximumf %13, %14 : vector<8x512xf32>
    %16 = arith.truncf %15 : vector<8x512xf32> to vector<8x512xbf16>
    %c0_12 = arith.constant 0 : index
    %c0_13 = arith.constant 0 : index
    %17 = vector.load %arg6[%c0_12, %c0_13] : memref<512x256xbf16, #tpu.memory_space<vmem>>, vector<512x256xbf16>
    %cst_14 = arith.constant dense<0.000000e+00> : vector<8x256xf32>
    %18 = tpu.matmul %16, %17, %cst_14 {dimension_numbers = #tpu.dot_dimension_numbers<[1], [0], [0], [1], [0, 0, 1, 1], [], []>} : vector<8x512xbf16>, vector<512x256xbf16>, vector<8x256xf32> -> vector<8x256xf32>
    %c0_15 = arith.constant 0 : index
    %c0_16 = arith.constant 0 : index
    %19 = vector.load %arg7[%c0_15, %c0_16] : memref<1x256xf32, #tpu.memory_space<vmem>>, vector<1x256xf32>
    %20 = vector.broadcast %19 : vector<1x256xf32> to vector<8x256xf32>
    %21 = arith.addf %18, %20 : vector<8x256xf32>
    %22 = vector.extract_strided_slice %21 {offsets = [0, 0], sizes = [8, 128], strides = [1, 1]} : vector<8x256xf32> to vector<8x128xf32>
    %23 = vector.extract_strided_slice %21 {offsets = [0, 128], sizes = [8, 128], strides = [1, 1]} : vector<8x256xf32> to vector<8x128xf32>
    %24 = vector.extract_strided_slice %22 {offsets = [0, 0], sizes = [8, 20], strides = [1, 1]} : vector<8x128xf32> to vector<8x20xf32>
    %c0_17 = arith.constant 0 : index
    %c0_18 = arith.constant 0 : index
    %25 = vector.load %arg13[%c0_17, %c0_18] : memref<8x20xf32, #tpu.memory_space<vmem>>, vector<8x20xf32>
    tpu.vector_store %arg13[%c0_17, %c0_18], %24 {strides = array<i32>} : memref<8x20xf32, #tpu.memory_space<vmem>>, vector<8x20xf32>,
    %26 = vector.extract_strided_slice %23 {offsets = [0, 0], sizes = [8, 20], strides = [1, 1]} : vector<8x128xf32> to vector<8x20xf32>
    %c0_19 = arith.constant 0 : index
    %c0_20 = arith.constant 0 : index
    %27 = vector.load %arg14[%c0_19, %c0_20] : memref<8x20xf32, #tpu.memory_space<vmem>>, vector<8x20xf32>
    tpu.vector_store %arg14[%c0_19, %c0_20], %26 {strides = array<i32>} : memref<8x20xf32, #tpu.memory_space<vmem>>, vector<8x20xf32>,
    %cst_21 = arith.constant 5.000000e-01 : f32
    %28 = vector.broadcast %cst_21 : f32 to vector<8x128xf32>
    %29 = arith.mulf %28, %23 : vector<8x128xf32>
    %30 = math.exp %29 : vector<8x128xf32>
    %c0_22 = arith.constant 0 : index
    %c0_23 = arith.constant 0 : index
    %31 = vector.load %arg12[%c0_22, %c0_23] : memref<8x128xf32, #tpu.memory_space<vmem>>, vector<8x128xf32>
    %32 = arith.mulf %31, %30 : vector<8x128xf32>
    %33 = arith.addf %22, %32 : vector<8x128xf32>
    %34 = arith.truncf %33 : vector<8x128xf32> to vector<8x128xbf16>
    %c0_24 = arith.constant 0 : index
    %c0_25 = arith.constant 0 : index
    %35 = vector.load %arg8[%c0_24, %c0_25] : memref<128x512xbf16, #tpu.memory_space<vmem>>, vector<128x512xbf16>
    %cst_26 = arith.constant dense<0.000000e+00> : vector<8x512xf32>
    %36 = tpu.matmul %34, %35, %cst_26 {dimension_numbers = #tpu.dot_dimension_numbers<[1], [0], [0], [1], [0, 0, 1, 1], [], []>} : vector<8x128xbf16>, vector<128x512xbf16>, vector<8x512xf32> -> vector<8x512xf32>
    %c0_27 = arith.constant 0 : index
    %c0_28 = arith.constant 0 : index
    %37 = vector.load %arg9[%c0_27, %c0_28] : memref<1x512xf32, #tpu.memory_space<vmem>>, vector<1x512xf32>
    %38 = vector.broadcast %37 : vector<1x512xf32> to vector<8x512xf32>
    %39 = arith.addf %36, %38 : vector<8x512xf32>
    %cst_29 = arith.constant 0.000000e+00 : f32
    %40 = vector.broadcast %cst_29 : f32 to vector<8x512xf32>
    %41 = arith.maximumf %39, %40 : vector<8x512xf32>
    %42 = arith.truncf %41 : vector<8x512xf32> to vector<8x512xbf16>
    %c0_30 = arith.constant 0 : index
    %c0_31 = arith.constant 0 : index
    %43 = vector.load %arg10[%c0_30, %c0_31] : memref<512x784xbf16, #tpu.memory_space<vmem>>, vector<512x784xbf16>
    %cst_32 = arith.constant dense<0.000000e+00> : vector<8x784xf32>
    %44 = tpu.matmul %42, %43, %cst_32 {dimension_numbers = #tpu.dot_dimension_numbers<[1], [0], [0], [1], [0, 0, 1, 1], [], []>} : vector<8x512xbf16>, vector<512x784xbf16>, vector<8x784xf32> -> vector<8x784xf32>
    %c0_33 = arith.constant 0 : index
    %c0_34 = arith.constant 0 : index
    %45 = vector.load %arg11[%c0_33, %c0_34] : memref<1x784xf32, #tpu.memory_space<vmem>>, vector<1x784xf32>
    %46 = vector.broadcast %45 : vector<1x784xf32> to vector<8x784xf32>
    %47 = arith.addf %44, %46 : vector<8x784xf32>
    %48 = arith.negf %47 : vector<8x784xf32>
    %49 = math.exp %48 : vector<8x784xf32>
    %cst_35 = arith.constant 1.000000e+00 : f32
    %50 = vector.broadcast %cst_35 : f32 to vector<8x784xf32>
    %51 = arith.addf %50, %49 : vector<8x784xf32>
    %52 = arith.divf %50, %51 : vector<8x784xf32>
    %53 = arith.truncf %52 : vector<8x784xf32> to vector<8x784xbf16>
    %c0_36 = arith.constant 0 : index
    %c0_37 = arith.constant 0 : index
    %54 = vector.load %arg15[%c0_36, %c0_37] : memref<8x784xbf16, #tpu.memory_space<vmem>>, vector<8x784xbf16>
    tpu.vector_store %arg15[%c0_36, %c0_37], %53 {strides = array<i32>} : memref<8x784xbf16, #tpu.memory_space<vmem>>, vector<8x784xbf16>,
    return
  }
  func.func @transform_0(%arg0: i32) -> (i32, i32) {
    %c0_i32 = arith.constant 0 : i32
    %c0_i32_0 = arith.constant 0 : i32
    return %arg0, %c0_i32 : i32, i32
  }
  func.func @transform_1(%arg0: i32) -> (i32, i32) {
    %c0_i32 = arith.constant 0 : i32
    %c0_i32_0 = arith.constant 0 : i32
    %c0_i32_1 = arith.constant 0 : i32
    return %c0_i32, %c0_i32_0 : i32, i32
  }
  func.func @transform_2(%arg0: i32) -> (i32, i32) {
    %c0_i32 = arith.constant 0 : i32
    %c0_i32_0 = arith.constant 0 : i32
    %c0_i32_1 = arith.constant 0 : i32
    return %c0_i32, %c0_i32_0 : i32, i32
  }
  func.func @transform_3(%arg0: i32) -> (i32, i32) {
    %c0_i32 = arith.constant 0 : i32
    %c0_i32_0 = arith.constant 0 : i32
    %c0_i32_1 = arith.constant 0 : i32
    return %c0_i32, %c0_i32_0 : i32, i32
  }
  func.func @transform_4(%arg0: i32) -> (i32, i32) {
    %c0_i32 = arith.constant 0 : i32
    %c0_i32_0 = arith.constant 0 : i32
    %c0_i32_1 = arith.constant 0 : i32
    return %c0_i32, %c0_i32_0 : i32, i32
  }
  func.func @transform_5(%arg0: i32) -> (i32, i32) {
    %c0_i32 = arith.constant 0 : i32
    %c0_i32_0 = arith.constant 0 : i32
    %c0_i32_1 = arith.constant 0 : i32
    return %c0_i32, %c0_i32_0 : i32, i32
  }
  func.func @transform_6(%arg0: i32) -> (i32, i32) {
    %c0_i32 = arith.constant 0 : i32
    %c0_i32_0 = arith.constant 0 : i32
    %c0_i32_1 = arith.constant 0 : i32
    return %c0_i32, %c0_i32_0 : i32, i32
  }
  func.func @transform_7(%arg0: i32) -> (i32, i32) {
    %c0_i32 = arith.constant 0 : i32
    %c0_i32_0 = arith.constant 0 : i32
    %c0_i32_1 = arith.constant 0 : i32
    return %c0_i32, %c0_i32_0 : i32, i32
  }
  func.func @transform_8(%arg0: i32) -> (i32, i32) {
    %c0_i32 = arith.constant 0 : i32
    %c0_i32_0 = arith.constant 0 : i32
    %c0_i32_1 = arith.constant 0 : i32
    return %c0_i32, %c0_i32_0 : i32, i32
  }
  func.func @transform_9(%arg0: i32) -> (i32, i32) {
    %c0_i32 = arith.constant 0 : i32
    %c0_i32_0 = arith.constant 0 : i32
    %c0_i32_1 = arith.constant 0 : i32
    return %c0_i32, %c0_i32_0 : i32, i32
  }
  func.func @transform_10(%arg0: i32) -> (i32, i32) {
    %c0_i32 = arith.constant 0 : i32
    %c0_i32_0 = arith.constant 0 : i32
    %c0_i32_1 = arith.constant 0 : i32
    return %c0_i32, %c0_i32_0 : i32, i32
  }
  func.func @transform_11(%arg0: i32) -> (i32, i32) {
    %c0_i32 = arith.constant 0 : i32
    %c0_i32_0 = arith.constant 0 : i32
    return %arg0, %c0_i32 : i32, i32
  }
  func.func @transform_12(%arg0: i32) -> (i32, i32) {
    %c0_i32 = arith.constant 0 : i32
    %c0_i32_0 = arith.constant 0 : i32
    return %arg0, %c0_i32 : i32, i32
  }
  func.func @transform_13(%arg0: i32) -> (i32, i32) {
    %c0_i32 = arith.constant 0 : i32
    %c0_i32_0 = arith.constant 0 : i32
    return %arg0, %c0_i32 : i32, i32
  }
  func.func @transform_14(%arg0: i32) -> (i32, i32) {
    %c0_i32 = arith.constant 0 : i32
    %c0_i32_0 = arith.constant 0 : i32
    return %arg0, %c0_i32 : i32, i32
  }
}

</mosaic_0001>

<llo_original>
// kernel: vae_forward.1
$region0: #{vae_forward.1}
  #allocation0 [shape = 'u32[]', space=smem, size = 0x4, offset = 0x4, fixed_abs, tag = 'smem constant byte address 0x4 - core index']
  #allocation1 [shape = 'u32[144,128]{1,0:T(1,128)}', space=vmem, size = 0x12000, scoped, tag = 'internal scratch']
  %s0 = inlined_call_operand.vmem [shape: bf16[8,784], index: 0, kind: input, shape index: {}]
  %s1 = inlined_call_operand.vmem [shape: bf16[784,256], index: 1, kind: input, shape index: {}]
  %s2 = inlined_call_operand.vmem [shape: f32[1,256], index: 2, kind: input, shape index: {}]
  %s3 = inlined_call_operand.vmem [shape: bf16[256,512], index: 3, kind: input, shape index: {}]
  %s4 = inlined_call_operand.vmem [shape: f32[1,512], index: 4, kind: input, shape index: {}]
  %s5 = inlined_call_operand.vmem [shape: bf16[512,256], index: 5, kind: input, shape index: {}]
  %s6 = inlined_call_operand.vmem [shape: f32[1,256], index: 6, kind: input, shape index: {}]
  %s7 = inlined_call_operand.vmem [shape: bf16[128,512], index: 7, kind: input, shape index: {}]
  %s8 = inlined_call_operand.vmem [shape: f32[1,512], index: 8, kind: input, shape index: {}]
  %s9 = inlined_call_operand.vmem [shape: bf16[512,784], index: 9, kind: input, shape index: {}]
  %s10 = inlined_call_operand.vmem [shape: f32[1,784], index: 10, kind: input, shape index: {}]
  %s11 = inlined_call_operand.vmem [shape: f32[8,128], index: 11, kind: input, shape index: {}]
  %s12 = inlined_call_operand.vmem [shape: f32[8,20], index: 12, kind: output, shape index: {0}]
  %s13 = inlined_call_operand.vmem [shape: f32[8,20], index: 13, kind: output, shape index: {1}]
  %s14 = inlined_call_operand.vmem [shape: bf16[8,784], index: 14, kind: output, shape index: {2}]
  %15 = xla_tuple %s12, %s13, %s14
  %s16 = sld [smem:[#allocation0]]
  $region74: #{vae_forward.1} parent=0
    _
  %s18 = ssub.s32 1, %s16
  %s19 = scalar_select 0, %s18, %s16
  // Predicated region
  $region2: #{vae_forward.1} parent=0 // pred_check
    _
  $region3: #{vae_forward.1} parent=0 // pred_check_branch
    %21 = sbr.rel (0) target = $region5
  $region4: #{vae_forward.1} parent=0 // pred_region
    _
  $region5: #{vae_forward.1} parent=0 // pred_fallthru
    _
  // Predicated region
  $region6: #{vae_forward.1} parent=0 // pred_check
    _
  $region7: #{vae_forward.1} parent=0 // pred_check_branch
    %23 = sbr.rel (0) target = $region9
  $region8: #{vae_forward.1} parent=0 // pred_region
    _
  $region9: #{vae_forward.1} parent=0 // pred_fallthru
    _
  // Predicated region
  $region10: #{vae_forward.1} parent=0 // pred_check
    _
  $region11: #{vae_forward.1} parent=0 // pred_check_branch
    %25 = sbr.rel (0) target = $region13
  $region12: #{vae_forward.1} parent=0 // pred_region
    _
  $region13: #{vae_forward.1} parent=0 // pred_fallthru
    _
  // Predicated region
  $region14: #{vae_forward.1} parent=0 // pred_check
    _
  $region15: #{vae_forward.1} parent=0 // pred_check_branch
    %27 = sbr.rel (0) target = $region17
  $region16: #{vae_forward.1} parent=0 // pred_region
    _
  $region17: #{vae_forward.1} parent=0 // pred_fallthru
    _
  // Predicated region
  $region18: #{vae_forward.1} parent=0 // pred_check
    _
  $region19: #{vae_forward.1} parent=0 // pred_check_branch
    %29 = sbr.rel (0) target = $region21
  $region20: #{vae_forward.1} parent=0 // pred_region
    _
  $region21: #{vae_forward.1} parent=0 // pred_fallthru
    _
  // Predicated region
  $region22: #{vae_forward.1} parent=0 // pred_check
    _
  $region23: #{vae_forward.1} parent=0 // pred_check_branch
    %31 = sbr.rel (0) target = $region25
  $region24: #{vae_forward.1} parent=0 // pred_region
    _
  $region25: #{vae_forward.1} parent=0 // pred_fallthru
    _
  // Predicated region
  $region26: #{vae_forward.1} parent=0 // pred_check
    _
  $region27: #{vae_forward.1} parent=0 // pred_check_branch
    %33 = sbr.rel (0) target = $region29
  $region28: #{vae_forward.1} parent=0 // pred_region
    _
  $region29: #{vae_forward.1} parent=0 // pred_fallthru
    _
  // Predicated region
  $region30: #{vae_forward.1} parent=0 // pred_check
    _
  $region31: #{vae_forward.1} parent=0 // pred_check_branch
    %35 = sbr.rel (0) target = $region33
  $region32: #{vae_forward.1} parent=0 // pred_region
    _
  $region33: #{vae_forward.1} parent=0 // pred_fallthru
    _
  // Predicated region
  $region34: #{vae_forward.1} parent=0 // pred_check
    _
  $region35: #{vae_forward.1} parent=0 // pred_check_branch
    %37 = sbr.rel (0) target = $region37
  $region36: #{vae_forward.1} parent=0 // pred_region
    _
  $region37: #{vae_forward.1} parent=0 // pred_fallthru
    _
  // Predicated region
  $region38: #{vae_forward.1} parent=0 // pred_check
    _
  $region39: #{vae_forward.1} parent=0 // pred_check_branch
    %39 = sbr.rel (0) target = $region41
  $region40: #{vae_forward.1} parent=0 // pred_region
    _
  $region41: #{vae_forward.1} parent=0 // pred_fallthru
    _
  // Predicated region
  $region42: #{vae_forward.1} parent=0 // pred_check
    _
  $region43: #{vae_forward.1} parent=0 // pred_check_branch
    %41 = sbr.rel (0) target = $region45
  $region44: #{vae_forward.1} parent=0 // pred_region
    _
  $region45: #{vae_forward.1} parent=0 // pred_fallthru
    _
  // Predicated region
  $region46: #{vae_forward.1} parent=0 // pred_check
    _
  $region47: #{vae_forward.1} parent=0 // pred_check_branch
    %43 = sbr.rel (0) target = $region49
  $region48: #{vae_forward.1} parent=0 // pred_region
    _
  $region49: #{vae_forward.1} parent=0 // pred_fallthru
    _
  %v45 = vld [vmem:[%s0] sm:$0xff]
  %v46 = vld [vmem:[%s0 + $0x8] sm:$0xff]
  %v47 = vld [vmem:[%s0 + $0x10] sm:$0xff]
  %v48 = vld [vmem:[%s0 + $0x18] sm:$0xf]
  %v49 = vld [vmem:[%s1] sm:$0xff]
  %v50 = vld [vmem:[%s1 + $0x8] sm:$0xff]
  %v51 = vld [vmem:[%s1 + $0x10] sm:$0xff]
  %v52 = vld [vmem:[%s1 + $0x18] sm:$0xff]
  %v53 = vld [vmem:[%s1 + $0x20] sm:$0xff]
  %v54 = vld [vmem:[%s1 + $0x28] sm:$0xff]
  %v55 = vld [vmem:[%s1 + $0x30] sm:$0xff]
  %v56 = vld [vmem:[%s1 + $0x38] sm:$0xff]
  %v57 = vld [vmem:[%s1 + $0x40] sm:$0xff]
  %v58 = vld [vmem:[%s1 + $0x48] sm:$0xff]
  %v59 = vld [vmem:[%s1 + $0x50] sm:$0xff]
  %v60 = vld [vmem:[%s1 + $0x58] sm:$0xff]
  %v61 = vld [vmem:[%s1 + $0x60] sm:$0xff]
  %v62 = vld [vmem:[%s1 + $0x68] sm:$0xff]
  %v63 = vld [vmem:[%s1 + $0x70] sm:$0xff]
  %v64 = vld [vmem:[%s1 + $0x78] sm:$0xff]
  %v65 = vld [vmem:[%s1 + $0x80] sm:$0xff]
  %v66 = vld [vmem:[%s1 + $0x88] sm:$0xff]
  %v67 = vld [vmem:[%s1 + $0x90] sm:$0xff]
  %v68 = vld [vmem:[%s1 + $0x98] sm:$0xff]
  %v69 = vld [vmem:[%s1 + $0xa0] sm:$0xff]
  %v70 = vld [vmem:[%s1 + $0xa8] sm:$0xff]
  %v71 = vld [vmem:[%s1 + $0xb0] sm:$0xff]
  %v72 = vld [vmem:[%s1 + $0xb8] sm:$0xff]
  %v73 = vld [vmem:[%s1 + $0xc0] sm:$0xff]
  %v74 = vld [vmem:[%s1 + $0xc8] sm:$0xff]
  %v75 = vld [vmem:[%s1 + $0xd0] sm:$0xff]
  %v76 = vld [vmem:[%s1 + $0xd8] sm:$0xff]
  %v77 = vld [vmem:[%s1 + $0xe0] sm:$0xff]
  %v78 = vld [vmem:[%s1 + $0xe8] sm:$0xff]
  %v79 = vld [vmem:[%s1 + $0xf0] sm:$0xff]
  %v80 = vld [vmem:[%s1 + $0xf8] sm:$0xff]
  %v81 = vld [vmem:[%s1 + $0x100] sm:$0xff]
  %v82 = vld [vmem:[%s1 + $0x108] sm:$0xff]
  %v83 = vld [vmem:[%s1 + $0x110] sm:$0xff]
  %v84 = vld [vmem:[%s1 + $0x118] sm:$0xff]
  %v85 = vld [vmem:[%s1 + $0x120] sm:$0xff]
  %v86 = vld [vmem:[%s1 + $0x128] sm:$0xff]
  %v87 = vld [vmem:[%s1 + $0x130] sm:$0xff]
  %v88 = vld [vmem:[%s1 + $0x138] sm:$0xff]
  %v89 = vld [vmem:[%s1 + $0x140] sm:$0xff]
  %v90 = vld [vmem:[%s1 + $0x148] sm:$0xff]
  %v91 = vld [vmem:[%s1 + $0x150] sm:$0xff]
  %v92 = vld [vmem:[%s1 + $0x158] sm:$0xff]
  %v93 = vld [vmem:[%s1 + $0x160] sm:$0xff]
  %v94 = vld [vmem:[%s1 + $0x168] sm:$0xff]
  %v95 = vld [vmem:[%s1 + $0x170] sm:$0xff]
  %v96 = vld [vmem:[%s1 + $0x178] sm:$0xff]
  %v97 = vld [vmem:[%s1 + $0x180] sm:$0xff]
  %v98 = vld [vmem:[%s1 + $0x188] sm:$0xff]
  %v99 = vld [vmem:[%s1 + $0x190] sm:$0xff]
  %v100 = vld [vmem:[%s1 + $0x198] sm:$0xff]
  %v101 = vld [vmem:[%s1 + $0x1a0] sm:$0xff]
  %v102 = vld [vmem:[%s1 + $0x1a8] sm:$0xff]
  %v103 = vld [vmem:[%s1 + $0x1b0] sm:$0xff]
  %v104 = vld [vmem:[%s1 + $0x1b8] sm:$0xff]
  %v105 = vld [vmem:[%s1 + $0x1c0] sm:$0xff]
  %v106 = vld [vmem:[%s1 + $0x1c8] sm:$0xff]
  %v107 = vld [vmem:[%s1 + $0x1d0] sm:$0xff]
  %v108 = vld [vmem:[%s1 + $0x1d8] sm:$0xff]
  %v109 = vld [vmem:[%s1 + $0x1e0] sm:$0xff]
  %v110 = vld [vmem:[%s1 + $0x1e8] sm:$0xff]
  %v111 = vld [vmem:[%s1 + $0x1f0] sm:$0xff]
  %v112 = vld [vmem:[%s1 + $0x1f8] sm:$0xff]
  %v113 = vld [vmem:[%s1 + $0x200] sm:$0xff]
  %v114 = vld [vmem:[%s1 + $0x208] sm:$0xff]
  %v115 = vld [vmem:[%s1 + $0x210] sm:$0xff]
  %v116 = vld [vmem:[%s1 + $0x218] sm:$0xff]
  %v117 = vld [vmem:[%s1 + $0x220] sm:$0xff]
  %v118 = vld [vmem:[%s1 + $0x228] sm:$0xff]
  %v119 = vld [vmem:[%s1 + $0x230] sm:$0xff]
  %v120 = vld [vmem:[%s1 + $0x238] sm:$0xff]
  %v121 = vld [vmem:[%s1 + $0x240] sm:$0xff]
  %v122 = vld [vmem:[%s1 + $0x248] sm:$0xff]
  %v123 = vld [vmem:[%s1 + $0x250] sm:$0xff]
  %v124 = vld [vmem:[%s1 + $0x258] sm:$0xff]
  %v125 = vld [vmem:[%s1 + $0x260] sm:$0xff]
  %v126 = vld [vmem:[%s1 + $0x268] sm:$0xff]
  %v127 = vld [vmem:[%s1 + $0x270] sm:$0xff]
  %v128 = vld [vmem:[%s1 + $0x278] sm:$0xff]
  %v129 = vld [vmem:[%s1 + $0x280] sm:$0xff]
  %v130 = vld [vmem:[%s1 + $0x288] sm:$0xff]
  %v131 = vld [vmem:[%s1 + $0x290] sm:$0xff]
  %v132 = vld [vmem:[%s1 + $0x298] sm:$0xff]
  %v133 = vld [vmem:[%s1 + $0x2a0] sm:$0xff]
  %v134 = vld [vmem:[%s1 + $0x2a8] sm:$0xff]
  %v135 = vld [vmem:[%s1 + $0x2b0] sm:$0xff]
  %v136 = vld [vmem:[%s1 + $0x2b8] sm:$0xff]
  %v137 = vld [vmem:[%s1 + $0x2c0] sm:$0xff]
  %v138 = vld [vmem:[%s1 + $0x2c8] sm:$0xff]
  %v139 = vld [vmem:[%s1 + $0x2d0] sm:$0xff]
  %v140 = vld [vmem:[%s1 + $0x2d8] sm:$0xff]
  %v141 = vld [vmem:[%s1 + $0x2e0] sm:$0xff]
  %v142 = vld [vmem:[%s1 + $0x2e8] sm:$0xff]
  %v143 = vld [vmem:[%s1 + $0x2f0] sm:$0xff]
  %v144 = vld [vmem:[%s1 + $0x2f8] sm:$0xff]
  %v145 = vld [vmem:[%s1 + $0x300] sm:$0xff]
  %v146 = vld [vmem:[%s1 + $0x308] sm:$0xff]
  %v147 = vld [vmem:[%s2] sm:$0x3]
  %v149 = vlaneseq
  %v150 = vshrl.u32 %v149, 7
  %v151 = vsub.s32 0, %v150
  %v152 = vrot.slane %v147, %v151
  %v153 = vlaneseq
  %v154 = vshrl.u32 %v153, 7
  %v155 = vsub.s32 1, %v154
  %v156 = vrot.slane %v147, %v155
  %v163 = vunpack.c.l.b16 %v45
  %v164 = vunpack.c.h.b16 %v45
  %v165 = vunpack.c.l.b16 %v46
  %v166 = vunpack.c.h.b16 %v46
  %v167 = vunpack.c.l.b16 %v47
  %v168 = vunpack.c.h.b16 %v47
  %v169 = vunpack.c.l.b16 %v48
  %v170 = vpack.c.b16 %v163, %v163
  %v171 = vpack.c.b16 %v164, %v164
  %v172 = vpack.c.b16 %v165, %v165
  %v173 = vpack.c.b16 %v166, %v166
  %v174 = vpack.c.b16 %v167, %v167
  %v175 = vpack.c.b16 %v168, %v168
  %v176 = vpack.c.b16 %v169, %v169
  %v281 = vunpack.c.l.b16 %v49
  %v282 = vunpack.c.h.b16 %v49
  %v283 = vunpack.c.l.b16 %v50
  %v284 = vunpack.c.h.b16 %v50
  %v285 = vunpack.c.l.b16 %v51
  %v286 = vunpack.c.h.b16 %v51
  %v287 = vunpack.c.l.b16 %v52
  %v288 = vunpack.c.h.b16 %v52
  %v289 = vunpack.c.l.b16 %v53
  %v290 = vunpack.c.h.b16 %v53
  %v291 = vunpack.c.l.b16 %v54
  %v292 = vunpack.c.h.b16 %v54
  %v293 = vunpack.c.l.b16 %v55
  %v294 = vunpack.c.h.b16 %v55
  %v295 = vunpack.c.l.b16 %v56
  %v296 = vunpack.c.h.b16 %v56
  %v297 = vunpack.c.l.b16 %v57
  %v298 = vunpack.c.h.b16 %v57
  %v299 = vunpack.c.l.b16 %v58
  %v300 = vunpack.c.h.b16 %v58
  %v301 = vunpack.c.l.b16 %v59
  %v302 = vunpack.c.h.b16 %v59
  %v303 = vunpack.c.l.b16 %v60
  %v304 = vunpack.c.h.b16 %v60
  %v305 = vunpack.c.l.b16 %v61
  %v306 = vunpack.c.h.b16 %v61
  %v307 = vunpack.c.l.b16 %v62
  %v308 = vunpack.c.h.b16 %v62
  %v309 = vunpack.c.l.b16 %v63
  %v310 = vunpack.c.h.b16 %v63
  %v311 = vunpack.c.l.b16 %v64
  %v312 = vunpack.c.h.b16 %v64
  %v313 = vunpack.c.l.b16 %v65
  %v314 = vunpack.c.h.b16 %v65
  %v315 = vunpack.c.l.b16 %v66
  %v316 = vunpack.c.h.b16 %v66
  %v317 = vunpack.c.l.b16 %v67
  %v318 = vunpack.c.h.b16 %v67
  %v319 = vunpack.c.l.b16 %v68
  %v320 = vunpack.c.h.b16 %v68
  %v321 = vunpack.c.l.b16 %v69
  %v322 = vunpack.c.h.b16 %v69
  %v323 = vunpack.c.l.b16 %v70
  %v324 = vunpack.c.h.b16 %v70
  %v325 = vunpack.c.l.b16 %v71
  %v326 = vunpack.c.h.b16 %v71
  %v327 = vunpack.c.l.b16 %v72
  %v328 = vunpack.c.h.b16 %v72
  %v329 = vunpack.c.l.b16 %v73
  %v330 = vunpack.c.h.b16 %v73
  %v331 = vunpack.c.l.b16 %v74
  %v332 = vunpack.c.h.b16 %v74
  %v333 = vunpack.c.l.b16 %v75
  %v334 = vunpack.c.h.b16 %v75
  %v335 = vunpack.c.l.b16 %v76
  %v336 = vunpack.c.h.b16 %v76
  %v337 = vunpack.c.l.b16 %v77
  %v338 = vunpack.c.h.b16 %v77
  %v339 = vunpack.c.l.b16 %v78
  %v340 = vunpack.c.h.b16 %v78
  %v341 = vunpack.c.l.b16 %v79
  %v342 = vunpack.c.h.b16 %v79
  %v343 = vunpack.c.l.b16 %v80
  %v344 = vunpack.c.h.b16 %v80
  %v345 = vunpack.c.l.b16 %v81
  %v346 = vunpack.c.h.b16 %v81
  %v347 = vunpack.c.l.b16 %v82
  %v348 = vunpack.c.h.b16 %v82
  %v349 = vunpack.c.l.b16 %v83
  %v350 = vunpack.c.h.b16 %v83
  %v351 = vunpack.c.l.b16 %v84
  %v352 = vunpack.c.h.b16 %v84
  %v353 = vunpack.c.l.b16 %v85
  %v354 = vunpack.c.h.b16 %v85
  %v355 = vunpack.c.l.b16 %v86
  %v356 = vunpack.c.h.b16 %v86
  %v357 = vunpack.c.l.b16 %v87
  %v358 = vunpack.c.h.b16 %v87
  %v359 = vunpack.c.l.b16 %v88
  %v360 = vunpack.c.h.b16 %v88
  %v361 = vunpack.c.l.b16 %v89
  %v362 = vunpack.c.h.b16 %v89
  %v363 = vunpack.c.l.b16 %v90
  %v364 = vunpack.c.h.b16 %v90
  %v365 = vunpack.c.l.b16 %v91
  %v366 = vunpack.c.h.b16 %v91
  %v367 = vunpack.c.l.b16 %v92
  %v368 = vunpack.c.h.b16 %v92
  %v369 = vunpack.c.l.b16 %v93
  %v370 = vunpack.c.h.b16 %v93
  %v371 = vunpack.c.l.b16 %v94
  %v372 = vunpack.c.h.b16 %v94
  %v373 = vunpack.c.l.b16 %v95
  %v374 = vunpack.c.h.b16 %v95
  %v375 = vunpack.c.l.b16 %v96
  %v376 = vunpack.c.h.b16 %v96
  %v377 = vunpack.c.l.b16 %v97
  %v378 = vunpack.c.h.b16 %v97
  %v379 = vunpack.c.l.b16 %v98
  %v380 = vunpack.c.h.b16 %v98
  %v381 = vunpack.c.l.b16 %v99
  %v382 = vunpack.c.h.b16 %v99
  %v383 = vunpack.c.l.b16 %v100
  %v384 = vunpack.c.h.b16 %v100
  %v385 = vunpack.c.l.b16 %v101
  %v386 = vunpack.c.h.b16 %v101
  %v387 = vunpack.c.l.b16 %v102
  %v388 = vunpack.c.h.b16 %v102
  %v389 = vunpack.c.l.b16 %v103
  %v390 = vunpack.c.h.b16 %v103
  %v391 = vunpack.c.l.b16 %v104
  %v392 = vunpack.c.h.b16 %v104
  %v393 = vunpack.c.l.b16 %v105
  %v394 = vunpack.c.h.b16 %v105
  %v395 = vunpack.c.l.b16 %v106
  %v396 = vunpack.c.h.b16 %v106
  %v397 = vunpack.c.l.b16 %v107
  %v398 = vunpack.c.h.b16 %v107
  %v399 = vunpack.c.l.b16 %v108
  %v400 = vunpack.c.h.b16 %v108
  %v401 = vunpack.c.l.b16 %v109
  %v402 = vunpack.c.h.b16 %v109
  %v403 = vunpack.c.l.b16 %v110
  %v404 = vunpack.c.h.b16 %v110
  %v405 = vunpack.c.l.b16 %v111
  %v406 = vunpack.c.h.b16 %v111
  %v407 = vunpack.c.l.b16 %v112
  %v408 = vunpack.c.h.b16 %v112
  %v409 = vunpack.c.l.b16 %v113
  %v410 = vunpack.c.h.b16 %v113
  %v411 = vunpack.c.l.b16 %v114
  %v412 = vunpack.c.h.b16 %v114
  %v413 = vunpack.c.l.b16 %v115
  %v414 = vunpack.c.h.b16 %v115
  %v415 = vunpack.c.l.b16 %v116
  %v416 = vunpack.c.h.b16 %v116
  %v417 = vunpack.c.l.b16 %v117
  %v418 = vunpack.c.h.b16 %v117
  %v419 = vunpack.c.l.b16 %v118
  %v420 = vunpack.c.h.b16 %v118
  %v421 = vunpack.c.l.b16 %v119
  %v422 = vunpack.c.h.b16 %v119
  %v423 = vunpack.c.l.b16 %v120
  %v424 = vunpack.c.h.b16 %v120
  %v425 = vunpack.c.l.b16 %v121
  %v426 = vunpack.c.h.b16 %v121
  %v427 = vunpack.c.l.b16 %v122
  %v428 = vunpack.c.h.b16 %v122
  %v429 = vunpack.c.l.b16 %v123
  %v430 = vunpack.c.h.b16 %v123
  %v431 = vunpack.c.l.b16 %v124
  %v432 = vunpack.c.h.b16 %v124
  %v433 = vunpack.c.l.b16 %v125
  %v434 = vunpack.c.h.b16 %v125
  %v435 = vunpack.c.l.b16 %v126
  %v436 = vunpack.c.h.b16 %v126
  %v437 = vunpack.c.l.b16 %v127
  %v438 = vunpack.c.h.b16 %v127
  %v439 = vunpack.c.l.b16 %v128
  %v440 = vunpack.c.h.b16 %v128
  %v441 = vunpack.c.l.b16 %v129
  %v442 = vunpack.c.h.b16 %v129
  %v443 = vunpack.c.l.b16 %v130
  %v444 = vunpack.c.h.b16 %v130
  %v445 = vunpack.c.l.b16 %v131
  %v446 = vunpack.c.h.b16 %v131
  %v447 = vunpack.c.l.b16 %v132
  %v448 = vunpack.c.h.b16 %v132
  %v449 = vunpack.c.l.b16 %v133
  %v450 = vunpack.c.h.b16 %v133
  %v451 = vunpack.c.l.b16 %v134
  %v452 = vunpack.c.h.b16 %v134
  %v453 = vunpack.c.l.b16 %v135
  %v454 = vunpack.c.h.b16 %v135
  %v455 = vunpack.c.l.b16 %v136
  %v456 = vunpack.c.h.b16 %v136
  %v457 = vunpack.c.l.b16 %v137
  %v458 = vunpack.c.h.b16 %v137
  %v459 = vunpack.c.l.b16 %v138
  %v460 = vunpack.c.h.b16 %v138
  %v461 = vunpack.c.l.b16 %v139
  %v462 = vunpack.c.h.b16 %v139
  %v463 = vunpack.c.l.b16 %v140
  %v464 = vunpack.c.h.b16 %v140
  %v465 = vunpack.c.l.b16 %v141
  %v466 = vunpack.c.h.b16 %v141
  %v467 = vunpack.c.l.b16 %v142
  %v468 = vunpack.c.h.b16 %v142
  %v469 = vunpack.c.l.b16 %v143
  %v470 = vunpack.c.h.b16 %v143
  %v471 = vunpack.c.l.b16 %v144
  %v472 = vunpack.c.h.b16 %v144
  %v473 = vunpack.c.l.b16 %v145
  %v474 = vunpack.c.h.b16 %v145
  %v475 = vunpack.c.l.b16 %v146
  %v476 = vunpack.c.h.b16 %v146
  %v477 = vpack.c.b16 %v283, %v281
  %v478 = vpack.c.b16 %v284, %v282
  %v479 = vpack.c.b16 %v287, %v285
  %v480 = vpack.c.b16 %v288, %v286
  %v481 = vpack.c.b16 %v291, %v289
  %v482 = vpack.c.b16 %v292, %v290
  %v483 = vpack.c.b16 %v295, %v293
  %v484 = vpack.c.b16 %v296, %v294
  %v485 = vpack.c.b16 %v299, %v297
  %v486 = vpack.c.b16 %v300, %v298
  %v487 = vpack.c.b16 %v303, %v301
  %v488 = vpack.c.b16 %v304, %v302
  %v489 = vpack.c.b16 %v307, %v305
  %v490 = vpack.c.b16 %v308, %v306
  %v491 = vpack.c.b16 %v311, %v309
  %v492 = vpack.c.b16 %v312, %v310
  %v493 = vpack.c.b16 %v315, %v313
  %v494 = vpack.c.b16 %v316, %v314
  %v495 = vpack.c.b16 %v319, %v317
  %v496 = vpack.c.b16 %v320, %v318
  %v497 = vpack.c.b16 %v323, %v321
  %v498 = vpack.c.b16 %v324, %v322
  %v499 = vpack.c.b16 %v327, %v325
  %v500 = vpack.c.b16 %v328, %v326
  %v501 = vpack.c.b16 %v331, %v329
  %v502 = vpack.c.b16 %v332, %v330
  %v503 = vpack.c.b16 %v335, %v333
  %v504 = vpack.c.b16 %v336, %v334
  %v505 = vpack.c.b16 %v339, %v337
  %v506 = vpack.c.b16 %v340, %v338
  %v507 = vpack.c.b16 %v343, %v341
  %v508 = vpack.c.b16 %v344, %v342
  %v509 = vpack.c.b16 %v347, %v345
  %v510 = vpack.c.b16 %v348, %v346
  %v511 = vpack.c.b16 %v351, %v349
  %v512 = vpack.c.b16 %v352, %v350
  %v513 = vpack.c.b16 %v355, %v353
  %v514 = vpack.c.b16 %v356, %v354
  %v515 = vpack.c.b16 %v359, %v357
  %v516 = vpack.c.b16 %v360, %v358
  %v517 = vpack.c.b16 %v363, %v361
  %v518 = vpack.c.b16 %v364, %v362
  %v519 = vpack.c.b16 %v367, %v365
  %v520 = vpack.c.b16 %v368, %v366
  %v521 = vpack.c.b16 %v371, %v369
  %v522 = vpack.c.b16 %v372, %v370
  %v523 = vpack.c.b16 %v375, %v373
  %v524 = vpack.c.b16 %v376, %v374
  %v525 = vpack.c.b16 %v379, %v377
  %v526 = vpack.c.b16 %v380, %v378
  %v527 = vpack.c.b16 %v383, %v381
  %v528 = vpack.c.b16 %v384, %v382
  %v529 = vpack.c.b16 %v387, %v385
  %v530 = vpack.c.b16 %v388, %v386
  %v531 = vpack.c.b16 %v391, %v389
  %v532 = vpack.c.b16 %v392, %v390
  %v533 = vpack.c.b16 %v395, %v393
  %v534 = vpack.c.b16 %v396, %v394
  %v535 = vpack.c.b16 %v399, %v397
  %v536 = vpack.c.b16 %v400, %v398
  %v537 = vpack.c.b16 %v403, %v401
  %v538 = vpack.c.b16 %v404, %v402
  %v539 = vpack.c.b16 %v407, %v405
  %v540 = vpack.c.b16 %v408, %v406
  %v541 = vpack.c.b16 %v411, %v409
  %v542 = vpack.c.b16 %v412, %v410
  %v543 = vpack.c.b16 %v415, %v413
  %v544 = vpack.c.b16 %v416, %v414
  %v545 = vpack.c.b16 %v419, %v417
  %v546 = vpack.c.b16 %v420, %v418
  %v547 = vpack.c.b16 %v423, %v421
  %v548 = vpack.c.b16 %v424, %v422
  %v549 = vpack.c.b16 %v427, %v425
  %v550 = vpack.c.b16 %v428, %v426
  %v551 = vpack.c.b16 %v431, %v429
  %v552 = vpack.c.b16 %v432, %v430
  %v553 = vpack.c.b16 %v435, %v433
  %v554 = vpack.c.b16 %v436, %v434
  %v555 = vpack.c.b16 %v439, %v437
  %v556 = vpack.c.b16 %v440, %v438
  %v557 = vpack.c.b16 %v443, %v441
  %v558 = vpack.c.b16 %v444, %v442
  %v559 = vpack.c.b16 %v447, %v445
  %v560 = vpack.c.b16 %v448, %v446
  %v561 = vpack.c.b16 %v451, %v449
  %v562 = vpack.c.b16 %v452, %v450
  %v563 = vpack.c.b16 %v455, %v453
  %v564 = vpack.c.b16 %v456, %v454
  %v565 = vpack.c.b16 %v459, %v457
  %v566 = vpack.c.b16 %v460, %v458
  %v567 = vpack.c.b16 %v463, %v461
  %v568 = vpack.c.b16 %v464, %v462
  %v569 = vpack.c.b16 %v467, %v465
  %v570 = vpack.c.b16 %v468, %v466
  %v571 = vpack.c.b16 %v471, %v469
  %v572 = vpack.c.b16 %v472, %v470
  %v573 = vpack.c.b16 %v475, %v473
  %v574 = vpack.c.b16 %v476, %v474
  %vm673 = vcmask 130048
  %v675 = vsel %vm673, %v176, 0
  %677 = vmatprep.subr.bf16.mxu0 %v478
  %678 = vmatpush1.bf16.msra.mxu0 %v477
  %679 = vmatprep.subr.bf16.mxu0 %v480
  %680 = vmatpush1.bf16.msra.mxu0 %v479
  %681 = vmatprep.subr.bf16.mxu0 %v482
  %682 = vmatpush1.bf16.msra.mxu0 %v481
  %683 = vmatprep.subr.bf16.mxu0 %v484
  %684 = vmatpush1.bf16.msra.mxu0 %v483
  %685 = vmatprep.subr.bf16.mxu0 %v486
  %686 = vmatpush1.bf16.msra.mxu0 %v485
  %687 = vmatprep.subr.bf16.mxu0 %v488
  %688 = vmatpush1.bf16.msra.mxu0 %v487
  %689 = vmatprep.subr.bf16.mxu0 %v490
  %690 = vmatpush1.bf16.msra.mxu0 %v489
  %691 = vmatprep.subr.bf16.mxu0 %v492
  %692 = vmatpush1.bf16.msra.mxu0 %v491
  %693 = vmatprep.subr.bf16.mxu0 %v494
  %694 = vmatpush1.bf16.msra.mxu0 %v493
  %695 = vmatprep.subr.bf16.mxu0 %v496
  %696 = vmatpush1.bf16.msra.mxu0 %v495
  %697 = vmatprep.subr.bf16.mxu0 %v498
  %698 = vmatpush1.bf16.msra.mxu0 %v497
  %699 = vmatprep.subr.bf16.mxu0 %v500
  %700 = vmatpush1.bf16.msra.mxu0 %v499
  %701 = vmatprep.subr.bf16.mxu0 %v502
  %702 = vmatpush1.bf16.msra.mxu0 %v501
  %703 = vmatprep.subr.bf16.mxu0 %v504
  %704 = vmatpush1.bf16.msra.mxu0 %v503
  %705 = vmatprep.subr.bf16.mxu0 %v506
  %706 = vmatpush1.bf16.msra.mxu0 %v505
  %707 = vmatprep.subr.bf16.mxu0 %v508
  %708 = vmatpush1.bf16.msra.mxu0 %v507
  %709 = vmatprep.mubr.bf16.mxu0 %v171
  %710 = vmatmul.mubr.bf16.gmra.mrb[0].mxu0 %v170
  %v711 = vpop.f32.mrb[0].mxu0
  %v712 = vadd.f32 %v152, %v711
  %v713 = vpop.f32.mrb[0].mxu0
  %v714 = vadd.f32 %v156, %v713
  %v715 = vpop.f32.mrb[0].mxu0
  %v716 = vpop.f32.mrb[0].mxu0
  %717 = vdwg.mxu0
  %718 = vmatprep.subr.bf16.mxu0 %v510
  %719 = vmatpush1.bf16.msra.mxu0 %v509
  %720 = vmatprep.subr.bf16.mxu0 %v512
  %721 = vmatpush1.bf16.msra.mxu0 %v511
  %722 = vmatprep.subr.bf16.mxu0 %v514
  %723 = vmatpush1.bf16.msra.mxu0 %v513
  %724 = vmatprep.subr.bf16.mxu0 %v516
  %725 = vmatpush1.bf16.msra.mxu0 %v515
  %726 = vmatprep.subr.bf16.mxu0 %v518
  %727 = vmatpush1.bf16.msra.mxu0 %v517
  %728 = vmatprep.subr.bf16.mxu0 %v520
  %729 = vmatpush1.bf16.msra.mxu0 %v519
  %730 = vmatprep.subr.bf16.mxu0 %v522
  %731 = vmatpush1.bf16.msra.mxu0 %v521
  %732 = vmatprep.subr.bf16.mxu0 %v524
  %733 = vmatpush1.bf16.msra.mxu0 %v523
  %734 = vmatprep.subr.bf16.mxu0 %v526
  %735 = vmatpush1.bf16.msra.mxu0 %v525
  %736 = vmatprep.subr.bf16.mxu0 %v528
  %737 = vmatpush1.bf16.msra.mxu0 %v527
  %738 = vmatprep.subr.bf16.mxu0 %v530
  %739 = vmatpush1.bf16.msra.mxu0 %v529
  %740 = vmatprep.subr.bf16.mxu0 %v532
  %741 = vmatpush1.bf16.msra.mxu0 %v531
  %742 = vmatprep.subr.bf16.mxu0 %v534
  %743 = vmatpush1.bf16.msra.mxu0 %v533
  %744 = vmatprep.subr.bf16.mxu0 %v536
  %745 = vmatpush1.bf16.msra.mxu0 %v535
  %746 = vmatprep.subr.bf16.mxu0 %v538
  %747 = vmatpush1.bf16.msra.mxu0 %v537
  %748 = vmatprep.subr.bf16.mxu0 %v540
  %749 = vmatpush1.bf16.msra.mxu0 %v539
  %750 = vmatprep.mubr.bf16.mxu0 %v173
  %751 = vmatmul.mubr.bf16.gmra.mrb[0].mxu0 %v172
  %v752 = vpop.f32.mrb[0].mxu0
  %v753 = vadd.f32 %v712, %v752
  %v754 = vpop.f32.mrb[0].mxu0
  %v755 = vadd.f32 %v714, %v754
  %v756 = vpop.f32.mrb[0].mxu0
  %v757 = vpop.f32.mrb[0].mxu0
  %758 = vdwg.mxu0
  %759 = vmatprep.subr.bf16.mxu0 %v542
  %760 = vmatpush1.bf16.msra.mxu0 %v541
  %761 = vmatprep.subr.bf16.mxu0 %v544
  %762 = vmatpush1.bf16.msra.mxu0 %v543
  %763 = vmatprep.subr.bf16.mxu0 %v546
  %764 = vmatpush1.bf16.msra.mxu0 %v545
  %765 = vmatprep.subr.bf16.mxu0 %v548
  %766 = vmatpush1.bf16.msra.mxu0 %v547
  %767 = vmatprep.subr.bf16.mxu0 %v550
  %768 = vmatpush1.bf16.msra.mxu0 %v549
  %769 = vmatprep.subr.bf16.mxu0 %v552
  %770 = vmatpush1.bf16.msra.mxu0 %v551
  %771 = vmatprep.subr.bf16.mxu0 %v554
  %772 = vmatpush1.bf16.msra.mxu0 %v553
  %773 = vmatprep.subr.bf16.mxu0 %v556
  %774 = vmatpush1.bf16.msra.mxu0 %v555
  %775 = vmatprep.subr.bf16.mxu0 %v558
  %776 = vmatpush1.bf16.msra.mxu0 %v557
  %777 = vmatprep.subr.bf16.mxu0 %v560
  %778 = vmatpush1.bf16.msra.mxu0 %v559
  %779 = vmatprep.subr.bf16.mxu0 %v562
  %780 = vmatpush1.bf16.msra.mxu0 %v561
  %781 = vmatprep.subr.bf16.mxu0 %v564
  %782 = vmatpush1.bf16.msra.mxu0 %v563
  %783 = vmatprep.subr.bf16.mxu0 %v566
  %784 = vmatpush1.bf16.msra.mxu0 %v565
  %785 = vmatprep.subr.bf16.mxu0 %v568
  %786 = vmatpush1.bf16.msra.mxu0 %v567
  %787 = vmatprep.subr.bf16.mxu0 %v570
  %788 = vmatpush1.bf16.msra.mxu0 %v569
  %789 = vmatprep.subr.bf16.mxu0 %v572
  %790 = vmatpush1.bf16.msra.mxu0 %v571
  %791 = vmatprep.mubr.bf16.mxu0 %v175
  %792 = vmatmul.mubr.bf16.gmra.mrb[0].mxu0 %v174
  %v793 = vpop.f32.mrb[0].mxu0
  %v794 = vadd.f32 %v753, %v793
  %v795 = vpop.f32.mrb[0].mxu0
  %v796 = vadd.f32 %v755, %v795
  %v797 = vpop.f32.mrb[0].mxu0
  %v798 = vpop.f32.mrb[0].mxu0
  %799 = vdwg.mxu0
  %800 = vmatprep.subr.bf16.mxu0 %v574
  %801 = vmatpush1.bf16.msra.mxu0 %v573
  %802 = vmatprep.subr.bf16.mxu0 0
  %803 = vmatpush1.bf16.msra.mxu0 0
  %804 = vmatprep.subr.bf16.mxu0 0
  %805 = vmatpush1.bf16.msra.mxu0 0
  %806 = vmatprep.subr.bf16.mxu0 0
  %807 = vmatpush1.bf16.msra.mxu0 0
  %808 = vmatprep.subr.bf16.mxu0 0
  %809 = vmatpush1.bf16.msra.mxu0 0
  %810 = vmatprep.subr.bf16.mxu0 0
  %811 = vmatpush1.bf16.msra.mxu0 0
  %812 = vmatprep.subr.bf16.mxu0 0
  %813 = vmatpush1.bf16.msra.mxu0 0
  %814 = vmatprep.subr.bf16.mxu0 0
  %815 = vmatpush1.bf16.msra.mxu0 0
  %816 = vmatprep.subr.bf16.mxu0 0
  %817 = vmatpush1.bf16.msra.mxu0 0
  %818 = vmatprep.subr.bf16.mxu0 0
  %819 = vmatpush1.bf16.msra.mxu0 0
  %820 = vmatprep.subr.bf16.mxu0 0
  %821 = vmatpush1.bf16.msra.mxu0 0
  %822 = vmatprep.subr.bf16.mxu0 0
  %823 = vmatpush1.bf16.msra.mxu0 0
  %824 = vmatprep.subr.bf16.mxu0 0
  %825 = vmatpush1.bf16.msra.mxu0 0
  %826 = vmatprep.subr.bf16.mxu0 0
  %827 = vmatpush1.bf16.msra.mxu0 0
  %828 = vmatprep.subr.bf16.mxu0 0
  %829 = vmatpush1.bf16.msra.mxu0 0
  %830 = vmatprep.subr.bf16.mxu0 0
  %831 = vmatpush1.bf16.msra.mxu0 0
  %832 = vmatprep.mubr.bf16.mxu0 0
  %833 = vmatmul.mubr.bf16.gmra.mrb[0].mxu0 %v675
  %v834 = vpop.f32.mrb[0].mxu0
  %v835 = vadd.f32 %v794, %v834
  %v836 = vpop.f32.mrb[0].mxu0
  %v837 = vadd.f32 %v796, %v836
  %v838 = vpop.f32.mrb[0].mxu0
  %v839 = vpop.f32.mrb[0].mxu0
  %840 = vdwg.mxu0
  %v841 = vmax.f32 %v835, 0.0
  %v842 = vmax.f32 %v837, 0.0
  %v843 = vpack.c.bf16 %v841, %v841
  %v844 = vpack.c.bf16 %v842, %v842
  %v845 = vld [vmem:[%s3] sm:$0xff]
  %v846 = vld [vmem:[%s3 + $0x8] sm:$0xff]
  %v847 = vld [vmem:[%s3 + $0x10] sm:$0xff]
  %v848 = vld [vmem:[%s3 + $0x18] sm:$0xff]
  %v849 = vld [vmem:[%s3 + $0x20] sm:$0xff]
  %v850 = vld [vmem:[%s3 + $0x28] sm:$0xff]
  %v851 = vld [vmem:[%s3 + $0x30] sm:$0xff]
  %v852 = vld [vmem:[%s3 + $0x38] sm:$0xff]
  %v853 = vld [vmem:[%s3 + $0x40] sm:$0xff]
  %v854 = vld [vmem:[%s3 + $0x48] sm:$0xff]
  %v855 = vld [vmem:[%s3 + $0x50] sm:$0xff]
  %v856 = vld [vmem:[%s3 + $0x58] sm:$0xff]
  %v857 = vld [vmem:[%s3 + $0x60] sm:$0xff]
  %v858 = vld [vmem:[%s3 + $0x68] sm:$0xff]
  %v859 = vld [vmem:[%s3 + $0x70] sm:$0xff]
  %v860 = vld [vmem:[%s3 + $0x78] sm:$0xff]
  %v861 = vld [vmem:[%s3 + $0x80] sm:$0xff]
  %v862 = vld [vmem:[%s3 + $0x88] sm:$0xff]
  %v863 = vld [vmem:[%s3 + $0x90] sm:$0xff]
  %v864 = vld [vmem:[%s3 + $0x98] sm:$0xff]
  %v865 = vld [vmem:[%s3 + $0xa0] sm:$0xff]
  %v866 = vld [vmem:[%s3 + $0xa8] sm:$0xff]
  %v867 = vld [vmem:[%s3 + $0xb0] sm:$0xff]
  %v868 = vld [vmem:[%s3 + $0xb8] sm:$0xff]
  %v869 = vld [vmem:[%s3 + $0xc0] sm:$0xff]
  %v870 = vld [vmem:[%s3 + $0xc8] sm:$0xff]
  %v871 = vld [vmem:[%s3 + $0xd0] sm:$0xff]
  %v872 = vld [vmem:[%s3 + $0xd8] sm:$0xff]
  %v873 = vld [vmem:[%s3 + $0xe0] sm:$0xff]
  %v874 = vld [vmem:[%s3 + $0xe8] sm:$0xff]
  %v875 = vld [vmem:[%s3 + $0xf0] sm:$0xff]
  %v876 = vld [vmem:[%s3 + $0xf8] sm:$0xff]
  %v877 = vld [vmem:[%s3 + $0x100] sm:$0xff]
  %v878 = vld [vmem:[%s3 + $0x108] sm:$0xff]
  %v879 = vld [vmem:[%s3 + $0x110] sm:$0xff]
  %v880 = vld [vmem:[%s3 + $0x118] sm:$0xff]
  %v881 = vld [vmem:[%s3 + $0x120] sm:$0xff]
  %v882 = vld [vmem:[%s3 + $0x128] sm:$0xff]
  %v883 = vld [vmem:[%s3 + $0x130] sm:$0xff]
  %v884 = vld [vmem:[%s3 + $0x138] sm:$0xff]
  %v885 = vld [vmem:[%s3 + $0x140] sm:$0xff]
  %v886 = vld [vmem:[%s3 + $0x148] sm:$0xff]
  %v887 = vld [vmem:[%s3 + $0x150] sm:$0xff]
  %v888 = vld [vmem:[%s3 + $0x158] sm:$0xff]
  %v889 = vld [vmem:[%s3 + $0x160] sm:$0xff]
  %v890 = vld [vmem:[%s3 + $0x168] sm:$0xff]
  %v891 = vld [vmem:[%s3 + $0x170] sm:$0xff]
  %v892 = vld [vmem:[%s3 + $0x178] sm:$0xff]
  %v893 = vld [vmem:[%s3 + $0x180] sm:$0xff]
  %v894 = vld [vmem:[%s3 + $0x188] sm:$0xff]
  %v895 = vld [vmem:[%s3 + $0x190] sm:$0xff]
  %v896 = vld [vmem:[%s3 + $0x198] sm:$0xff]
  %v897 = vld [vmem:[%s3 + $0x1a0] sm:$0xff]
  %v898 = vld [vmem:[%s3 + $0x1a8] sm:$0xff]
  %v899 = vld [vmem:[%s3 + $0x1b0] sm:$0xff]
  %v900 = vld [vmem:[%s3 + $0x1b8] sm:$0xff]
  %v901 = vld [vmem:[%s3 + $0x1c0] sm:$0xff]
  %v902 = vld [vmem:[%s3 + $0x1c8] sm:$0xff]
  %v903 = vld [vmem:[%s3 + $0x1d0] sm:$0xff]
  %v904 = vld [vmem:[%s3 + $0x1d8] sm:$0xff]
  %v905 = vld [vmem:[%s3 + $0x1e0] sm:$0xff]
  %v906 = vld [vmem:[%s3 + $0x1e8] sm:$0xff]
  %v907 = vld [vmem:[%s3 + $0x1f0] sm:$0xff]
  %v908 = vld [vmem:[%s3 + $0x1f8] sm:$0xff]
  %v909 = vld [vmem:[%s4] sm:$0xf]
  %v911 = vlaneseq
  %v912 = vshrl.u32 %v911, 7
  %v913 = vsub.s32 0, %v912
  %v914 = vrot.slane %v909, %v913
  %v915 = vlaneseq
  %v916 = vshrl.u32 %v915, 7
  %v917 = vsub.s32 1, %v916
  %v918 = vrot.slane %v909, %v917
  %v919 = vlaneseq
  %v920 = vshrl.u32 %v919, 7
  %v921 = vsub.s32 2, %v920
  %v922 = vrot.slane %v909, %v921
  %v923 = vlaneseq
  %v924 = vshrl.u32 %v923, 7
  %v925 = vsub.s32 3, %v924
  %v926 = vrot.slane %v909, %v925
  %v995 = vunpack.c.l.b16 %v845
  %v996 = vunpack.c.h.b16 %v845
  %v997 = vunpack.c.l.b16 %v846
  %v998 = vunpack.c.h.b16 %v846
  %v999 = vunpack.c.l.b16 %v847
  %v1000 = vunpack.c.h.b16 %v847
  %v1001 = vunpack.c.l.b16 %v848
  %v1002 = vunpack.c.h.b16 %v848
  %v1003 = vunpack.c.l.b16 %v849
  %v1004 = vunpack.c.h.b16 %v849
  %v1005 = vunpack.c.l.b16 %v850
  %v1006 = vunpack.c.h.b16 %v850
  %v1007 = vunpack.c.l.b16 %v851
  %v1008 = vunpack.c.h.b16 %v851
  %v1009 = vunpack.c.l.b16 %v852
  %v1010 = vunpack.c.h.b16 %v852
  %v1011 = vunpack.c.l.b16 %v853
  %v1012 = vunpack.c.h.b16 %v853
  %v1013 = vunpack.c.l.b16 %v854
  %v1014 = vunpack.c.h.b16 %v854
  %v1015 = vunpack.c.l.b16 %v855
  %v1016 = vunpack.c.h.b16 %v855
  %v1017 = vunpack.c.l.b16 %v856
  %v1018 = vunpack.c.h.b16 %v856
  %v1019 = vunpack.c.l.b16 %v857
  %v1020 = vunpack.c.h.b16 %v857
  %v1021 = vunpack.c.l.b16 %v858
  %v1022 = vunpack.c.h.b16 %v858
  %v1023 = vunpack.c.l.b16 %v859
  %v1024 = vunpack.c.h.b16 %v859
  %v1025 = vunpack.c.l.b16 %v860
  %v1026 = vunpack.c.h.b16 %v860
  %v1027 = vunpack.c.l.b16 %v861
  %v1028 = vunpack.c.h.b16 %v861
  %v1029 = vunpack.c.l.b16 %v862
  %v1030 = vunpack.c.h.b16 %v862
  %v1031 = vunpack.c.l.b16 %v863
  %v1032 = vunpack.c.h.b16 %v863
  %v1033 = vunpack.c.l.b16 %v864
  %v1034 = vunpack.c.h.b16 %v864
  %v1035 = vunpack.c.l.b16 %v865
  %v1036 = vunpack.c.h.b16 %v865
  %v1037 = vunpack.c.l.b16 %v866
  %v1038 = vunpack.c.h.b16 %v866
  %v1039 = vunpack.c.l.b16 %v867
  %v1040 = vunpack.c.h.b16 %v867
  %v1041 = vunpack.c.l.b16 %v868
  %v1042 = vunpack.c.h.b16 %v868
  %v1043 = vunpack.c.l.b16 %v869
  %v1044 = vunpack.c.h.b16 %v869
  %v1045 = vunpack.c.l.b16 %v870
  %v1046 = vunpack.c.h.b16 %v870
  %v1047 = vunpack.c.l.b16 %v871
  %v1048 = vunpack.c.h.b16 %v871
  %v1049 = vunpack.c.l.b16 %v872
  %v1050 = vunpack.c.h.b16 %v872
  %v1051 = vunpack.c.l.b16 %v873
  %v1052 = vunpack.c.h.b16 %v873
  %v1053 = vunpack.c.l.b16 %v874
  %v1054 = vunpack.c.h.b16 %v874
  %v1055 = vunpack.c.l.b16 %v875
  %v1056 = vunpack.c.h.b16 %v875
  %v1057 = vunpack.c.l.b16 %v876
  %v1058 = vunpack.c.h.b16 %v876
  %v1059 = vunpack.c.l.b16 %v877
  %v1060 = vunpack.c.h.b16 %v877
  %v1061 = vunpack.c.l.b16 %v878
  %v1062 = vunpack.c.h.b16 %v878
  %v1063 = vunpack.c.l.b16 %v879
  %v1064 = vunpack.c.h.b16 %v879
  %v1065 = vunpack.c.l.b16 %v880
  %v1066 = vunpack.c.h.b16 %v880
  %v1067 = vunpack.c.l.b16 %v881
  %v1068 = vunpack.c.h.b16 %v881
  %v1069 = vunpack.c.l.b16 %v882
  %v1070 = vunpack.c.h.b16 %v882
  %v1071 = vunpack.c.l.b16 %v883
  %v1072 = vunpack.c.h.b16 %v883
  %v1073 = vunpack.c.l.b16 %v884
  %v1074 = vunpack.c.h.b16 %v884
  %v1075 = vunpack.c.l.b16 %v885
  %v1076 = vunpack.c.h.b16 %v885
  %v1077 = vunpack.c.l.b16 %v886
  %v1078 = vunpack.c.h.b16 %v886
  %v1079 = vunpack.c.l.b16 %v887
  %v1080 = vunpack.c.h.b16 %v887
  %v1081 = vunpack.c.l.b16 %v888
  %v1082 = vunpack.c.h.b16 %v888
  %v1083 = vunpack.c.l.b16 %v889
  %v1084 = vunpack.c.h.b16 %v889
  %v1085 = vunpack.c.l.b16 %v890
  %v1086 = vunpack.c.h.b16 %v890
  %v1087 = vunpack.c.l.b16 %v891
  %v1088 = vunpack.c.h.b16 %v891
  %v1089 = vunpack.c.l.b16 %v892
  %v1090 = vunpack.c.h.b16 %v892
  %v1091 = vunpack.c.l.b16 %v893
  %v1092 = vunpack.c.h.b16 %v893
  %v1093 = vunpack.c.l.b16 %v894
  %v1094 = vunpack.c.h.b16 %v894
  %v1095 = vunpack.c.l.b16 %v895
  %v1096 = vunpack.c.h.b16 %v895
  %v1097 = vunpack.c.l.b16 %v896
  %v1098 = vunpack.c.h.b16 %v896
  %v1099 = vunpack.c.l.b16 %v897
  %v1100 = vunpack.c.h.b16 %v897
  %v1101 = vunpack.c.l.b16 %v898
  %v1102 = vunpack.c.h.b16 %v898
  %v1103 = vunpack.c.l.b16 %v899
  %v1104 = vunpack.c.h.b16 %v899
  %v1105 = vunpack.c.l.b16 %v900
  %v1106 = vunpack.c.h.b16 %v900
  %v1107 = vunpack.c.l.b16 %v901
  %v1108 = vunpack.c.h.b16 %v901
  %v1109 = vunpack.c.l.b16 %v902
  %v1110 = vunpack.c.h.b16 %v902
  %v1111 = vunpack.c.l.b16 %v903
  %v1112 = vunpack.c.h.b16 %v903
  %v1113 = vunpack.c.l.b16 %v904
  %v1114 = vunpack.c.h.b16 %v904
  %v1115 = vunpack.c.l.b16 %v905
  %v1116 = vunpack.c.h.b16 %v905
  %v1117 = vunpack.c.l.b16 %v906
  %v1118 = vunpack.c.h.b16 %v906
  %v1119 = vunpack.c.l.b16 %v907
  %v1120 = vunpack.c.h.b16 %v907
  %v1121 = vunpack.c.l.b16 %v908
  %v1122 = vunpack.c.h.b16 %v908
  %v1123 = vpack.c.b16 %v999, %v995
  %v1124 = vpack.c.b16 %v1000, %v996
  %v1125 = vpack.c.b16 %v1001, %v997
  %v1126 = vpack.c.b16 %v1002, %v998
  %v1127 = vpack.c.b16 %v1007, %v1003
  %v1128 = vpack.c.b16 %v1008, %v1004
  %v1129 = vpack.c.b16 %v1009, %v1005
  %v1130 = vpack.c.b16 %v1010, %v1006
  %v1131 = vpack.c.b16 %v1015, %v1011
  %v1132 = vpack.c.b16 %v1016, %v1012
  %v1133 = vpack.c.b16 %v1017, %v1013
  %v1134 = vpack.c.b16 %v1018, %v1014
  %v1135 = vpack.c.b16 %v1023, %v1019
  %v1136 = vpack.c.b16 %v1024, %v1020
  %v1137 = vpack.c.b16 %v1025, %v1021
  %v1138 = vpack.c.b16 %v1026, %v1022
  %v1139 = vpack.c.b16 %v1031, %v1027
  %v1140 = vpack.c.b16 %v1032, %v1028
  %v1141 = vpack.c.b16 %v1033, %v1029
  %v1142 = vpack.c.b16 %v1034, %v1030
  %v1143 = vpack.c.b16 %v1039, %v1035
  %v1144 = vpack.c.b16 %v1040, %v1036
  %v1145 = vpack.c.b16 %v1041, %v1037
  %v1146 = vpack.c.b16 %v1042, %v1038
  %v1147 = vpack.c.b16 %v1047, %v1043
  %v1148 = vpack.c.b16 %v1048, %v1044
  %v1149 = vpack.c.b16 %v1049, %v1045
  %v1150 = vpack.c.b16 %v1050, %v1046
  %v1151 = vpack.c.b16 %v1055, %v1051
  %v1152 = vpack.c.b16 %v1056, %v1052
  %v1153 = vpack.c.b16 %v1057, %v1053
  %v1154 = vpack.c.b16 %v1058, %v1054
  %v1155 = vpack.c.b16 %v1063, %v1059
  %v1156 = vpack.c.b16 %v1064, %v1060
  %v1157 = vpack.c.b16 %v1065, %v1061
  %v1158 = vpack.c.b16 %v1066, %v1062
  %v1159 = vpack.c.b16 %v1071, %v1067
  %v1160 = vpack.c.b16 %v1072, %v1068
  %v1161 = vpack.c.b16 %v1073, %v1069
  %v1162 = vpack.c.b16 %v1074, %v1070
  %v1163 = vpack.c.b16 %v1079, %v1075
  %v1164 = vpack.c.b16 %v1080, %v1076
  %v1165 = vpack.c.b16 %v1081, %v1077
  %v1166 = vpack.c.b16 %v1082, %v1078
  %v1167 = vpack.c.b16 %v1087, %v1083
  %v1168 = vpack.c.b16 %v1088, %v1084
  %v1169 = vpack.c.b16 %v1089, %v1085
  %v1170 = vpack.c.b16 %v1090, %v1086
  %v1171 = vpack.c.b16 %v1095, %v1091
  %v1172 = vpack.c.b16 %v1096, %v1092
  %v1173 = vpack.c.b16 %v1097, %v1093
  %v1174 = vpack.c.b16 %v1098, %v1094
  %v1175 = vpack.c.b16 %v1103, %v1099
  %v1176 = vpack.c.b16 %v1104, %v1100
  %v1177 = vpack.c.b16 %v1105, %v1101
  %v1178 = vpack.c.b16 %v1106, %v1102
  %v1179 = vpack.c.b16 %v1111, %v1107
  %v1180 = vpack.c.b16 %v1112, %v1108
  %v1181 = vpack.c.b16 %v1113, %v1109
  %v1182 = vpack.c.b16 %v1114, %v1110
  %v1183 = vpack.c.b16 %v1119, %v1115
  %v1184 = vpack.c.b16 %v1120, %v1116
  %v1185 = vpack.c.b16 %v1121, %v1117
  %v1186 = vpack.c.b16 %v1122, %v1118
  %1251 = vmatprep.subr.bf16.mxu0 %v1124
  %1252 = vmatpush1.bf16.msra.mxu0 %v1123
  %1253 = vmatprep.subr.bf16.mxu0 %v1128
  %1254 = vmatpush1.bf16.msra.mxu0 %v1127
  %1255 = vmatprep.subr.bf16.mxu0 %v1132
  %1256 = vmatpush1.bf16.msra.mxu0 %v1131
  %1257 = vmatprep.subr.bf16.mxu0 %v1136
  %1258 = vmatpush1.bf16.msra.mxu0 %v1135
  %1259 = vmatprep.subr.bf16.mxu0 %v1140
  %1260 = vmatpush1.bf16.msra.mxu0 %v1139
  %1261 = vmatprep.subr.bf16.mxu0 %v1144
  %1262 = vmatpush1.bf16.msra.mxu0 %v1143
  %1263 = vmatprep.subr.bf16.mxu0 %v1148
  %1264 = vmatpush1.bf16.msra.mxu0 %v1147
  %1265 = vmatprep.subr.bf16.mxu0 %v1152
  %1266 = vmatpush1.bf16.msra.mxu0 %v1151
  %1267 = vmatprep.subr.bf16.mxu0 %v1156
  %1268 = vmatpush1.bf16.msra.mxu0 %v1155
  %1269 = vmatprep.subr.bf16.mxu0 %v1160
  %1270 = vmatpush1.bf16.msra.mxu0 %v1159
  %1271 = vmatprep.subr.bf16.mxu0 %v1164
  %1272 = vmatpush1.bf16.msra.mxu0 %v1163
  %1273 = vmatprep.subr.bf16.mxu0 %v1168
  %1274 = vmatpush1.bf16.msra.mxu0 %v1167
  %1275 = vmatprep.subr.bf16.mxu0 %v1172
  %1276 = vmatpush1.bf16.msra.mxu0 %v1171
  %1277 = vmatprep.subr.bf16.mxu0 %v1176
  %1278 = vmatpush1.bf16.msra.mxu0 %v1175
  %1279 = vmatprep.subr.bf16.mxu0 %v1180
  %1280 = vmatpush1.bf16.msra.mxu0 %v1179
  %1281 = vmatprep.subr.bf16.mxu0 %v1184
  %1282 = vmatpush1.bf16.msra.mxu0 %v1183
  %1283 = vmatprep.mubr.bf16.mxu0 %v844
  %1284 = vmatmul.mubr.bf16.gmra.mrb[0].mxu0 %v843
  %v1285 = vpop.f32.mrb[0].mxu0
  %v1286 = vadd.f32 %v914, %v1285
  %v1287 = vpop.f32.mrb[0].mxu0
  %v1288 = vadd.f32 %v918, %v1287
  %v1289 = vpop.f32.mrb[0].mxu0
  %v1290 = vpop.f32.mrb[0].mxu0
  %1291 = vdwg.mxu0
  %1292 = vmatprep.subr.bf16.mxu0 %v1126
  %1293 = vmatpush1.bf16.msra.mxu0 %v1125
  %1294 = vmatprep.subr.bf16.mxu0 %v1130
  %1295 = vmatpush1.bf16.msra.mxu0 %v1129
  %1296 = vmatprep.subr.bf16.mxu0 %v1134
  %1297 = vmatpush1.bf16.msra.mxu0 %v1133
  %1298 = vmatprep.subr.bf16.mxu0 %v1138
  %1299 = vmatpush1.bf16.msra.mxu0 %v1137
  %1300 = vmatprep.subr.bf16.mxu0 %v1142
  %1301 = vmatpush1.bf16.msra.mxu0 %v1141
  %1302 = vmatprep.subr.bf16.mxu0 %v1146
  %1303 = vmatpush1.bf16.msra.mxu0 %v1145
  %1304 = vmatprep.subr.bf16.mxu0 %v1150
  %1305 = vmatpush1.bf16.msra.mxu0 %v1149
  %1306 = vmatprep.subr.bf16.mxu0 %v1154
  %1307 = vmatpush1.bf16.msra.mxu0 %v1153
  %1308 = vmatprep.subr.bf16.mxu0 %v1158
  %1309 = vmatpush1.bf16.msra.mxu0 %v1157
  %1310 = vmatprep.subr.bf16.mxu0 %v1162
  %1311 = vmatpush1.bf16.msra.mxu0 %v1161
  %1312 = vmatprep.subr.bf16.mxu0 %v1166
  %1313 = vmatpush1.bf16.msra.mxu0 %v1165
  %1314 = vmatprep.subr.bf16.mxu0 %v1170
  %1315 = vmatpush1.bf16.msra.mxu0 %v1169
  %1316 = vmatprep.subr.bf16.mxu0 %v1174
  %1317 = vmatpush1.bf16.msra.mxu0 %v1173
  %1318 = vmatprep.subr.bf16.mxu0 %v1178
  %1319 = vmatpush1.bf16.msra.mxu0 %v1177
  %1320 = vmatprep.subr.bf16.mxu0 %v1182
  %1321 = vmatpush1.bf16.msra.mxu0 %v1181
  %1322 = vmatprep.subr.bf16.mxu0 %v1186
  %1323 = vmatpush1.bf16.msra.mxu0 %v1185
  %1324 = vmatprep.mubr.bf16.mxu0 %v844
  %1325 = vmatmul.mubr.bf16.gmra.mrb[0].mxu0 %v843
  %v1326 = vpop.f32.mrb[0].mxu0
  %v1327 = vadd.f32 %v922, %v1326
  %v1328 = vpop.f32.mrb[0].mxu0
  %v1329 = vadd.f32 %v926, %v1328
  %v1330 = vpop.f32.mrb[0].mxu0
  %v1331 = vpop.f32.mrb[0].mxu0
  %1332 = vdwg.mxu0
  %v1333 = vmax.f32 %v1286, 0.0
  %v1334 = vmax.f32 %v1288, 0.0
  %v1335 = vmax.f32 %v1327, 0.0
  %v1336 = vmax.f32 %v1329, 0.0
  %v1337 = vpack.c.bf16 %v1333, %v1333
  %v1338 = vpack.c.bf16 %v1334, %v1334
  %v1339 = vpack.c.bf16 %v1335, %v1335
  %v1340 = vpack.c.bf16 %v1336, %v1336
  %v1341 = vld [vmem:[%s5] sm:$0xff]
  %v1342 = vld [vmem:[%s5 + $0x8] sm:$0xff]
  %v1343 = vld [vmem:[%s5 + $0x10] sm:$0xff]
  %v1344 = vld [vmem:[%s5 + $0x18] sm:$0xff]
  %v1345 = vld [vmem:[%s5 + $0x20] sm:$0xff]
  %v1346 = vld [vmem:[%s5 + $0x28] sm:$0xff]
  %v1347 = vld [vmem:[%s5 + $0x30] sm:$0xff]
  %v1348 = vld [vmem:[%s5 + $0x38] sm:$0xff]
  %v1349 = vld [vmem:[%s5 + $0x40] sm:$0xff]
  %v1350 = vld [vmem:[%s5 + $0x48] sm:$0xff]
  %v1351 = vld [vmem:[%s5 + $0x50] sm:$0xff]
  %v1352 = vld [vmem:[%s5 + $0x58] sm:$0xff]
  %v1353 = vld [vmem:[%s5 + $0x60] sm:$0xff]
  %v1354 = vld [vmem:[%s5 + $0x68] sm:$0xff]
  %v1355 = vld [vmem:[%s5 + $0x70] sm:$0xff]
  %v1356 = vld [vmem:[%s5 + $0x78] sm:$0xff]
  %v1357 = vld [vmem:[%s5 + $0x80] sm:$0xff]
  %v1358 = vld [vmem:[%s5 + $0x88] sm:$0xff]
  %v1359 = vld [vmem:[%s5 + $0x90] sm:$0xff]
  %v1360 = vld [vmem:[%s5 + $0x98] sm:$0xff]
  %v1361 = vld [vmem:[%s5 + $0xa0] sm:$0xff]
  %v1362 = vld [vmem:[%s5 + $0xa8] sm:$0xff]
  %v1363 = vld [vmem:[%s5 + $0xb0] sm:$0xff]
  %v1364 = vld [vmem:[%s5 + $0xb8] sm:$0xff]
  %v1365 = vld [vmem:[%s5 + $0xc0] sm:$0xff]
  %v1366 = vld [vmem:[%s5 + $0xc8] sm:$0xff]
  %v1367 = vld [vmem:[%s5 + $0xd0] sm:$0xff]
  %v1368 = vld [vmem:[%s5 + $0xd8] sm:$0xff]
  %v1369 = vld [vmem:[%s5 + $0xe0] sm:$0xff]
  %v1370 = vld [vmem:[%s5 + $0xe8] sm:$0xff]
  %v1371 = vld [vmem:[%s5 + $0xf0] sm:$0xff]
  %v1372 = vld [vmem:[%s5 + $0xf8] sm:$0xff]
  %v1373 = vld [vmem:[%s5 + $0x100] sm:$0xff]
  %v1374 = vld [vmem:[%s5 + $0x108] sm:$0xff]
  %v1375 = vld [vmem:[%s5 + $0x110] sm:$0xff]
  %v1376 = vld [vmem:[%s5 + $0x118] sm:$0xff]
  %v1377 = vld [vmem:[%s5 + $0x120] sm:$0xff]
  %v1378 = vld [vmem:[%s5 + $0x128] sm:$0xff]
  %v1379 = vld [vmem:[%s5 + $0x130] sm:$0xff]
  %v1380 = vld [vmem:[%s5 + $0x138] sm:$0xff]
  %v1381 = vld [vmem:[%s5 + $0x140] sm:$0xff]
  %v1382 = vld [vmem:[%s5 + $0x148] sm:$0xff]
  %v1383 = vld [vmem:[%s5 + $0x150] sm:$0xff]
  %v1384 = vld [vmem:[%s5 + $0x158] sm:$0xff]
  %v1385 = vld [vmem:[%s5 + $0x160] sm:$0xff]
  %v1386 = vld [vmem:[%s5 + $0x168] sm:$0xff]
  %v1387 = vld [vmem:[%s5 + $0x170] sm:$0xff]
  %v1388 = vld [vmem:[%s5 + $0x178] sm:$0xff]
  %v1389 = vld [vmem:[%s5 + $0x180] sm:$0xff]
  %v1390 = vld [vmem:[%s5 + $0x188] sm:$0xff]
  %v1391 = vld [vmem:[%s5 + $0x190] sm:$0xff]
  %v1392 = vld [vmem:[%s5 + $0x198] sm:$0xff]
  %v1393 = vld [vmem:[%s5 + $0x1a0] sm:$0xff]
  %v1394 = vld [vmem:[%s5 + $0x1a8] sm:$0xff]
  %v1395 = vld [vmem:[%s5 + $0x1b0] sm:$0xff]
  %v1396 = vld [vmem:[%s5 + $0x1b8] sm:$0xff]
  %v1397 = vld [vmem:[%s5 + $0x1c0] sm:$0xff]
  %v1398 = vld [vmem:[%s5 + $0x1c8] sm:$0xff]
  %v1399 = vld [vmem:[%s5 + $0x1d0] sm:$0xff]
  %v1400 = vld [vmem:[%s5 + $0x1d8] sm:$0xff]
  %v1401 = vld [vmem:[%s5 + $0x1e0] sm:$0xff]
  %v1402 = vld [vmem:[%s5 + $0x1e8] sm:$0xff]
  %v1403 = vld [vmem:[%s5 + $0x1f0] sm:$0xff]
  %v1404 = vld [vmem:[%s5 + $0x1f8] sm:$0xff]
  %v1405 = vld [vmem:[%s6] sm:$0x3]
  %v1407 = vlaneseq
  %v1408 = vshrl.u32 %v1407, 7
  %v1409 = vsub.s32 0, %v1408
  %v1410 = vrot.slane %v1405, %v1409
  %v1411 = vlaneseq
  %v1412 = vshrl.u32 %v1411, 7
  %v1413 = vsub.s32 1, %v1412
  %v1414 = vrot.slane %v1405, %v1413
  %v1481 = vunpack.c.l.b16 %v1341
  %v1482 = vunpack.c.h.b16 %v1341
  %v1483 = vunpack.c.l.b16 %v1342
  %v1484 = vunpack.c.h.b16 %v1342
  %v1485 = vunpack.c.l.b16 %v1343
  %v1486 = vunpack.c.h.b16 %v1343
  %v1487 = vunpack.c.l.b16 %v1344
  %v1488 = vunpack.c.h.b16 %v1344
  %v1489 = vunpack.c.l.b16 %v1345
  %v1490 = vunpack.c.h.b16 %v1345
  %v1491 = vunpack.c.l.b16 %v1346
  %v1492 = vunpack.c.h.b16 %v1346
  %v1493 = vunpack.c.l.b16 %v1347
  %v1494 = vunpack.c.h.b16 %v1347
  %v1495 = vunpack.c.l.b16 %v1348
  %v1496 = vunpack.c.h.b16 %v1348
  %v1497 = vunpack.c.l.b16 %v1349
  %v1498 = vunpack.c.h.b16 %v1349
  %v1499 = vunpack.c.l.b16 %v1350
  %v1500 = vunpack.c.h.b16 %v1350
  %v1501 = vunpack.c.l.b16 %v1351
  %v1502 = vunpack.c.h.b16 %v1351
  %v1503 = vunpack.c.l.b16 %v1352
  %v1504 = vunpack.c.h.b16 %v1352
  %v1505 = vunpack.c.l.b16 %v1353
  %v1506 = vunpack.c.h.b16 %v1353
  %v1507 = vunpack.c.l.b16 %v1354
  %v1508 = vunpack.c.h.b16 %v1354
  %v1509 = vunpack.c.l.b16 %v1355
  %v1510 = vunpack.c.h.b16 %v1355
  %v1511 = vunpack.c.l.b16 %v1356
  %v1512 = vunpack.c.h.b16 %v1356
  %v1513 = vunpack.c.l.b16 %v1357
  %v1514 = vunpack.c.h.b16 %v1357
  %v1515 = vunpack.c.l.b16 %v1358
  %v1516 = vunpack.c.h.b16 %v1358
  %v1517 = vunpack.c.l.b16 %v1359
  %v1518 = vunpack.c.h.b16 %v1359
  %v1519 = vunpack.c.l.b16 %v1360
  %v1520 = vunpack.c.h.b16 %v1360
  %v1521 = vunpack.c.l.b16 %v1361
  %v1522 = vunpack.c.h.b16 %v1361
  %v1523 = vunpack.c.l.b16 %v1362
  %v1524 = vunpack.c.h.b16 %v1362
  %v1525 = vunpack.c.l.b16 %v1363
  %v1526 = vunpack.c.h.b16 %v1363
  %v1527 = vunpack.c.l.b16 %v1364
  %v1528 = vunpack.c.h.b16 %v1364
  %v1529 = vunpack.c.l.b16 %v1365
  %v1530 = vunpack.c.h.b16 %v1365
  %v1531 = vunpack.c.l.b16 %v1366
  %v1532 = vunpack.c.h.b16 %v1366
  %v1533 = vunpack.c.l.b16 %v1367
  %v1534 = vunpack.c.h.b16 %v1367
  %v1535 = vunpack.c.l.b16 %v1368
  %v1536 = vunpack.c.h.b16 %v1368
  %v1537 = vunpack.c.l.b16 %v1369
  %v1538 = vunpack.c.h.b16 %v1369
  %v1539 = vunpack.c.l.b16 %v1370
  %v1540 = vunpack.c.h.b16 %v1370
  %v1541 = vunpack.c.l.b16 %v1371
  %v1542 = vunpack.c.h.b16 %v1371
  %v1543 = vunpack.c.l.b16 %v1372
  %v1544 = vunpack.c.h.b16 %v1372
  %v1545 = vunpack.c.l.b16 %v1373
  %v1546 = vunpack.c.h.b16 %v1373
  %v1547 = vunpack.c.l.b16 %v1374
  %v1548 = vunpack.c.h.b16 %v1374
  %v1549 = vunpack.c.l.b16 %v1375
  %v1550 = vunpack.c.h.b16 %v1375
  %v1551 = vunpack.c.l.b16 %v1376
  %v1552 = vunpack.c.h.b16 %v1376
  %v1553 = vunpack.c.l.b16 %v1377
  %v1554 = vunpack.c.h.b16 %v1377
  %v1555 = vunpack.c.l.b16 %v1378
  %v1556 = vunpack.c.h.b16 %v1378
  %v1557 = vunpack.c.l.b16 %v1379
  %v1558 = vunpack.c.h.b16 %v1379
  %v1559 = vunpack.c.l.b16 %v1380
  %v1560 = vunpack.c.h.b16 %v1380
  %v1561 = vunpack.c.l.b16 %v1381
  %v1562 = vunpack.c.h.b16 %v1381
  %v1563 = vunpack.c.l.b16 %v1382
  %v1564 = vunpack.c.h.b16 %v1382
  %v1565 = vunpack.c.l.b16 %v1383
  %v1566 = vunpack.c.h.b16 %v1383
  %v1567 = vunpack.c.l.b16 %v1384
  %v1568 = vunpack.c.h.b16 %v1384
  %v1569 = vunpack.c.l.b16 %v1385
  %v1570 = vunpack.c.h.b16 %v1385
  %v1571 = vunpack.c.l.b16 %v1386
  %v1572 = vunpack.c.h.b16 %v1386
  %v1573 = vunpack.c.l.b16 %v1387
  %v1574 = vunpack.c.h.b16 %v1387
  %v1575 = vunpack.c.l.b16 %v1388
  %v1576 = vunpack.c.h.b16 %v1388
  %v1577 = vunpack.c.l.b16 %v1389
  %v1578 = vunpack.c.h.b16 %v1389
  %v1579 = vunpack.c.l.b16 %v1390
  %v1580 = vunpack.c.h.b16 %v1390
  %v1581 = vunpack.c.l.b16 %v1391
  %v1582 = vunpack.c.h.b16 %v1391
  %v1583 = vunpack.c.l.b16 %v1392
  %v1584 = vunpack.c.h.b16 %v1392
  %v1585 = vunpack.c.l.b16 %v1393
  %v1586 = vunpack.c.h.b16 %v1393
  %v1587 = vunpack.c.l.b16 %v1394
  %v1588 = vunpack.c.h.b16 %v1394
  %v1589 = vunpack.c.l.b16 %v1395
  %v1590 = vunpack.c.h.b16 %v1395
  %v1591 = vunpack.c.l.b16 %v1396
  %v1592 = vunpack.c.h.b16 %v1396
  %v1593 = vunpack.c.l.b16 %v1397
  %v1594 = vunpack.c.h.b16 %v1397
  %v1595 = vunpack.c.l.b16 %v1398
  %v1596 = vunpack.c.h.b16 %v1398
  %v1597 = vunpack.c.l.b16 %v1399
  %v1598 = vunpack.c.h.b16 %v1399
  %v1599 = vunpack.c.l.b16 %v1400
  %v1600 = vunpack.c.h.b16 %v1400
  %v1601 = vunpack.c.l.b16 %v1401
  %v1602 = vunpack.c.h.b16 %v1401
  %v1603 = vunpack.c.l.b16 %v1402
  %v1604 = vunpack.c.h.b16 %v1402
  %v1605 = vunpack.c.l.b16 %v1403
  %v1606 = vunpack.c.h.b16 %v1403
  %v1607 = vunpack.c.l.b16 %v1404
  %v1608 = vunpack.c.h.b16 %v1404
  %v1609 = vpack.c.b16 %v1483, %v1481
  %v1610 = vpack.c.b16 %v1484, %v1482
  %v1611 = vpack.c.b16 %v1487, %v1485
  %v1612 = vpack.c.b16 %v1488, %v1486
  %v1613 = vpack.c.b16 %v1491, %v1489
  %v1614 = vpack.c.b16 %v1492, %v1490
  %v1615 = vpack.c.b16 %v1495, %v1493
  %v1616 = vpack.c.b16 %v1496, %v1494
  %v1617 = vpack.c.b16 %v1499, %v1497
  %v1618 = vpack.c.b16 %v1500, %v1498
  %v1619 = vpack.c.b16 %v1503, %v1501
  %v1620 = vpack.c.b16 %v1504, %v1502
  %v1621 = vpack.c.b16 %v1507, %v1505
  %v1622 = vpack.c.b16 %v1508, %v1506
  %v1623 = vpack.c.b16 %v1511, %v1509
  %v1624 = vpack.c.b16 %v1512, %v1510
  %v1625 = vpack.c.b16 %v1515, %v1513
  %v1626 = vpack.c.b16 %v1516, %v1514
  %v1627 = vpack.c.b16 %v1519, %v1517
  %v1628 = vpack.c.b16 %v1520, %v1518
  %v1629 = vpack.c.b16 %v1523, %v1521
  %v1630 = vpack.c.b16 %v1524, %v1522
  %v1631 = vpack.c.b16 %v1527, %v1525
  %v1632 = vpack.c.b16 %v1528, %v1526
  %v1633 = vpack.c.b16 %v1531, %v1529
  %v1634 = vpack.c.b16 %v1532, %v1530
  %v1635 = vpack.c.b16 %v1535, %v1533
  %v1636 = vpack.c.b16 %v1536, %v1534
  %v1637 = vpack.c.b16 %v1539, %v1537
  %v1638 = vpack.c.b16 %v1540, %v1538
  %v1639 = vpack.c.b16 %v1543, %v1541
  %v1640 = vpack.c.b16 %v1544, %v1542
  %v1641 = vpack.c.b16 %v1547, %v1545
  %v1642 = vpack.c.b16 %v1548, %v1546
  %v1643 = vpack.c.b16 %v1551, %v1549
  %v1644 = vpack.c.b16 %v1552, %v1550
  %v1645 = vpack.c.b16 %v1555, %v1553
  %v1646 = vpack.c.b16 %v1556, %v1554
  %v1647 = vpack.c.b16 %v1559, %v1557
  %v1648 = vpack.c.b16 %v1560, %v1558
  %v1649 = vpack.c.b16 %v1563, %v1561
  %v1650 = vpack.c.b16 %v1564, %v1562
  %v1651 = vpack.c.b16 %v1567, %v1565
  %v1652 = vpack.c.b16 %v1568, %v1566
  %v1653 = vpack.c.b16 %v1571, %v1569
  %v1654 = vpack.c.b16 %v1572, %v1570
  %v1655 = vpack.c.b16 %v1575, %v1573
  %v1656 = vpack.c.b16 %v1576, %v1574
  %v1657 = vpack.c.b16 %v1579, %v1577
  %v1658 = vpack.c.b16 %v1580, %v1578
  %v1659 = vpack.c.b16 %v1583, %v1581
  %v1660 = vpack.c.b16 %v1584, %v1582
  %v1661 = vpack.c.b16 %v1587, %v1585
  %v1662 = vpack.c.b16 %v1588, %v1586
  %v1663 = vpack.c.b16 %v1591, %v1589
  %v1664 = vpack.c.b16 %v1592, %v1590
  %v1665 = vpack.c.b16 %v1595, %v1593
  %v1666 = vpack.c.b16 %v1596, %v1594
  %v1667 = vpack.c.b16 %v1599, %v1597
  %v1668 = vpack.c.b16 %v1600, %v1598
  %v1669 = vpack.c.b16 %v1603, %v1601
  %v1670 = vpack.c.b16 %v1604, %v1602
  %v1671 = vpack.c.b16 %v1607, %v1605
  %v1672 = vpack.c.b16 %v1608, %v1606
  %1737 = vmatprep.subr.bf16.mxu0 %v1610
  %1738 = vmatpush1.bf16.msra.mxu0 %v1609
  %1739 = vmatprep.subr.bf16.mxu0 %v1612
  %1740 = vmatpush1.bf16.msra.mxu0 %v1611
  %1741 = vmatprep.subr.bf16.mxu0 %v1614
  %1742 = vmatpush1.bf16.msra.mxu0 %v1613
  %1743 = vmatprep.subr.bf16.mxu0 %v1616
  %1744 = vmatpush1.bf16.msra.mxu0 %v1615
  %1745 = vmatprep.subr.bf16.mxu0 %v1618
  %1746 = vmatpush1.bf16.msra.mxu0 %v1617
  %1747 = vmatprep.subr.bf16.mxu0 %v1620
  %1748 = vmatpush1.bf16.msra.mxu0 %v1619
  %1749 = vmatprep.subr.bf16.mxu0 %v1622
  %1750 = vmatpush1.bf16.msra.mxu0 %v1621
  %1751 = vmatprep.subr.bf16.mxu0 %v1624
  %1752 = vmatpush1.bf16.msra.mxu0 %v1623
  %1753 = vmatprep.subr.bf16.mxu0 %v1626
  %1754 = vmatpush1.bf16.msra.mxu0 %v1625
  %1755 = vmatprep.subr.bf16.mxu0 %v1628
  %1756 = vmatpush1.bf16.msra.mxu0 %v1627
  %1757 = vmatprep.subr.bf16.mxu0 %v1630
  %1758 = vmatpush1.bf16.msra.mxu0 %v1629
  %1759 = vmatprep.subr.bf16.mxu0 %v1632
  %1760 = vmatpush1.bf16.msra.mxu0 %v1631
  %1761 = vmatprep.subr.bf16.mxu0 %v1634
  %1762 = vmatpush1.bf16.msra.mxu0 %v1633
  %1763 = vmatprep.subr.bf16.mxu0 %v1636
  %1764 = vmatpush1.bf16.msra.mxu0 %v1635
  %1765 = vmatprep.subr.bf16.mxu0 %v1638
  %1766 = vmatpush1.bf16.msra.mxu0 %v1637
  %1767 = vmatprep.subr.bf16.mxu0 %v1640
  %1768 = vmatpush1.bf16.msra.mxu0 %v1639
  %1769 = vmatprep.mubr.bf16.mxu0 %v1338
  %1770 = vmatmul.mubr.bf16.gmra.mrb[0].mxu0 %v1337
  %v1771 = vpop.f32.mrb[0].mxu0
  %v1772 = vadd.f32 %v1410, %v1771
  %v1773 = vpop.f32.mrb[0].mxu0
  %v1774 = vadd.f32 %v1414, %v1773
  %v1775 = vpop.f32.mrb[0].mxu0
  %v1776 = vpop.f32.mrb[0].mxu0
  %1777 = vdwg.mxu0
  %1778 = vmatprep.subr.bf16.mxu0 %v1642
  %1779 = vmatpush1.bf16.msra.mxu0 %v1641
  %1780 = vmatprep.subr.bf16.mxu0 %v1644
  %1781 = vmatpush1.bf16.msra.mxu0 %v1643
  %1782 = vmatprep.subr.bf16.mxu0 %v1646
  %1783 = vmatpush1.bf16.msra.mxu0 %v1645
  %1784 = vmatprep.subr.bf16.mxu0 %v1648
  %1785 = vmatpush1.bf16.msra.mxu0 %v1647
  %1786 = vmatprep.subr.bf16.mxu0 %v1650
  %1787 = vmatpush1.bf16.msra.mxu0 %v1649
  %1788 = vmatprep.subr.bf16.mxu0 %v1652
  %1789 = vmatpush1.bf16.msra.mxu0 %v1651
  %1790 = vmatprep.subr.bf16.mxu0 %v1654
  %1791 = vmatpush1.bf16.msra.mxu0 %v1653
  %1792 = vmatprep.subr.bf16.mxu0 %v1656
  %1793 = vmatpush1.bf16.msra.mxu0 %v1655
  %1794 = vmatprep.subr.bf16.mxu0 %v1658
  %1795 = vmatpush1.bf16.msra.mxu0 %v1657
  %1796 = vmatprep.subr.bf16.mxu0 %v1660
  %1797 = vmatpush1.bf16.msra.mxu0 %v1659
  %1798 = vmatprep.subr.bf16.mxu0 %v1662
  %1799 = vmatpush1.bf16.msra.mxu0 %v1661
  %1800 = vmatprep.subr.bf16.mxu0 %v1664
  %1801 = vmatpush1.bf16.msra.mxu0 %v1663
  %1802 = vmatprep.subr.bf16.mxu0 %v1666
  %1803 = vmatpush1.bf16.msra.mxu0 %v1665
  %1804 = vmatprep.subr.bf16.mxu0 %v1668
  %1805 = vmatpush1.bf16.msra.mxu0 %v1667
  %1806 = vmatprep.subr.bf16.mxu0 %v1670
  %1807 = vmatpush1.bf16.msra.mxu0 %v1669
  %1808 = vmatprep.subr.bf16.mxu0 %v1672
  %1809 = vmatpush1.bf16.msra.mxu0 %v1671
  %1810 = vmatprep.mubr.bf16.mxu0 %v1340
  %1811 = vmatmul.mubr.bf16.gmra.mrb[0].mxu0 %v1339
  %v1812 = vpop.f32.mrb[0].mxu0
  %v1813 = vadd.f32 %v1772, %v1812
  %v1814 = vpop.f32.mrb[0].mxu0
  %v1815 = vadd.f32 %v1774, %v1814
  %v1816 = vpop.f32.mrb[0].mxu0
  %v1817 = vpop.f32.mrb[0].mxu0
  %1818 = vdwg.mxu0
  %vm1819 = vcmask 162816
  %1820 = vst.msk [vmem:[%s12] sm:$0xff] %vm1819, %v1813
  %1821 = vst.msk [vmem:[%s13] sm:$0xff] %vm1819, %v1815
  %v1822 = vmul.f32 %v1815, 0.5
  %v1823 = vmul.f32 %v1822, 1.442695
  %v1824 = vpow.pop %v1823
  %v1825 = vld [vmem:[%s11] sm:$0xff]
  %v1826 = vmul.f32 %v1825, %v1824
  %v1827 = vadd.f32 %v1813, %v1826
  %v1828 = vpack.c.bf16 %v1827, %v1827
  %v1829 = vld [vmem:[%s7] sm:$0xff]
  %v1830 = vld [vmem:[%s7 + $0x8] sm:$0xff]
  %v1831 = vld [vmem:[%s7 + $0x10] sm:$0xff]
  %v1832 = vld [vmem:[%s7 + $0x18] sm:$0xff]
  %v1833 = vld [vmem:[%s7 + $0x20] sm:$0xff]
  %v1834 = vld [vmem:[%s7 + $0x28] sm:$0xff]
  %v1835 = vld [vmem:[%s7 + $0x30] sm:$0xff]
  %v1836 = vld [vmem:[%s7 + $0x38] sm:$0xff]
  %v1837 = vld [vmem:[%s7 + $0x40] sm:$0xff]
  %v1838 = vld [vmem:[%s7 + $0x48] sm:$0xff]
  %v1839 = vld [vmem:[%s7 + $0x50] sm:$0xff]
  %v1840 = vld [vmem:[%s7 + $0x58] sm:$0xff]
  %v1841 = vld [vmem:[%s7 + $0x60] sm:$0xff]
  %v1842 = vld [vmem:[%s7 + $0x68] sm:$0xff]
  %v1843 = vld [vmem:[%s7 + $0x70] sm:$0xff]
  %v1844 = vld [vmem:[%s7 + $0x78] sm:$0xff]
  %v1845 = vld [vmem:[%s7 + $0x80] sm:$0xff]
  %v1846 = vld [vmem:[%s7 + $0x88] sm:$0xff]
  %v1847 = vld [vmem:[%s7 + $0x90] sm:$0xff]
  %v1848 = vld [vmem:[%s7 + $0x98] sm:$0xff]
  %v1849 = vld [vmem:[%s7 + $0xa0] sm:$0xff]
  %v1850 = vld [vmem:[%s7 + $0xa8] sm:$0xff]
  %v1851 = vld [vmem:[%s7 + $0xb0] sm:$0xff]
  %v1852 = vld [vmem:[%s7 + $0xb8] sm:$0xff]
  %v1853 = vld [vmem:[%s7 + $0xc0] sm:$0xff]
  %v1854 = vld [vmem:[%s7 + $0xc8] sm:$0xff]
  %v1855 = vld [vmem:[%s7 + $0xd0] sm:$0xff]
  %v1856 = vld [vmem:[%s7 + $0xd8] sm:$0xff]
  %v1857 = vld [vmem:[%s7 + $0xe0] sm:$0xff]
  %v1858 = vld [vmem:[%s7 + $0xe8] sm:$0xff]
  %v1859 = vld [vmem:[%s7 + $0xf0] sm:$0xff]
  %v1860 = vld [vmem:[%s7 + $0xf8] sm:$0xff]
  %v1861 = vld [vmem:[%s8] sm:$0xf]
  %v1863 = vlaneseq
  %v1864 = vshrl.u32 %v1863, 7
  %v1865 = vsub.s32 0, %v1864
  %v1866 = vrot.slane %v1861, %v1865
  %v1867 = vlaneseq
  %v1868 = vshrl.u32 %v1867, 7
  %v1869 = vsub.s32 1, %v1868
  %v1870 = vrot.slane %v1861, %v1869
  %v1871 = vlaneseq
  %v1872 = vshrl.u32 %v1871, 7
  %v1873 = vsub.s32 2, %v1872
  %v1874 = vrot.slane %v1861, %v1873
  %v1875 = vlaneseq
  %v1876 = vshrl.u32 %v1875, 7
  %v1877 = vsub.s32 3, %v1876
  %v1878 = vrot.slane %v1861, %v1877
  %v1915 = vunpack.c.l.b16 %v1829
  %v1916 = vunpack.c.h.b16 %v1829
  %v1917 = vunpack.c.l.b16 %v1830
  %v1918 = vunpack.c.h.b16 %v1830
  %v1919 = vunpack.c.l.b16 %v1831
  %v1920 = vunpack.c.h.b16 %v1831
  %v1921 = vunpack.c.l.b16 %v1832
  %v1922 = vunpack.c.h.b16 %v1832
  %v1923 = vunpack.c.l.b16 %v1833
  %v1924 = vunpack.c.h.b16 %v1833
  %v1925 = vunpack.c.l.b16 %v1834
  %v1926 = vunpack.c.h.b16 %v1834
  %v1927 = vunpack.c.l.b16 %v1835
  %v1928 = vunpack.c.h.b16 %v1835
  %v1929 = vunpack.c.l.b16 %v1836
  %v1930 = vunpack.c.h.b16 %v1836
  %v1931 = vunpack.c.l.b16 %v1837
  %v1932 = vunpack.c.h.b16 %v1837
  %v1933 = vunpack.c.l.b16 %v1838
  %v1934 = vunpack.c.h.b16 %v1838
  %v1935 = vunpack.c.l.b16 %v1839
  %v1936 = vunpack.c.h.b16 %v1839
  %v1937 = vunpack.c.l.b16 %v1840
  %v1938 = vunpack.c.h.b16 %v1840
  %v1939 = vunpack.c.l.b16 %v1841
  %v1940 = vunpack.c.h.b16 %v1841
  %v1941 = vunpack.c.l.b16 %v1842
  %v1942 = vunpack.c.h.b16 %v1842
  %v1943 = vunpack.c.l.b16 %v1843
  %v1944 = vunpack.c.h.b16 %v1843
  %v1945 = vunpack.c.l.b16 %v1844
  %v1946 = vunpack.c.h.b16 %v1844
  %v1947 = vunpack.c.l.b16 %v1845
  %v1948 = vunpack.c.h.b16 %v1845
  %v1949 = vunpack.c.l.b16 %v1846
  %v1950 = vunpack.c.h.b16 %v1846
  %v1951 = vunpack.c.l.b16 %v1847
  %v1952 = vunpack.c.h.b16 %v1847
  %v1953 = vunpack.c.l.b16 %v1848
  %v1954 = vunpack.c.h.b16 %v1848
  %v1955 = vunpack.c.l.b16 %v1849
  %v1956 = vunpack.c.h.b16 %v1849
  %v1957 = vunpack.c.l.b16 %v1850
  %v1958 = vunpack.c.h.b16 %v1850
  %v1959 = vunpack.c.l.b16 %v1851
  %v1960 = vunpack.c.h.b16 %v1851
  %v1961 = vunpack.c.l.b16 %v1852
  %v1962 = vunpack.c.h.b16 %v1852
  %v1963 = vunpack.c.l.b16 %v1853
  %v1964 = vunpack.c.h.b16 %v1853
  %v1965 = vunpack.c.l.b16 %v1854
  %v1966 = vunpack.c.h.b16 %v1854
  %v1967 = vunpack.c.l.b16 %v1855
  %v1968 = vunpack.c.h.b16 %v1855
  %v1969 = vunpack.c.l.b16 %v1856
  %v1970 = vunpack.c.h.b16 %v1856
  %v1971 = vunpack.c.l.b16 %v1857
  %v1972 = vunpack.c.h.b16 %v1857
  %v1973 = vunpack.c.l.b16 %v1858
  %v1974 = vunpack.c.h.b16 %v1858
  %v1975 = vunpack.c.l.b16 %v1859
  %v1976 = vunpack.c.h.b16 %v1859
  %v1977 = vunpack.c.l.b16 %v1860
  %v1978 = vunpack.c.h.b16 %v1860
  %v1979 = vpack.c.b16 %v1919, %v1915
  %v1980 = vpack.c.b16 %v1920, %v1916
  %v1981 = vpack.c.b16 %v1921, %v1917
  %v1982 = vpack.c.b16 %v1922, %v1918
  %v1983 = vpack.c.b16 %v1927, %v1923
  %v1984 = vpack.c.b16 %v1928, %v1924
  %v1985 = vpack.c.b16 %v1929, %v1925
  %v1986 = vpack.c.b16 %v1930, %v1926
  %v1987 = vpack.c.b16 %v1935, %v1931
  %v1988 = vpack.c.b16 %v1936, %v1932
  %v1989 = vpack.c.b16 %v1937, %v1933
  %v1990 = vpack.c.b16 %v1938, %v1934
  %v1991 = vpack.c.b16 %v1943, %v1939
  %v1992 = vpack.c.b16 %v1944, %v1940
  %v1993 = vpack.c.b16 %v1945, %v1941
  %v1994 = vpack.c.b16 %v1946, %v1942
  %v1995 = vpack.c.b16 %v1951, %v1947
  %v1996 = vpack.c.b16 %v1952, %v1948
  %v1997 = vpack.c.b16 %v1953, %v1949
  %v1998 = vpack.c.b16 %v1954, %v1950
  %v1999 = vpack.c.b16 %v1959, %v1955
  %v2000 = vpack.c.b16 %v1960, %v1956
  %v2001 = vpack.c.b16 %v1961, %v1957
  %v2002 = vpack.c.b16 %v1962, %v1958
  %v2003 = vpack.c.b16 %v1967, %v1963
  %v2004 = vpack.c.b16 %v1968, %v1964
  %v2005 = vpack.c.b16 %v1969, %v1965
  %v2006 = vpack.c.b16 %v1970, %v1966
  %v2007 = vpack.c.b16 %v1975, %v1971
  %v2008 = vpack.c.b16 %v1976, %v1972
  %v2009 = vpack.c.b16 %v1977, %v1973
  %v2010 = vpack.c.b16 %v1978, %v1974
  %2043 = vmatprep.subr.bf16.mxu0 %v1980
  %2044 = vmatpush1.bf16.msra.mxu0 %v1979
  %2045 = vmatprep.subr.bf16.mxu0 %v1984
  %2046 = vmatpush1.bf16.msra.mxu0 %v1983
  %2047 = vmatprep.subr.bf16.mxu0 %v1988
  %2048 = vmatpush1.bf16.msra.mxu0 %v1987
  %2049 = vmatprep.subr.bf16.mxu0 %v1992
  %2050 = vmatpush1.bf16.msra.mxu0 %v1991
  %2051 = vmatprep.subr.bf16.mxu0 %v1996
  %2052 = vmatpush1.bf16.msra.mxu0 %v1995
  %2053 = vmatprep.subr.bf16.mxu0 %v2000
  %2054 = vmatpush1.bf16.msra.mxu0 %v1999
  %2055 = vmatprep.subr.bf16.mxu0 %v2004
  %2056 = vmatpush1.bf16.msra.mxu0 %v2003
  %2057 = vmatprep.subr.bf16.mxu0 %v2008
  %2058 = vmatpush1.bf16.msra.mxu0 %v2007
  %2059 = vmatprep.subr.bf16.mxu0 0
  %2060 = vmatpush1.bf16.msra.mxu0 0
  %2061 = vmatprep.subr.bf16.mxu0 0
  %2062 = vmatpush1.bf16.msra.mxu0 0
  %2063 = vmatprep.subr.bf16.mxu0 0
  %2064 = vmatpush1.bf16.msra.mxu0 0
  %2065 = vmatprep.subr.bf16.mxu0 0
  %2066 = vmatpush1.bf16.msra.mxu0 0
  %2067 = vmatprep.subr.bf16.mxu0 0
  %2068 = vmatpush1.bf16.msra.mxu0 0
  %2069 = vmatprep.subr.bf16.mxu0 0
  %2070 = vmatpush1.bf16.msra.mxu0 0
  %2071 = vmatprep.subr.bf16.mxu0 0
  %2072 = vmatpush1.bf16.msra.mxu0 0
  %2073 = vmatprep.subr.bf16.mxu0 0
  %2074 = vmatpush1.bf16.msra.mxu0 0
  %2075 = vmatprep.mubr.bf16.mxu0 0
  %2076 = vmatmul.mubr.bf16.gmra.mrb[0].mxu0 %v1828
  %v2077 = vpop.f32.mrb[0].mxu0
  %v2078 = vadd.f32 %v1866, %v2077
  %v2079 = vpop.f32.mrb[0].mxu0
  %v2080 = vadd.f32 %v1870, %v2079
  %v2081 = vpop.f32.mrb[0].mxu0
  %v2082 = vpop.f32.mrb[0].mxu0
  %2083 = vdwg.mxu0
  %2084 = vmatprep.subr.bf16.mxu0 %v1982
  %2085 = vmatpush1.bf16.msra.mxu0 %v1981
  %2086 = vmatprep.subr.bf16.mxu0 %v1986
  %2087 = vmatpush1.bf16.msra.mxu0 %v1985
  %2088 = vmatprep.subr.bf16.mxu0 %v1990
  %2089 = vmatpush1.bf16.msra.mxu0 %v1989
  %2090 = vmatprep.subr.bf16.mxu0 %v1994
  %2091 = vmatpush1.bf16.msra.mxu0 %v1993
  %2092 = vmatprep.subr.bf16.mxu0 %v1998
  %2093 = vmatpush1.bf16.msra.mxu0 %v1997
  %2094 = vmatprep.subr.bf16.mxu0 %v2002
  %2095 = vmatpush1.bf16.msra.mxu0 %v2001
  %2096 = vmatprep.subr.bf16.mxu0 %v2006
  %2097 = vmatpush1.bf16.msra.mxu0 %v2005
  %2098 = vmatprep.subr.bf16.mxu0 %v2010
  %2099 = vmatpush1.bf16.msra.mxu0 %v2009
  %2100 = vmatprep.subr.bf16.mxu0 0
  %2101 = vmatpush1.bf16.msra.mxu0 0
  %2102 = vmatprep.subr.bf16.mxu0 0
  %2103 = vmatpush1.bf16.msra.mxu0 0
  %2104 = vmatprep.subr.bf16.mxu0 0
  %2105 = vmatpush1.bf16.msra.mxu0 0
  %2106 = vmatprep.subr.bf16.mxu0 0
  %2107 = vmatpush1.bf16.msra.mxu0 0
  %2108 = vmatprep.subr.bf16.mxu0 0
  %2109 = vmatpush1.bf16.msra.mxu0 0
  %2110 = vmatprep.subr.bf16.mxu0 0
  %2111 = vmatpush1.bf16.msra.mxu0 0
  %2112 = vmatprep.subr.bf16.mxu0 0
  %2113 = vmatpush1.bf16.msra.mxu0 0
  %2114 = vmatprep.subr.bf16.mxu0 0
  %2115 = vmatpush1.bf16.msra.mxu0 0
  %2116 = vmatprep.mubr.bf16.mxu0 0
  %2117 = vmatmul.mubr.bf16.gmra.mrb[0].mxu0 %v1828
  %v2118 = vpop.f32.mrb[0].mxu0
  %v2119 = vadd.f32 %v1874, %v2118
  %v2120 = vpop.f32.mrb[0].mxu0
  %v2121 = vadd.f32 %v1878, %v2120
  %v2122 = vpop.f32.mrb[0].mxu0
  %v2123 = vpop.f32.mrb[0].mxu0
  %2124 = vdwg.mxu0
  %v2125 = vmax.f32 %v2078, 0.0
  %v2126 = vmax.f32 %v2080, 0.0
  %v2127 = vmax.f32 %v2119, 0.0
  %v2128 = vmax.f32 %v2121, 0.0
  %v2129 = vpack.c.bf16 %v2125, %v2125
  %v2130 = vpack.c.bf16 %v2126, %v2126
  %v2131 = vpack.c.bf16 %v2127, %v2127
  %v2132 = vpack.c.bf16 %v2128, %v2128
  %v2133 = vld [vmem:[%s9] sm:$0xff]
  %v2134 = vld [vmem:[%s9 + $0x8] sm:$0xff]
  %v2135 = vld [vmem:[%s9 + $0x10] sm:$0xff]
  %v2136 = vld [vmem:[%s9 + $0x18] sm:$0xf]
  %v2137 = vld [vmem:[%s9 + $0x1c] sm:$0xff]
  %v2138 = vld [vmem:[%s9 + $0x24] sm:$0xff]
  %v2139 = vld [vmem:[%s9 + $0x2c] sm:$0xff]
  %v2140 = vld [vmem:[%s9 + $0x34] sm:$0xf]
  %v2141 = vld [vmem:[%s9 + $0x38] sm:$0xff]
  %v2142 = vld [vmem:[%s9 + $0x40] sm:$0xff]
  %v2143 = vld [vmem:[%s9 + $0x48] sm:$0xff]
  %v2144 = vld [vmem:[%s9 + $0x50] sm:$0xf]
  %v2145 = vld [vmem:[%s9 + $0x54] sm:$0xff]
  %v2146 = vld [vmem:[%s9 + $0x5c] sm:$0xff]
  %v2147 = vld [vmem:[%s9 + $0x64] sm:$0xff]
  %v2148 = vld [vmem:[%s9 + $0x6c] sm:$0xf]
  %v2149 = vld [vmem:[%s9 + $0x70] sm:$0xff]
  %v2150 = vld [vmem:[%s9 + $0x78] sm:$0xff]
  %v2151 = vld [vmem:[%s9 + $0x80] sm:$0xff]
  %v2152 = vld [vmem:[%s9 + $0x88] sm:$0xf]
  %v2153 = vld [vmem:[%s9 + $0x8c] sm:$0xff]
  %v2154 = vld [vmem:[%s9 + $0x94] sm:$0xff]
  %v2155 = vld [vmem:[%s9 + $0x9c] sm:$0xff]
  %v2156 = vld [vmem:[%s9 + $0xa4] sm:$0xf]
  %v2157 = vld [vmem:[%s9 + $0xa8] sm:$0xff]
  %v2158 = vld [vmem:[%s9 + $0xb0] sm:$0xff]
  %v2159 = vld [vmem:[%s9 + $0xb8] sm:$0xff]
  %v2160 = vld [vmem:[%s9 + $0xc0] sm:$0xf]
  %v2161 = vld [vmem:[%s9 + $0xc4] sm:$0xff]
  %v2162 = vld [vmem:[%s9 + $0xcc] sm:$0xff]
  %v2163 = vld [vmem:[%s9 + $0xd4] sm:$0xff]
  %v2164 = vld [vmem:[%s9 + $0xdc] sm:$0xf]
  %v2165 = vld [vmem:[%s9 + $0xe0] sm:$0xff]
  %v2166 = vld [vmem:[%s9 + $0xe8] sm:$0xff]
  %v2167 = vld [vmem:[%s9 + $0xf0] sm:$0xff]
  %v2168 = vld [vmem:[%s9 + $0xf8] sm:$0xf]
  %v2169 = vld [vmem:[%s9 + $0xfc] sm:$0xff]
  %v2170 = vld [vmem:[%s9 + $0x104] sm:$0xff]
  %v2171 = vld [vmem:[%s9 + $0x10c] sm:$0xff]
  %v2172 = vld [vmem:[%s9 + $0x114] sm:$0xf]
  %v2173 = vld [vmem:[%s9 + $0x118] sm:$0xff]
  %v2174 = vld [vmem:[%s9 + $0x120] sm:$0xff]
  %v2175 = vld [vmem:[%s9 + $0x128] sm:$0xff]
  %v2176 = vld [vmem:[%s9 + $0x130] sm:$0xf]
  %v2177 = vld [vmem:[%s9 + $0x134] sm:$0xff]
  %v2178 = vld [vmem:[%s9 + $0x13c] sm:$0xff]
  %v2179 = vld [vmem:[%s9 + $0x144] sm:$0xff]
  %v2180 = vld [vmem:[%s9 + $0x14c] sm:$0xf]
  %v2181 = vld [vmem:[%s9 + $0x150] sm:$0xff]
  %v2182 = vld [vmem:[%s9 + $0x158] sm:$0xff]
  %v2183 = vld [vmem:[%s9 + $0x160] sm:$0xff]
  %v2184 = vld [vmem:[%s9 + $0x168] sm:$0xf]
  %v2185 = vld [vmem:[%s9 + $0x16c] sm:$0xff]
  %v2186 = vld [vmem:[%s9 + $0x174] sm:$0xff]
  %v2187 = vld [vmem:[%s9 + $0x17c] sm:$0xff]
  %v2188 = vld [vmem:[%s9 + $0x184] sm:$0xf]
  %v2189 = vld [vmem:[%s9 + $0x188] sm:$0xff]
  %v2190 = vld [vmem:[%s9 + $0x190] sm:$0xff]
  %v2191 = vld [vmem:[%s9 + $0x198] sm:$0xff]
  %v2192 = vld [vmem:[%s9 + $0x1a0] sm:$0xf]
  %v2193 = vld [vmem:[%s9 + $0x1a4] sm:$0xff]
  %v2194 = vld [vmem:[%s9 + $0x1ac] sm:$0xff]
  %v2195 = vld [vmem:[%s9 + $0x1b4] sm:$0xff]
  %v2196 = vld [vmem:[%s9 + $0x1bc] sm:$0xf]
  %v2197 = vld [vmem:[%s9 + $0x1c0] sm:$0xff]
  %v2198 = vld [vmem:[%s9 + $0x1c8] sm:$0xff]
  %v2199 = vld [vmem:[%s9 + $0x1d0] sm:$0xff]
  %v2200 = vld [vmem:[%s9 + $0x1d8] sm:$0xf]
  %v2201 = vld [vmem:[%s9 + $0x1dc] sm:$0xff]
  %v2202 = vld [vmem:[%s9 + $0x1e4] sm:$0xff]
  %v2203 = vld [vmem:[%s9 + $0x1ec] sm:$0xff]
  %v2204 = vld [vmem:[%s9 + $0x1f4] sm:$0xf]
  %v2205 = vld [vmem:[%s9 + $0x1f8] sm:$0xff]
  %v2206 = vld [vmem:[%s9 + $0x200] sm:$0xff]
  %v2207 = vld [vmem:[%s9 + $0x208] sm:$0xff]
  %v2208 = vld [vmem:[%s9 + $0x210] sm:$0xf]
  %v2209 = vld [vmem:[%s9 + $0x214] sm:$0xff]
  %v2210 = vld [vmem:[%s9 + $0x21c] sm:$0xff]
  %v2211 = vld [vmem:[%s9 + $0x224] sm:$0xff]
  %v2212 = vld [vmem:[%s9 + $0x22c] sm:$0xf]
  %v2213 = vld [vmem:[%s9 + $0x230] sm:$0xff]
  %v2214 = vld [vmem:[%s9 + $0x238] sm:$0xff]
  %v2215 = vld [vmem:[%s9 + $0x240] sm:$0xff]
  %v2216 = vld [vmem:[%s9 + $0x248] sm:$0xf]
  %v2217 = vld [vmem:[%s9 + $0x24c] sm:$0xff]
  %v2218 = vld [vmem:[%s9 + $0x254] sm:$0xff]
  %v2219 = vld [vmem:[%s9 + $0x25c] sm:$0xff]
  %v2220 = vld [vmem:[%s9 + $0x264] sm:$0xf]
  %v2221 = vld [vmem:[%s9 + $0x268] sm:$0xff]
  %v2222 = vld [vmem:[%s9 + $0x270] sm:$0xff]
  %v2223 = vld [vmem:[%s9 + $0x278] sm:$0xff]
  %v2224 = vld [vmem:[%s9 + $0x280] sm:$0xf]
  %v2225 = vld [vmem:[%s9 + $0x284] sm:$0xff]
  %v2226 = vld [vmem:[%s9 + $0x28c] sm:$0xff]
  %v2227 = vld [vmem:[%s9 + $0x294] sm:$0xff]
  %v2228 = vld [vmem:[%s9 + $0x29c] sm:$0xf]
  %v2229 = vld [vmem:[%s9 + $0x2a0] sm:$0xff]
  %v2230 = vld [vmem:[%s9 + $0x2a8] sm:$0xff]
  %v2231 = vld [vmem:[%s9 + $0x2b0] sm:$0xff]
  %v2232 = vld [vmem:[%s9 + $0x2b8] sm:$0xf]
  %v2233 = vld [vmem:[%s9 + $0x2bc] sm:$0xff]
  %v2234 = vld [vmem:[%s9 + $0x2c4] sm:$0xff]
  %v2235 = vld [vmem:[%s9 + $0x2cc] sm:$0xff]
  %v2236 = vld [vmem:[%s9 + $0x2d4] sm:$0xf]
  %v2237 = vld [vmem:[%s9 + $0x2d8] sm:$0xff]
  %v2238 = vld [vmem:[%s9 + $0x2e0] sm:$0xff]
  %v2239 = vld [vmem:[%s9 + $0x2e8] sm:$0xff]
  %v2240 = vld [vmem:[%s9 + $0x2f0] sm:$0xf]
  %v2241 = vld [vmem:[%s9 + $0x2f4] sm:$0xff]
  %v2242 = vld [vmem:[%s9 + $0x2fc] sm:$0xff]
  %v2243 = vld [vmem:[%s9 + $0x304] sm:$0xff]
  %v2244 = vld [vmem:[%s9 + $0x30c] sm:$0xf]
  %v2245 = vld [vmem:[%s9 + $0x310] sm:$0xff]
  %v2246 = vld [vmem:[%s9 + $0x318] sm:$0xff]
  %v2247 = vld [vmem:[%s9 + $0x320] sm:$0xff]
  %v2248 = vld [vmem:[%s9 + $0x328] sm:$0xf]
  %v2249 = vld [vmem:[%s9 + $0x32c] sm:$0xff]
  %v2250 = vld [vmem:[%s9 + $0x334] sm:$0xff]
  %v2251 = vld [vmem:[%s9 + $0x33c] sm:$0xff]
  %v2252 = vld [vmem:[%s9 + $0x344] sm:$0xf]
  %v2253 = vld [vmem:[%s9 + $0x348] sm:$0xff]
  %v2254 = vld [vmem:[%s9 + $0x350] sm:$0xff]
  %v2255 = vld [vmem:[%s9 + $0x358] sm:$0xff]
  %v2256 = vld [vmem:[%s9 + $0x360] sm:$0xf]
  %v2257 = vld [vmem:[%s9 + $0x364] sm:$0xff]
  %v2258 = vld [vmem:[%s9 + $0x36c] sm:$0xff]
  %v2259 = vld [vmem:[%s9 + $0x374] sm:$0xff]
  %v2260 = vld [vmem:[%s9 + $0x37c] sm:$0xf]
  %v2261 = vld [vmem:[%s9 + $0x380] sm:$0xff]
  %v2262 = vld [vmem:[%s9 + $0x388] sm:$0xff]
  %v2263 = vld [vmem:[%s9 + $0x390] sm:$0xff]
  %v2264 = vld [vmem:[%s9 + $0x398] sm:$0xf]
  %v2265 = vld [vmem:[%s9 + $0x39c] sm:$0xff]
  %v2266 = vld [vmem:[%s9 + $0x3a4] sm:$0xff]
  %v2267 = vld [vmem:[%s9 + $0x3ac] sm:$0xff]
  %v2268 = vld [vmem:[%s9 + $0x3b4] sm:$0xf]
  %v2269 = vld [vmem:[%s9 + $0x3b8] sm:$0xff]
  %v2270 = vld [vmem:[%s9 + $0x3c0] sm:$0xff]
  %v2271 = vld [vmem:[%s9 + $0x3c8] sm:$0xff]
  %v2272 = vld [vmem:[%s9 + $0x3d0] sm:$0xf]
  %v2273 = vld [vmem:[%s9 + $0x3d4] sm:$0xff]
  %v2274 = vld [vmem:[%s9 + $0x3dc] sm:$0xff]
  %v2275 = vld [vmem:[%s9 + $0x3e4] sm:$0xff]
  %v2276 = vld [vmem:[%s9 + $0x3ec] sm:$0xf]
  %v2277 = vld [vmem:[%s9 + $0x3f0] sm:$0xff]
  %v2278 = vld [vmem:[%s9 + $0x3f8] sm:$0xff]
  %v2279 = vld [vmem:[%s9 + $0x400] sm:$0xff]
  %v2280 = vld [vmem:[%s9 + $0x408] sm:$0xf]
  %v2281 = vld [vmem:[%s9 + $0x40c] sm:$0xff]
  %v2282 = vld [vmem:[%s9 + $0x414] sm:$0xff]
  %v2283 = vld [vmem:[%s9 + $0x41c] sm:$0xff]
  %v2284 = vld [vmem:[%s9 + $0x424] sm:$0xf]
  %v2285 = vld [vmem:[%s9 + $0x428] sm:$0xff]
  %v2286 = vld [vmem:[%s9 + $0x430] sm:$0xff]
  %v2287 = vld [vmem:[%s9 + $0x438] sm:$0xff]
  %v2288 = vld [vmem:[%s9 + $0x440] sm:$0xf]
  %v2289 = vld [vmem:[%s9 + $0x444] sm:$0xff]
  %v2290 = vld [vmem:[%s9 + $0x44c] sm:$0xff]
  %v2291 = vld [vmem:[%s9 + $0x454] sm:$0xff]
  %v2292 = vld [vmem:[%s9 + $0x45c] sm:$0xf]
  %v2293 = vld [vmem:[%s9 + $0x460] sm:$0xff]
  %v2294 = vld [vmem:[%s9 + $0x468] sm:$0xff]
  %v2295 = vld [vmem:[%s9 + $0x470] sm:$0xff]
  %v2296 = vld [vmem:[%s9 + $0x478] sm:$0xf]
  %v2297 = vld [vmem:[%s9 + $0x47c] sm:$0xff]
  %v2298 = vld [vmem:[%s9 + $0x484] sm:$0xff]
  %v2299 = vld [vmem:[%s9 + $0x48c] sm:$0xff]
  %v2300 = vld [vmem:[%s9 + $0x494] sm:$0xf]
  %v2301 = vld [vmem:[%s9 + $0x498] sm:$0xff]
  %v2302 = vld [vmem:[%s9 + $0x4a0] sm:$0xff]
  %v2303 = vld [vmem:[%s9 + $0x4a8] sm:$0xff]
  %v2304 = vld [vmem:[%s9 + $0x4b0] sm:$0xf]
  %v2305 = vld [vmem:[%s9 + $0x4b4] sm:$0xff]
  %v2306 = vld [vmem:[%s9 + $0x4bc] sm:$0xff]
  %v2307 = vld [vmem:[%s9 + $0x4c4] sm:$0xff]
  %v2308 = vld [vmem:[%s9 + $0x4cc] sm:$0xf]
  %v2309 = vld [vmem:[%s9 + $0x4d0] sm:$0xff]
  %v2310 = vld [vmem:[%s9 + $0x4d8] sm:$0xff]
  %v2311 = vld [vmem:[%s9 + $0x4e0] sm:$0xff]
  %v2312 = vld [vmem:[%s9 + $0x4e8] sm:$0xf]
  %v2313 = vld [vmem:[%s9 + $0x4ec] sm:$0xff]
  %v2314 = vld [vmem:[%s9 + $0x4f4] sm:$0xff]
  %v2315 = vld [vmem:[%s9 + $0x4fc] sm:$0xff]
  %v2316 = vld [vmem:[%s9 + $0x504] sm:$0xf]
  %v2317 = vld [vmem:[%s9 + $0x508] sm:$0xff]
  %v2318 = vld [vmem:[%s9 + $0x510] sm:$0xff]
  %v2319 = vld [vmem:[%s9 + $0x518] sm:$0xff]
  %v2320 = vld [vmem:[%s9 + $0x520] sm:$0xf]
  %v2321 = vld [vmem:[%s9 + $0x524] sm:$0xff]
  %v2322 = vld [vmem:[%s9 + $0x52c] sm:$0xff]
  %v2323 = vld [vmem:[%s9 + $0x534] sm:$0xff]
  %v2324 = vld [vmem:[%s9 + $0x53c] sm:$0xf]
  %v2325 = vld [vmem:[%s9 + $0x540] sm:$0xff]
  %v2326 = vld [vmem:[%s9 + $0x548] sm:$0xff]
  %v2327 = vld [vmem:[%s9 + $0x550] sm:$0xff]
  %v2328 = vld [vmem:[%s9 + $0x558] sm:$0xf]
  %v2329 = vld [vmem:[%s9 + $0x55c] sm:$0xff]
  %v2330 = vld [vmem:[%s9 + $0x564] sm:$0xff]
  %v2331 = vld [vmem:[%s9 + $0x56c] sm:$0xff]
  %v2332 = vld [vmem:[%s9 + $0x574] sm:$0xf]
  %v2333 = vld [vmem:[%s9 + $0x578] sm:$0xff]
  %v2334 = vld [vmem:[%s9 + $0x580] sm:$0xff]
  %v2335 = vld [vmem:[%s9 + $0x588] sm:$0xff]
  %v2336 = vld [vmem:[%s9 + $0x590] sm:$0xf]
  %v2337 = vld [vmem:[%s9 + $0x594] sm:$0xff]
  %v2338 = vld [vmem:[%s9 + $0x59c] sm:$0xff]
  %v2339 = vld [vmem:[%s9 + $0x5a4] sm:$0xff]
  %v2340 = vld [vmem:[%s9 + $0x5ac] sm:$0xf]
  %v2341 = vld [vmem:[%s9 + $0x5b0] sm:$0xff]
  %v2342 = vld [vmem:[%s9 + $0x5b8] sm:$0xff]
  %v2343 = vld [vmem:[%s9 + $0x5c0] sm:$0xff]
  %v2344 = vld [vmem:[%s9 + $0x5c8] sm:$0xf]
  %v2345 = vld [vmem:[%s9 + $0x5cc] sm:$0xff]
  %v2346 = vld [vmem:[%s9 + $0x5d4] sm:$0xff]
  %v2347 = vld [vmem:[%s9 + $0x5dc] sm:$0xff]
  %v2348 = vld [vmem:[%s9 + $0x5e4] sm:$0xf]
  %v2349 = vld [vmem:[%s9 + $0x5e8] sm:$0xff]
  %v2350 = vld [vmem:[%s9 + $0x5f0] sm:$0xff]
  %v2351 = vld [vmem:[%s9 + $0x5f8] sm:$0xff]
  %v2352 = vld [vmem:[%s9 + $0x600] sm:$0xf]
  %v2353 = vld [vmem:[%s9 + $0x604] sm:$0xff]
  %v2354 = vld [vmem:[%s9 + $0x60c] sm:$0xff]
  %v2355 = vld [vmem:[%s9 + $0x614] sm:$0xff]
  %v2356 = vld [vmem:[%s9 + $0x61c] sm:$0xf]
  %v2357 = vld [vmem:[%s9 + $0x620] sm:$0xff]
  %v2358 = vld [vmem:[%s9 + $0x628] sm:$0xff]
  %v2359 = vld [vmem:[%s9 + $0x630] sm:$0xff]
  %v2360 = vld [vmem:[%s9 + $0x638] sm:$0xf]
  %v2361 = vld [vmem:[%s9 + $0x63c] sm:$0xff]
  %v2362 = vld [vmem:[%s9 + $0x644] sm:$0xff]
  %v2363 = vld [vmem:[%s9 + $0x64c] sm:$0xff]
  %v2364 = vld [vmem:[%s9 + $0x654] sm:$0xf]
  %v2365 = vld [vmem:[%s9 + $0x658] sm:$0xff]
  %v2366 = vld [vmem:[%s9 + $0x660] sm:$0xff]
  %v2367 = vld [vmem:[%s9 + $0x668] sm:$0xff]
  %v2368 = vld [vmem:[%s9 + $0x670] sm:$0xf]
  %v2369 = vld [vmem:[%s9 + $0x674] sm:$0xff]
  %v2370 = vld [vmem:[%s9 + $0x67c] sm:$0xff]
  %v2371 = vld [vmem:[%s9 + $0x684] sm:$0xff]
  %v2372 = vld [vmem:[%s9 + $0x68c] sm:$0xf]
  %v2373 = vld [vmem:[%s9 + $0x690] sm:$0xff]
  %v2374 = vld [vmem:[%s9 + $0x698] sm:$0xff]
  %v2375 = vld [vmem:[%s9 + $0x6a0] sm:$0xff]
  %v2376 = vld [vmem:[%s9 + $0x6a8] sm:$0xf]
  %v2377 = vld [vmem:[%s9 + $0x6ac] sm:$0xff]
  %v2378 = vld [vmem:[%s9 + $0x6b4] sm:$0xff]
  %v2379 = vld [vmem:[%s9 + $0x6bc] sm:$0xff]
  %v2380 = vld [vmem:[%s9 + $0x6c4] sm:$0xf]
  %v2381 = vld [vmem:[%s9 + $0x6c8] sm:$0xff]
  %v2382 = vld [vmem:[%s9 + $0x6d0] sm:$0xff]
  %v2383 = vld [vmem:[%s9 + $0x6d8] sm:$0xff]
  %v2384 = vld [vmem:[%s9 + $0x6e0] sm:$0xf]
  %v2385 = vld [vmem:[%s9 + $0x6e4] sm:$0xff]
  %v2386 = vld [vmem:[%s9 + $0x6ec] sm:$0xff]
  %v2387 = vld [vmem:[%s9 + $0x6f4] sm:$0xff]
  %v2388 = vld [vmem:[%s9 + $0x6fc] sm:$0xf]
  %v2389 = vld [vmem:[%s10] sm:$0x7f]
  %v2391 = vlaneseq
  %v2392 = vshrl.u32 %v2391, 7
  %v2393 = vsub.s32 0, %v2392
  %v2394 = vrot.slane %v2389, %v2393
  %v2395 = vlaneseq
  %v2396 = vshrl.u32 %v2395, 7
  %v2397 = vsub.s32 1, %v2396
  %v2398 = vrot.slane %v2389, %v2397
  %v2399 = vlaneseq
  %v2400 = vshrl.u32 %v2399, 7
  %v2401 = vsub.s32 2, %v2400
  %v2402 = vrot.slane %v2389, %v2401
  %v2403 = vlaneseq
  %v2404 = vshrl.u32 %v2403, 7
  %v2405 = vsub.s32 3, %v2404
  %v2406 = vrot.slane %v2389, %v2405
  %v2407 = vlaneseq
  %v2408 = vshrl.u32 %v2407, 7
  %v2409 = vsub.s32 4, %v2408
  %v2410 = vrot.slane %v2389, %v2409
  %v2411 = vlaneseq
  %v2412 = vshrl.u32 %v2411, 7
  %v2413 = vsub.s32 5, %v2412
  %v2414 = vrot.slane %v2389, %v2413
  %v2415 = vlaneseq
  %v2416 = vshrl.u32 %v2415, 7
  %v2417 = vsub.s32 6, %v2416
  %v2418 = vrot.slane %v2389, %v2417
  %v2682 = vunpack.c.l.b16 %v2133
  %v2683 = vunpack.c.h.b16 %v2133
  %v2684 = vunpack.c.l.b16 %v2134
  %v2685 = vunpack.c.h.b16 %v2134
  %v2686 = vunpack.c.l.b16 %v2135
  %v2687 = vunpack.c.h.b16 %v2135
  %v2688 = vunpack.c.l.b16 %v2136
  %v2689 = vunpack.c.l.b16 %v2137
  %v2690 = vunpack.c.h.b16 %v2137
  %v2691 = vunpack.c.l.b16 %v2138
  %v2692 = vunpack.c.h.b16 %v2138
  %v2693 = vunpack.c.l.b16 %v2139
  %v2694 = vunpack.c.h.b16 %v2139
  %v2695 = vunpack.c.l.b16 %v2140
  %v2696 = vunpack.c.l.b16 %v2141
  %v2697 = vunpack.c.h.b16 %v2141
  %v2698 = vunpack.c.l.b16 %v2142
  %v2699 = vunpack.c.h.b16 %v2142
  %v2700 = vunpack.c.l.b16 %v2143
  %v2701 = vunpack.c.h.b16 %v2143
  %v2702 = vunpack.c.l.b16 %v2144
  %v2703 = vunpack.c.l.b16 %v2145
  %v2704 = vunpack.c.h.b16 %v2145
  %v2705 = vunpack.c.l.b16 %v2146
  %v2706 = vunpack.c.h.b16 %v2146
  %v2707 = vunpack.c.l.b16 %v2147
  %v2708 = vunpack.c.h.b16 %v2147
  %v2709 = vunpack.c.l.b16 %v2148
  %v2710 = vunpack.c.l.b16 %v2149
  %v2711 = vunpack.c.h.b16 %v2149
  %v2712 = vunpack.c.l.b16 %v2150
  %v2713 = vunpack.c.h.b16 %v2150
  %v2714 = vunpack.c.l.b16 %v2151
  %v2715 = vunpack.c.h.b16 %v2151
  %v2716 = vunpack.c.l.b16 %v2152
  %v2717 = vunpack.c.l.b16 %v2153
  %v2718 = vunpack.c.h.b16 %v2153
  %v2719 = vunpack.c.l.b16 %v2154
  %v2720 = vunpack.c.h.b16 %v2154
  %v2721 = vunpack.c.l.b16 %v2155
  %v2722 = vunpack.c.h.b16 %v2155
  %v2723 = vunpack.c.l.b16 %v2156
  %v2724 = vunpack.c.l.b16 %v2157
  %v2725 = vunpack.c.h.b16 %v2157
  %v2726 = vunpack.c.l.b16 %v2158
  %v2727 = vunpack.c.h.b16 %v2158
  %v2728 = vunpack.c.l.b16 %v2159
  %v2729 = vunpack.c.h.b16 %v2159
  %v2730 = vunpack.c.l.b16 %v2160
  %v2731 = vunpack.c.l.b16 %v2161
  %v2732 = vunpack.c.h.b16 %v2161
  %v2733 = vunpack.c.l.b16 %v2162
  %v2734 = vunpack.c.h.b16 %v2162
  %v2735 = vunpack.c.l.b16 %v2163
  %v2736 = vunpack.c.h.b16 %v2163
  %v2737 = vunpack.c.l.b16 %v2164
  %v2738 = vunpack.c.l.b16 %v2165
  %v2739 = vunpack.c.h.b16 %v2165
  %v2740 = vunpack.c.l.b16 %v2166
  %v2741 = vunpack.c.h.b16 %v2166
  %v2742 = vunpack.c.l.b16 %v2167
  %v2743 = vunpack.c.h.b16 %v2167
  %v2744 = vunpack.c.l.b16 %v2168
  %v2745 = vunpack.c.l.b16 %v2169
  %v2746 = vunpack.c.h.b16 %v2169
  %v2747 = vunpack.c.l.b16 %v2170
  %v2748 = vunpack.c.h.b16 %v2170
  %v2749 = vunpack.c.l.b16 %v2171
  %v2750 = vunpack.c.h.b16 %v2171
  %v2751 = vunpack.c.l.b16 %v2172
  %v2752 = vunpack.c.l.b16 %v2173
  %v2753 = vunpack.c.h.b16 %v2173
  %v2754 = vunpack.c.l.b16 %v2174
  %v2755 = vunpack.c.h.b16 %v2174
  %v2756 = vunpack.c.l.b16 %v2175
  %v2757 = vunpack.c.h.b16 %v2175
  %v2758 = vunpack.c.l.b16 %v2176
  %v2759 = vunpack.c.l.b16 %v2177
  %v2760 = vunpack.c.h.b16 %v2177
  %v2761 = vunpack.c.l.b16 %v2178
  %v2762 = vunpack.c.h.b16 %v2178
  %v2763 = vunpack.c.l.b16 %v2179
  %v2764 = vunpack.c.h.b16 %v2179
  %v2765 = vunpack.c.l.b16 %v2180
  %v2766 = vunpack.c.l.b16 %v2181
  %v2767 = vunpack.c.h.b16 %v2181
  %v2768 = vunpack.c.l.b16 %v2182
  %v2769 = vunpack.c.h.b16 %v2182
  %v2770 = vunpack.c.l.b16 %v2183
  %v2771 = vunpack.c.h.b16 %v2183
  %v2772 = vunpack.c.l.b16 %v2184
  %v2773 = vunpack.c.l.b16 %v2185
  %v2774 = vunpack.c.h.b16 %v2185
  %v2775 = vunpack.c.l.b16 %v2186
  %v2776 = vunpack.c.h.b16 %v2186
  %v2777 = vunpack.c.l.b16 %v2187
  %v2778 = vunpack.c.h.b16 %v2187
  %v2779 = vunpack.c.l.b16 %v2188
  %v2780 = vunpack.c.l.b16 %v2189
  %v2781 = vunpack.c.h.b16 %v2189
  %v2782 = vunpack.c.l.b16 %v2190
  %v2783 = vunpack.c.h.b16 %v2190
  %v2784 = vunpack.c.l.b16 %v2191
  %v2785 = vunpack.c.h.b16 %v2191
  %v2786 = vunpack.c.l.b16 %v2192
  %v2787 = vunpack.c.l.b16 %v2193
  %v2788 = vunpack.c.h.b16 %v2193
  %v2789 = vunpack.c.l.b16 %v2194
  %v2790 = vunpack.c.h.b16 %v2194
  %v2791 = vunpack.c.l.b16 %v2195
  %v2792 = vunpack.c.h.b16 %v2195
  %v2793 = vunpack.c.l.b16 %v2196
  %v2794 = vunpack.c.l.b16 %v2197
  %v2795 = vunpack.c.h.b16 %v2197
  %v2796 = vunpack.c.l.b16 %v2198
  %v2797 = vunpack.c.h.b16 %v2198
  %v2798 = vunpack.c.l.b16 %v2199
  %v2799 = vunpack.c.h.b16 %v2199
  %v2800 = vunpack.c.l.b16 %v2200
  %v2801 = vunpack.c.l.b16 %v2201
  %v2802 = vunpack.c.h.b16 %v2201
  %v2803 = vunpack.c.l.b16 %v2202
  %v2804 = vunpack.c.h.b16 %v2202
  %v2805 = vunpack.c.l.b16 %v2203
  %v2806 = vunpack.c.h.b16 %v2203
  %v2807 = vunpack.c.l.b16 %v2204
  %v2808 = vunpack.c.l.b16 %v2205
  %v2809 = vunpack.c.h.b16 %v2205
  %v2810 = vunpack.c.l.b16 %v2206
  %v2811 = vunpack.c.h.b16 %v2206
  %v2812 = vunpack.c.l.b16 %v2207
  %v2813 = vunpack.c.h.b16 %v2207
  %v2814 = vunpack.c.l.b16 %v2208
  %v2815 = vunpack.c.l.b16 %v2209
  %v2816 = vunpack.c.h.b16 %v2209
  %v2817 = vunpack.c.l.b16 %v2210
  %v2818 = vunpack.c.h.b16 %v2210
  %v2819 = vunpack.c.l.b16 %v2211
  %v2820 = vunpack.c.h.b16 %v2211
  %v2821 = vunpack.c.l.b16 %v2212
  %v2822 = vunpack.c.l.b16 %v2213
  %v2823 = vunpack.c.h.b16 %v2213
  %v2824 = vunpack.c.l.b16 %v2214
  %v2825 = vunpack.c.h.b16 %v2214
  %v2826 = vunpack.c.l.b16 %v2215
  %v2827 = vunpack.c.h.b16 %v2215
  %v2828 = vunpack.c.l.b16 %v2216
  %v2829 = vunpack.c.l.b16 %v2217
  %v2830 = vunpack.c.h.b16 %v2217
  %v2831 = vunpack.c.l.b16 %v2218
  %v2832 = vunpack.c.h.b16 %v2218
  %v2833 = vunpack.c.l.b16 %v2219
  %v2834 = vunpack.c.h.b16 %v2219
  %v2835 = vunpack.c.l.b16 %v2220
  %v2836 = vunpack.c.l.b16 %v2221
  %v2837 = vunpack.c.h.b16 %v2221
  %v2838 = vunpack.c.l.b16 %v2222
  %v2839 = vunpack.c.h.b16 %v2222
  %v2840 = vunpack.c.l.b16 %v2223
  %v2841 = vunpack.c.h.b16 %v2223
  %v2842 = vunpack.c.l.b16 %v2224
  %v2843 = vunpack.c.l.b16 %v2225
  %v2844 = vunpack.c.h.b16 %v2225
  %v2845 = vunpack.c.l.b16 %v2226
  %v2846 = vunpack.c.h.b16 %v2226
  %v2847 = vunpack.c.l.b16 %v2227
  %v2848 = vunpack.c.h.b16 %v2227
  %v2849 = vunpack.c.l.b16 %v2228
  %v2850 = vunpack.c.l.b16 %v2229
  %v2851 = vunpack.c.h.b16 %v2229
  %v2852 = vunpack.c.l.b16 %v2230
  %v2853 = vunpack.c.h.b16 %v2230
  %v2854 = vunpack.c.l.b16 %v2231
  %v2855 = vunpack.c.h.b16 %v2231
  %v2856 = vunpack.c.l.b16 %v2232
  %v2857 = vunpack.c.l.b16 %v2233
  %v2858 = vunpack.c.h.b16 %v2233
  %v2859 = vunpack.c.l.b16 %v2234
  %v2860 = vunpack.c.h.b16 %v2234
  %v2861 = vunpack.c.l.b16 %v2235
  %v2862 = vunpack.c.h.b16 %v2235
  %v2863 = vunpack.c.l.b16 %v2236
  %v2864 = vunpack.c.l.b16 %v2237
  %v2865 = vunpack.c.h.b16 %v2237
  %v2866 = vunpack.c.l.b16 %v2238
  %v2867 = vunpack.c.h.b16 %v2238
  %v2868 = vunpack.c.l.b16 %v2239
  %v2869 = vunpack.c.h.b16 %v2239
  %v2870 = vunpack.c.l.b16 %v2240
  %v2871 = vunpack.c.l.b16 %v2241
  %v2872 = vunpack.c.h.b16 %v2241
  %v2873 = vunpack.c.l.b16 %v2242
  %v2874 = vunpack.c.h.b16 %v2242
  %v2875 = vunpack.c.l.b16 %v2243
  %v2876 = vunpack.c.h.b16 %v2243
  %v2877 = vunpack.c.l.b16 %v2244
  %v2878 = vunpack.c.l.b16 %v2245
  %v2879 = vunpack.c.h.b16 %v2245
  %v2880 = vunpack.c.l.b16 %v2246
  %v2881 = vunpack.c.h.b16 %v2246
  %v2882 = vunpack.c.l.b16 %v2247
  %v2883 = vunpack.c.h.b16 %v2247
  %v2884 = vunpack.c.l.b16 %v2248
  %v2885 = vunpack.c.l.b16 %v2249
  %v2886 = vunpack.c.h.b16 %v2249
  %v2887 = vunpack.c.l.b16 %v2250
  %v2888 = vunpack.c.h.b16 %v2250
  %v2889 = vunpack.c.l.b16 %v2251
  %v2890 = vunpack.c.h.b16 %v2251
  %v2891 = vunpack.c.l.b16 %v2252
  %v2892 = vunpack.c.l.b16 %v2253
  %v2893 = vunpack.c.h.b16 %v2253
  %v2894 = vunpack.c.l.b16 %v2254
  %v2895 = vunpack.c.h.b16 %v2254
  %v2896 = vunpack.c.l.b16 %v2255
  %v2897 = vunpack.c.h.b16 %v2255
  %v2898 = vunpack.c.l.b16 %v2256
  %v2899 = vunpack.c.l.b16 %v2257
  %v2900 = vunpack.c.h.b16 %v2257
  %v2901 = vunpack.c.l.b16 %v2258
  %v2902 = vunpack.c.h.b16 %v2258
  %v2903 = vunpack.c.l.b16 %v2259
  %v2904 = vunpack.c.h.b16 %v2259
  %v2905 = vunpack.c.l.b16 %v2260
  %v2906 = vunpack.c.l.b16 %v2261
  %v2907 = vunpack.c.h.b16 %v2261
  %v2908 = vunpack.c.l.b16 %v2262
  %v2909 = vunpack.c.h.b16 %v2262
  %v2910 = vunpack.c.l.b16 %v2263
  %v2911 = vunpack.c.h.b16 %v2263
  %v2912 = vunpack.c.l.b16 %v2264
  %v2913 = vunpack.c.l.b16 %v2265
  %v2914 = vunpack.c.h.b16 %v2265
  %v2915 = vunpack.c.l.b16 %v2266
  %v2916 = vunpack.c.h.b16 %v2266
  %v2917 = vunpack.c.l.b16 %v2267
  %v2918 = vunpack.c.h.b16 %v2267
  %v2919 = vunpack.c.l.b16 %v2268
  %v2920 = vunpack.c.l.b16 %v2269
  %v2921 = vunpack.c.h.b16 %v2269
  %v2922 = vunpack.c.l.b16 %v2270
  %v2923 = vunpack.c.h.b16 %v2270
  %v2924 = vunpack.c.l.b16 %v2271
  %v2925 = vunpack.c.h.b16 %v2271
  %v2926 = vunpack.c.l.b16 %v2272
  %v2927 = vunpack.c.l.b16 %v2273
  %v2928 = vunpack.c.h.b16 %v2273
  %v2929 = vunpack.c.l.b16 %v2274
  %v2930 = vunpack.c.h.b16 %v2274
  %v2931 = vunpack.c.l.b16 %v2275
  %v2932 = vunpack.c.h.b16 %v2275
  %v2933 = vunpack.c.l.b16 %v2276
  %v2934 = vunpack.c.l.b16 %v2277
  %v2935 = vunpack.c.h.b16 %v2277
  %v2936 = vunpack.c.l.b16 %v2278
  %v2937 = vunpack.c.h.b16 %v2278
  %v2938 = vunpack.c.l.b16 %v2279
  %v2939 = vunpack.c.h.b16 %v2279
  %v2940 = vunpack.c.l.b16 %v2280
  %v2941 = vunpack.c.l.b16 %v2281
  %v2942 = vunpack.c.h.b16 %v2281
  %v2943 = vunpack.c.l.b16 %v2282
  %v2944 = vunpack.c.h.b16 %v2282
  %v2945 = vunpack.c.l.b16 %v2283
  %v2946 = vunpack.c.h.b16 %v2283
  %v2947 = vunpack.c.l.b16 %v2284
  %v2948 = vunpack.c.l.b16 %v2285
  %v2949 = vunpack.c.h.b16 %v2285
  %v2950 = vunpack.c.l.b16 %v2286
  %v2951 = vunpack.c.h.b16 %v2286
  %v2952 = vunpack.c.l.b16 %v2287
  %v2953 = vunpack.c.h.b16 %v2287
  %v2954 = vunpack.c.l.b16 %v2288
  %v2955 = vunpack.c.l.b16 %v2289
  %v2956 = vunpack.c.h.b16 %v2289
  %v2957 = vunpack.c.l.b16 %v2290
  %v2958 = vunpack.c.h.b16 %v2290
  %v2959 = vunpack.c.l.b16 %v2291
  %v2960 = vunpack.c.h.b16 %v2291
  %v2961 = vunpack.c.l.b16 %v2292
  %v2962 = vunpack.c.l.b16 %v2293
  %v2963 = vunpack.c.h.b16 %v2293
  %v2964 = vunpack.c.l.b16 %v2294
  %v2965 = vunpack.c.h.b16 %v2294
  %v2966 = vunpack.c.l.b16 %v2295
  %v2967 = vunpack.c.h.b16 %v2295
  %v2968 = vunpack.c.l.b16 %v2296
  %v2969 = vunpack.c.l.b16 %v2297
  %v2970 = vunpack.c.h.b16 %v2297
  %v2971 = vunpack.c.l.b16 %v2298
  %v2972 = vunpack.c.h.b16 %v2298
  %v2973 = vunpack.c.l.b16 %v2299
  %v2974 = vunpack.c.h.b16 %v2299
  %v2975 = vunpack.c.l.b16 %v2300
  %v2976 = vunpack.c.l.b16 %v2301
  %v2977 = vunpack.c.h.b16 %v2301
  %v2978 = vunpack.c.l.b16 %v2302
  %v2979 = vunpack.c.h.b16 %v2302
  %v2980 = vunpack.c.l.b16 %v2303
  %v2981 = vunpack.c.h.b16 %v2303
  %v2982 = vunpack.c.l.b16 %v2304
  %v2983 = vunpack.c.l.b16 %v2305
  %v2984 = vunpack.c.h.b16 %v2305
  %v2985 = vunpack.c.l.b16 %v2306
  %v2986 = vunpack.c.h.b16 %v2306
  %v2987 = vunpack.c.l.b16 %v2307
  %v2988 = vunpack.c.h.b16 %v2307
  %v2989 = vunpack.c.l.b16 %v2308
  %v2990 = vunpack.c.l.b16 %v2309
  %v2991 = vunpack.c.h.b16 %v2309
  %v2992 = vunpack.c.l.b16 %v2310
  %v2993 = vunpack.c.h.b16 %v2310
  %v2994 = vunpack.c.l.b16 %v2311
  %v2995 = vunpack.c.h.b16 %v2311
  %v2996 = vunpack.c.l.b16 %v2312
  %v2997 = vunpack.c.l.b16 %v2313
  %v2998 = vunpack.c.h.b16 %v2313
  %v2999 = vunpack.c.l.b16 %v2314
  %v3000 = vunpack.c.h.b16 %v2314
  %v3001 = vunpack.c.l.b16 %v2315
  %v3002 = vunpack.c.h.b16 %v2315
  %v3003 = vunpack.c.l.b16 %v2316
  %v3004 = vunpack.c.l.b16 %v2317
  %v3005 = vunpack.c.h.b16 %v2317
  %v3006 = vunpack.c.l.b16 %v2318
  %v3007 = vunpack.c.h.b16 %v2318
  %v3008 = vunpack.c.l.b16 %v2319
  %v3009 = vunpack.c.h.b16 %v2319
  %v3010 = vunpack.c.l.b16 %v2320
  %v3011 = vunpack.c.l.b16 %v2321
  %v3012 = vunpack.c.h.b16 %v2321
  %v3013 = vunpack.c.l.b16 %v2322
  %v3014 = vunpack.c.h.b16 %v2322
  %v3015 = vunpack.c.l.b16 %v2323
  %v3016 = vunpack.c.h.b16 %v2323
  %v3017 = vunpack.c.l.b16 %v2324
  %v3018 = vunpack.c.l.b16 %v2325
  %v3019 = vunpack.c.h.b16 %v2325
  %v3020 = vunpack.c.l.b16 %v2326
  %v3021 = vunpack.c.h.b16 %v2326
  %v3022 = vunpack.c.l.b16 %v2327
  %v3023 = vunpack.c.h.b16 %v2327
  %v3024 = vunpack.c.l.b16 %v2328
  %v3025 = vunpack.c.l.b16 %v2329
  %v3026 = vunpack.c.h.b16 %v2329
  %v3027 = vunpack.c.l.b16 %v2330
  %v3028 = vunpack.c.h.b16 %v2330
  %v3029 = vunpack.c.l.b16 %v2331
  %v3030 = vunpack.c.h.b16 %v2331
  %v3031 = vunpack.c.l.b16 %v2332
  %v3032 = vunpack.c.l.b16 %v2333
  %v3033 = vunpack.c.h.b16 %v2333
  %v3034 = vunpack.c.l.b16 %v2334
  %v3035 = vunpack.c.h.b16 %v2334
  %v3036 = vunpack.c.l.b16 %v2335
  %v3037 = vunpack.c.h.b16 %v2335
  %v3038 = vunpack.c.l.b16 %v2336
  %v3039 = vunpack.c.l.b16 %v2337
  %v3040 = vunpack.c.h.b16 %v2337
  %v3041 = vunpack.c.l.b16 %v2338
  %v3042 = vunpack.c.h.b16 %v2338
  %v3043 = vunpack.c.l.b16 %v2339
  %v3044 = vunpack.c.h.b16 %v2339
  %v3045 = vunpack.c.l.b16 %v2340
  %v3046 = vunpack.c.l.b16 %v2341
  %v3047 = vunpack.c.h.b16 %v2341
  %v3048 = vunpack.c.l.b16 %v2342
  %v3049 = vunpack.c.h.b16 %v2342
  %v3050 = vunpack.c.l.b16 %v2343
  %v3051 = vunpack.c.h.b16 %v2343
  %v3052 = vunpack.c.l.b16 %v2344
  %v3053 = vunpack.c.l.b16 %v2345
  %v3054 = vunpack.c.h.b16 %v2345
  %v3055 = vunpack.c.l.b16 %v2346
  %v3056 = vunpack.c.h.b16 %v2346
  %v3057 = vunpack.c.l.b16 %v2347
  %v3058 = vunpack.c.h.b16 %v2347
  %v3059 = vunpack.c.l.b16 %v2348
  %v3060 = vunpack.c.l.b16 %v2349
  %v3061 = vunpack.c.h.b16 %v2349
  %v3062 = vunpack.c.l.b16 %v2350
  %v3063 = vunpack.c.h.b16 %v2350
  %v3064 = vunpack.c.l.b16 %v2351
  %v3065 = vunpack.c.h.b16 %v2351
  %v3066 = vunpack.c.l.b16 %v2352
  %v3067 = vunpack.c.l.b16 %v2353
  %v3068 = vunpack.c.h.b16 %v2353
  %v3069 = vunpack.c.l.b16 %v2354
  %v3070 = vunpack.c.h.b16 %v2354
  %v3071 = vunpack.c.l.b16 %v2355
  %v3072 = vunpack.c.h.b16 %v2355
  %v3073 = vunpack.c.l.b16 %v2356
  %v3074 = vunpack.c.l.b16 %v2357
  %v3075 = vunpack.c.h.b16 %v2357
  %v3076 = vunpack.c.l.b16 %v2358
  %v3077 = vunpack.c.h.b16 %v2358
  %v3078 = vunpack.c.l.b16 %v2359
  %v3079 = vunpack.c.h.b16 %v2359
  %v3080 = vunpack.c.l.b16 %v2360
  %v3081 = vunpack.c.l.b16 %v2361
  %v3082 = vunpack.c.h.b16 %v2361
  %v3083 = vunpack.c.l.b16 %v2362
  %v3084 = vunpack.c.h.b16 %v2362
  %v3085 = vunpack.c.l.b16 %v2363
  %v3086 = vunpack.c.h.b16 %v2363
  %v3087 = vunpack.c.l.b16 %v2364
  %v3088 = vunpack.c.l.b16 %v2365
  %v3089 = vunpack.c.h.b16 %v2365
  %v3090 = vunpack.c.l.b16 %v2366
  %v3091 = vunpack.c.h.b16 %v2366
  %v3092 = vunpack.c.l.b16 %v2367
  %v3093 = vunpack.c.h.b16 %v2367
  %v3094 = vunpack.c.l.b16 %v2368
  %v3095 = vunpack.c.l.b16 %v2369
  %v3096 = vunpack.c.h.b16 %v2369
  %v3097 = vunpack.c.l.b16 %v2370
  %v3098 = vunpack.c.h.b16 %v2370
  %v3099 = vunpack.c.l.b16 %v2371
  %v3100 = vunpack.c.h.b16 %v2371
  %v3101 = vunpack.c.l.b16 %v2372
  %v3102 = vunpack.c.l.b16 %v2373
  %v3103 = vunpack.c.h.b16 %v2373
  %v3104 = vunpack.c.l.b16 %v2374
  %v3105 = vunpack.c.h.b16 %v2374
  %v3106 = vunpack.c.l.b16 %v2375
  %v3107 = vunpack.c.h.b16 %v2375
  %v3108 = vunpack.c.l.b16 %v2376
  %v3109 = vunpack.c.l.b16 %v2377
  %v3110 = vunpack.c.h.b16 %v2377
  %v3111 = vunpack.c.l.b16 %v2378
  %v3112 = vunpack.c.h.b16 %v2378
  %v3113 = vunpack.c.l.b16 %v2379
  %v3114 = vunpack.c.h.b16 %v2379
  %v3115 = vunpack.c.l.b16 %v2380
  %v3116 = vunpack.c.l.b16 %v2381
  %v3117 = vunpack.c.h.b16 %v2381
  %v3118 = vunpack.c.l.b16 %v2382
  %v3119 = vunpack.c.h.b16 %v2382
  %v3120 = vunpack.c.l.b16 %v2383
  %v3121 = vunpack.c.h.b16 %v2383
  %v3122 = vunpack.c.l.b16 %v2384
  %v3123 = vunpack.c.l.b16 %v2385
  %v3124 = vunpack.c.h.b16 %v2385
  %v3125 = vunpack.c.l.b16 %v2386
  %v3126 = vunpack.c.h.b16 %v2386
  %v3127 = vunpack.c.l.b16 %v2387
  %v3128 = vunpack.c.h.b16 %v2387
  %v3129 = vunpack.c.l.b16 %v2388
  %v3130 = vpack.c.b16 %v2689, %v2682
  %v3131 = vpack.c.b16 %v2690, %v2683
  %v3132 = vpack.c.b16 %v2691, %v2684
  %v3133 = vpack.c.b16 %v2692, %v2685
  %v3134 = vpack.c.b16 %v2693, %v2686
  %v3135 = vpack.c.b16 %v2694, %v2687
  %v3136 = vpack.c.b16 %v2695, %v2688
  %v3137 = vpack.c.b16 %v2703, %v2696
  %v3138 = vpack.c.b16 %v2704, %v2697
  %v3139 = vpack.c.b16 %v2705, %v2698
  %v3140 = vpack.c.b16 %v2706, %v2699
  %v3141 = vpack.c.b16 %v2707, %v2700
  %v3142 = vpack.c.b16 %v2708, %v2701
  %v3143 = vpack.c.b16 %v2709, %v2702
  %v3144 = vpack.c.b16 %v2717, %v2710
  %v3145 = vpack.c.b16 %v2718, %v2711
  %v3146 = vpack.c.b16 %v2719, %v2712
  %v3147 = vpack.c.b16 %v2720, %v2713
  %v3148 = vpack.c.b16 %v2721, %v2714
  %v3149 = vpack.c.b16 %v2722, %v2715
  %v3150 = vpack.c.b16 %v2723, %v2716
  %v3151 = vpack.c.b16 %v2731, %v2724
  %v3152 = vpack.c.b16 %v2732, %v2725
  %v3153 = vpack.c.b16 %v2733, %v2726
  %v3154 = vpack.c.b16 %v2734, %v2727
  %v3155 = vpack.c.b16 %v2735, %v2728
  %v3156 = vpack.c.b16 %v2736, %v2729
  %v3157 = vpack.c.b16 %v2737, %v2730
  %v3158 = vpack.c.b16 %v2745, %v2738
  %v3159 = vpack.c.b16 %v2746, %v2739
  %v3160 = vpack.c.b16 %v2747, %v2740
  %v3161 = vpack.c.b16 %v2748, %v2741
  %v3162 = vpack.c.b16 %v2749, %v2742
  %v3163 = vpack.c.b16 %v2750, %v2743
  %v3164 = vpack.c.b16 %v2751, %v2744
  %v3165 = vpack.c.b16 %v2759, %v2752
  %v3166 = vpack.c.b16 %v2760, %v2753
  %v3167 = vpack.c.b16 %v2761, %v2754
  %v3168 = vpack.c.b16 %v2762, %v2755
  %v3169 = vpack.c.b16 %v2763, %v2756
  %v3170 = vpack.c.b16 %v2764, %v2757
  %v3171 = vpack.c.b16 %v2765, %v2758
  %v3172 = vpack.c.b16 %v2773, %v2766
  %v3173 = vpack.c.b16 %v2774, %v2767
  %v3174 = vpack.c.b16 %v2775, %v2768
  %v3175 = vpack.c.b16 %v2776, %v2769
  %v3176 = vpack.c.b16 %v2777, %v2770
  %v3177 = vpack.c.b16 %v2778, %v2771
  %v3178 = vpack.c.b16 %v2779, %v2772
  %v3179 = vpack.c.b16 %v2787, %v2780
  %v3180 = vpack.c.b16 %v2788, %v2781
  %v3181 = vpack.c.b16 %v2789, %v2782
  %v3182 = vpack.c.b16 %v2790, %v2783
  %v3183 = vpack.c.b16 %v2791, %v2784
  %v3184 = vpack.c.b16 %v2792, %v2785
  %v3185 = vpack.c.b16 %v2793, %v2786
  %v3186 = vpack.c.b16 %v2801, %v2794
  %v3187 = vpack.c.b16 %v2802, %v2795
  %v3188 = vpack.c.b16 %v2803, %v2796
  %v3189 = vpack.c.b16 %v2804, %v2797
  %v3190 = vpack.c.b16 %v2805, %v2798
  %v3191 = vpack.c.b16 %v2806, %v2799
  %v3192 = vpack.c.b16 %v2807, %v2800
  %v3193 = vpack.c.b16 %v2815, %v2808
  %v3194 = vpack.c.b16 %v2816, %v2809
  %v3195 = vpack.c.b16 %v2817, %v2810
  %v3196 = vpack.c.b16 %v2818, %v2811
  %v3197 = vpack.c.b16 %v2819, %v2812
  %v3198 = vpack.c.b16 %v2820, %v2813
  %v3199 = vpack.c.b16 %v2821, %v2814
  %v3200 = vpack.c.b16 %v2829, %v2822
  %v3201 = vpack.c.b16 %v2830, %v2823
  %v3202 = vpack.c.b16 %v2831, %v2824
  %v3203 = vpack.c.b16 %v2832, %v2825
  %v3204 = vpack.c.b16 %v2833, %v2826
  %v3205 = vpack.c.b16 %v2834, %v2827
  %v3206 = vpack.c.b16 %v2835, %v2828
  %v3207 = vpack.c.b16 %v2843, %v2836
  %v3208 = vpack.c.b16 %v2844, %v2837
  %v3209 = vpack.c.b16 %v2845, %v2838
  %v3210 = vpack.c.b16 %v2846, %v2839
  %v3211 = vpack.c.b16 %v2847, %v2840
  %v3212 = vpack.c.b16 %v2848, %v2841
  %v3213 = vpack.c.b16 %v2849, %v2842
  %v3214 = vpack.c.b16 %v2857, %v2850
  %v3215 = vpack.c.b16 %v2858, %v2851
  %v3216 = vpack.c.b16 %v2859, %v2852
  %v3217 = vpack.c.b16 %v2860, %v2853
  %v3218 = vpack.c.b16 %v2861, %v2854
  %v3219 = vpack.c.b16 %v2862, %v2855
  %v3220 = vpack.c.b16 %v2863, %v2856
  %v3221 = vpack.c.b16 %v2871, %v2864
  %v3222 = vpack.c.b16 %v2872, %v2865
  %v3223 = vpack.c.b16 %v2873, %v2866
  %v3224 = vpack.c.b16 %v2874, %v2867
  %v3225 = vpack.c.b16 %v2875, %v2868
  %v3226 = vpack.c.b16 %v2876, %v2869
  %v3227 = vpack.c.b16 %v2877, %v2870
  %v3228 = vpack.c.b16 %v2885, %v2878
  %v3229 = vpack.c.b16 %v2886, %v2879
  %v3230 = vpack.c.b16 %v2887, %v2880
  %v3231 = vpack.c.b16 %v2888, %v2881
  %v3232 = vpack.c.b16 %v2889, %v2882
  %v3233 = vpack.c.b16 %v2890, %v2883
  %v3234 = vpack.c.b16 %v2891, %v2884
  %v3235 = vpack.c.b16 %v2899, %v2892
  %v3236 = vpack.c.b16 %v2900, %v2893
  %v3237 = vpack.c.b16 %v2901, %v2894
  %v3238 = vpack.c.b16 %v2902, %v2895
  %v3239 = vpack.c.b16 %v2903, %v2896
  %v3240 = vpack.c.b16 %v2904, %v2897
  %v3241 = vpack.c.b16 %v2905, %v2898
  %v3242 = vpack.c.b16 %v2913, %v2906
  %v3243 = vpack.c.b16 %v2914, %v2907
  %v3244 = vpack.c.b16 %v2915, %v2908
  %v3245 = vpack.c.b16 %v2916, %v2909
  %v3246 = vpack.c.b16 %v2917, %v2910
  %v3247 = vpack.c.b16 %v2918, %v2911
  %v3248 = vpack.c.b16 %v2919, %v2912
  %v3249 = vpack.c.b16 %v2927, %v2920
  %v3250 = vpack.c.b16 %v2928, %v2921
  %v3251 = vpack.c.b16 %v2929, %v2922
  %v3252 = vpack.c.b16 %v2930, %v2923
  %v3253 = vpack.c.b16 %v2931, %v2924
  %v3254 = vpack.c.b16 %v2932, %v2925
  %v3255 = vpack.c.b16 %v2933, %v2926
  %v3256 = vpack.c.b16 %v2941, %v2934
  %v3257 = vpack.c.b16 %v2942, %v2935
  %v3258 = vpack.c.b16 %v2943, %v2936
  %v3259 = vpack.c.b16 %v2944, %v2937
  %v3260 = vpack.c.b16 %v2945, %v2938
  %v3261 = vpack.c.b16 %v2946, %v2939
  %v3262 = vpack.c.b16 %v2947, %v2940
  %v3263 = vpack.c.b16 %v2955, %v2948
  %v3264 = vpack.c.b16 %v2956, %v2949
  %v3265 = vpack.c.b16 %v2957, %v2950
  %v3266 = vpack.c.b16 %v2958, %v2951
  %v3267 = vpack.c.b16 %v2959, %v2952
  %v3268 = vpack.c.b16 %v2960, %v2953
  %v3269 = vpack.c.b16 %v2961, %v2954
  %v3270 = vpack.c.b16 %v2969, %v2962
  %v3271 = vpack.c.b16 %v2970, %v2963
  %v3272 = vpack.c.b16 %v2971, %v2964
  %v3273 = vpack.c.b16 %v2972, %v2965
  %v3274 = vpack.c.b16 %v2973, %v2966
  %v3275 = vpack.c.b16 %v2974, %v2967
  %v3276 = vpack.c.b16 %v2975, %v2968
  %v3277 = vpack.c.b16 %v2983, %v2976
  %v3278 = vpack.c.b16 %v2984, %v2977
  %v3279 = vpack.c.b16 %v2985, %v2978
  %v3280 = vpack.c.b16 %v2986, %v2979
  %v3281 = vpack.c.b16 %v2987, %v2980
  %v3282 = vpack.c.b16 %v2988, %v2981
  %v3283 = vpack.c.b16 %v2989, %v2982
  %v3284 = vpack.c.b16 %v2997, %v2990
  %v3285 = vpack.c.b16 %v2998, %v2991
  %v3286 = vpack.c.b16 %v2999, %v2992
  %v3287 = vpack.c.b16 %v3000, %v2993
  %v3288 = vpack.c.b16 %v3001, %v2994
  %v3289 = vpack.c.b16 %v3002, %v2995
  %v3290 = vpack.c.b16 %v3003, %v2996
  %v3291 = vpack.c.b16 %v3011, %v3004
  %v3292 = vpack.c.b16 %v3012, %v3005
  %v3293 = vpack.c.b16 %v3013, %v3006
  %v3294 = vpack.c.b16 %v3014, %v3007
  %v3295 = vpack.c.b16 %v3015, %v3008
  %v3296 = vpack.c.b16 %v3016, %v3009
  %v3297 = vpack.c.b16 %v3017, %v3010
  %v3298 = vpack.c.b16 %v3025, %v3018
  %v3299 = vpack.c.b16 %v3026, %v3019
  %v3300 = vpack.c.b16 %v3027, %v3020
  %v3301 = vpack.c.b16 %v3028, %v3021
  %v3302 = vpack.c.b16 %v3029, %v3022
  %v3303 = vpack.c.b16 %v3030, %v3023
  %v3304 = vpack.c.b16 %v3031, %v3024
  %v3305 = vpack.c.b16 %v3039, %v3032
  %v3306 = vpack.c.b16 %v3040, %v3033
  %v3307 = vpack.c.b16 %v3041, %v3034
  %v3308 = vpack.c.b16 %v3042, %v3035
  %v3309 = vpack.c.b16 %v3043, %v3036
  %v3310 = vpack.c.b16 %v3044, %v3037
  %v3311 = vpack.c.b16 %v3045, %v3038
  %v3312 = vpack.c.b16 %v3053, %v3046
  %v3313 = vpack.c.b16 %v3054, %v3047
  %v3314 = vpack.c.b16 %v3055, %v3048
  %v3315 = vpack.c.b16 %v3056, %v3049
  %v3316 = vpack.c.b16 %v3057, %v3050
  %v3317 = vpack.c.b16 %v3058, %v3051
  %v3318 = vpack.c.b16 %v3059, %v3052
  %v3319 = vpack.c.b16 %v3067, %v3060
  %v3320 = vpack.c.b16 %v3068, %v3061
  %v3321 = vpack.c.b16 %v3069, %v3062
  %v3322 = vpack.c.b16 %v3070, %v3063
  %v3323 = vpack.c.b16 %v3071, %v3064
  %v3324 = vpack.c.b16 %v3072, %v3065
  %v3325 = vpack.c.b16 %v3073, %v3066
  %v3326 = vpack.c.b16 %v3081, %v3074
  %v3327 = vpack.c.b16 %v3082, %v3075
  %v3328 = vpack.c.b16 %v3083, %v3076
  %v3329 = vpack.c.b16 %v3084, %v3077
  %v3330 = vpack.c.b16 %v3085, %v3078
  %v3331 = vpack.c.b16 %v3086, %v3079
  %v3332 = vpack.c.b16 %v3087, %v3080
  %v3333 = vpack.c.b16 %v3095, %v3088
  %v3334 = vpack.c.b16 %v3096, %v3089
  %v3335 = vpack.c.b16 %v3097, %v3090
  %v3336 = vpack.c.b16 %v3098, %v3091
  %v3337 = vpack.c.b16 %v3099, %v3092
  %v3338 = vpack.c.b16 %v3100, %v3093
  %v3339 = vpack.c.b16 %v3101, %v3094
  %v3340 = vpack.c.b16 %v3109, %v3102
  %v3341 = vpack.c.b16 %v3110, %v3103
  %v3342 = vpack.c.b16 %v3111, %v3104
  %v3343 = vpack.c.b16 %v3112, %v3105
  %v3344 = vpack.c.b16 %v3113, %v3106
  %v3345 = vpack.c.b16 %v3114, %v3107
  %v3346 = vpack.c.b16 %v3115, %v3108
  %v3347 = vpack.c.b16 %v3123, %v3116
  %v3348 = vpack.c.b16 %v3124, %v3117
  %v3349 = vpack.c.b16 %v3125, %v3118
  %v3350 = vpack.c.b16 %v3126, %v3119
  %v3351 = vpack.c.b16 %v3127, %v3120
  %v3352 = vpack.c.b16 %v3128, %v3121
  %v3353 = vpack.c.b16 %v3129, %v3122
  %3578 = vmatprep.subr.bf16.mxu0 %v3131
  %3579 = vmatpush1.bf16.msra.mxu0 %v3130
  %3580 = vmatprep.subr.bf16.mxu0 %v3138
  %3581 = vmatpush1.bf16.msra.mxu0 %v3137
  %3582 = vmatprep.subr.bf16.mxu0 %v3145
  %3583 = vmatpush1.bf16.msra.mxu0 %v3144
  %3584 = vmatprep.subr.bf16.mxu0 %v3152
  %3585 = vmatpush1.bf16.msra.mxu0 %v3151
  %3586 = vmatprep.subr.bf16.mxu0 %v3159
  %3587 = vmatpush1.bf16.msra.mxu0 %v3158
  %3588 = vmatprep.subr.bf16.mxu0 %v3166
  %3589 = vmatpush1.bf16.msra.mxu0 %v3165
  %3590 = vmatprep.subr.bf16.mxu0 %v3173
  %3591 = vmatpush1.bf16.msra.mxu0 %v3172
  %3592 = vmatprep.subr.bf16.mxu0 %v3180
  %3593 = vmatpush1.bf16.msra.mxu0 %v3179
  %3594 = vmatprep.subr.bf16.mxu0 %v3187
  %3595 = vmatpush1.bf16.msra.mxu0 %v3186
  %3596 = vmatprep.subr.bf16.mxu0 %v3194
  %3597 = vmatpush1.bf16.msra.mxu0 %v3193
  %3598 = vmatprep.subr.bf16.mxu0 %v3201
  %3599 = vmatpush1.bf16.msra.mxu0 %v3200
  %3600 = vmatprep.subr.bf16.mxu0 %v3208
  %3601 = vmatpush1.bf16.msra.mxu0 %v3207
  %3602 = vmatprep.subr.bf16.mxu0 %v3215
  %3603 = vmatpush1.bf16.msra.mxu0 %v3214
  %3604 = vmatprep.subr.bf16.mxu0 %v3222
  %3605 = vmatpush1.bf16.msra.mxu0 %v3221
  %3606 = vmatprep.subr.bf16.mxu0 %v3229
  %3607 = vmatpush1.bf16.msra.mxu0 %v3228
  %3608 = vmatprep.subr.bf16.mxu0 %v3236
  %3609 = vmatpush1.bf16.msra.mxu0 %v3235
  %3610 = vmatprep.mubr.bf16.mxu0 %v2130
  %3611 = vmatmul.mubr.bf16.gmra.mrb[0].mxu0 %v2129
  %v3612 = vpop.f32.mrb[0].mxu0
  %v3613 = vadd.f32 %v2394, %v3612
  %v3614 = vpop.f32.mrb[0].mxu0
  %v3615 = vadd.f32 %v2398, %v3614
  %v3616 = vpop.f32.mrb[0].mxu0
  %v3617 = vpop.f32.mrb[0].mxu0
  %3618 = vdwg.mxu0
  %3619 = vmatprep.subr.bf16.mxu0 %v3243
  %3620 = vmatpush1.bf16.msra.mxu0 %v3242
  %3621 = vmatprep.subr.bf16.mxu0 %v3250
  %3622 = vmatpush1.bf16.msra.mxu0 %v3249
  %3623 = vmatprep.subr.bf16.mxu0 %v3257
  %3624 = vmatpush1.bf16.msra.mxu0 %v3256
  %3625 = vmatprep.subr.bf16.mxu0 %v3264
  %3626 = vmatpush1.bf16.msra.mxu0 %v3263
  %3627 = vmatprep.subr.bf16.mxu0 %v3271
  %3628 = vmatpush1.bf16.msra.mxu0 %v3270
  %3629 = vmatprep.subr.bf16.mxu0 %v3278
  %3630 = vmatpush1.bf16.msra.mxu0 %v3277
  %3631 = vmatprep.subr.bf16.mxu0 %v3285
  %3632 = vmatpush1.bf16.msra.mxu0 %v3284
  %3633 = vmatprep.subr.bf16.mxu0 %v3292
  %3634 = vmatpush1.bf16.msra.mxu0 %v3291
  %3635 = vmatprep.subr.bf16.mxu0 %v3299
  %3636 = vmatpush1.bf16.msra.mxu0 %v3298
  %3637 = vmatprep.subr.bf16.mxu0 %v3306
  %3638 = vmatpush1.bf16.msra.mxu0 %v3305
  %3639 = vmatprep.subr.bf16.mxu0 %v3313
  %3640 = vmatpush1.bf16.msra.mxu0 %v3312
  %3641 = vmatprep.subr.bf16.mxu0 %v3320
  %3642 = vmatpush1.bf16.msra.mxu0 %v3319
  %3643 = vmatprep.subr.bf16.mxu0 %v3327
  %3644 = vmatpush1.bf16.msra.mxu0 %v3326
  %3645 = vmatprep.subr.bf16.mxu0 %v3334
  %3646 = vmatpush1.bf16.msra.mxu0 %v3333
  %3647 = vmatprep.subr.bf16.mxu0 %v3341
  %3648 = vmatpush1.bf16.msra.mxu0 %v3340
  %3649 = vmatprep.subr.bf16.mxu0 %v3348
  %3650 = vmatpush1.bf16.msra.mxu0 %v3347
  %3651 = vmatprep.mubr.bf16.mxu0 %v2132
  %3652 = vmatmul.mubr.bf16.gmra.mrb[0].mxu0 %v2131
  %v3653 = vpop.f32.mrb[0].mxu0
  %v3654 = vadd.f32 %v3613, %v3653
  %v3655 = vpop.f32.mrb[0].mxu0
  %v3656 = vadd.f32 %v3615, %v3655
  %v3657 = vpop.f32.mrb[0].mxu0
  %v3658 = vpop.f32.mrb[0].mxu0
  %3659 = vdwg.mxu0
  %3660 = vmatprep.subr.bf16.mxu0 %v3133
  %3661 = vmatpush1.bf16.msra.mxu0 %v3132
  %3662 = vmatprep.subr.bf16.mxu0 %v3140
  %3663 = vmatpush1.bf16.msra.mxu0 %v3139
  %3664 = vmatprep.subr.bf16.mxu0 %v3147
  %3665 = vmatpush1.bf16.msra.mxu0 %v3146
  %3666 = vmatprep.subr.bf16.mxu0 %v3154
  %3667 = vmatpush1.bf16.msra.mxu0 %v3153
  %3668 = vmatprep.subr.bf16.mxu0 %v3161
  %3669 = vmatpush1.bf16.msra.mxu0 %v3160
  %3670 = vmatprep.subr.bf16.mxu0 %v3168
  %3671 = vmatpush1.bf16.msra.mxu0 %v3167
  %3672 = vmatprep.subr.bf16.mxu0 %v3175
  %3673 = vmatpush1.bf16.msra.mxu0 %v3174
  %3674 = vmatprep.subr.bf16.mxu0 %v3182
  %3675 = vmatpush1.bf16.msra.mxu0 %v3181
  %3676 = vmatprep.subr.bf16.mxu0 %v3189
  %3677 = vmatpush1.bf16.msra.mxu0 %v3188
  %3678 = vmatprep.subr.bf16.mxu0 %v3196
  %3679 = vmatpush1.bf16.msra.mxu0 %v3195
  %3680 = vmatprep.subr.bf16.mxu0 %v3203
  %3681 = vmatpush1.bf16.msra.mxu0 %v3202
  %3682 = vmatprep.subr.bf16.mxu0 %v3210
  %3683 = vmatpush1.bf16.msra.mxu0 %v3209
  %3684 = vmatprep.subr.bf16.mxu0 %v3217
  %3685 = vmatpush1.bf16.msra.mxu0 %v3216
  %3686 = vmatprep.subr.bf16.mxu0 %v3224
  %3687 = vmatpush1.bf16.msra.mxu0 %v3223
  %3688 = vmatprep.subr.bf16.mxu0 %v3231
  %3689 = vmatpush1.bf16.msra.mxu0 %v3230
  %3690 = vmatprep.subr.bf16.mxu0 %v3238
  %3691 = vmatpush1.bf16.msra.mxu0 %v3237
  %3692 = vmatprep.mubr.bf16.mxu0 %v2130
  %3693 = vmatmul.mubr.bf16.gmra.mrb[0].mxu0 %v2129
  %v3694 = vpop.f32.mrb[0].mxu0
  %v3695 = vadd.f32 %v2402, %v3694
  %v3696 = vpop.f32.mrb[0].mxu0
  %v3697 = vadd.f32 %v2406, %v3696
  %v3698 = vpop.f32.mrb[0].mxu0
  %v3699 = vpop.f32.mrb[0].mxu0
  %3700 = vdwg.mxu0
  %3701 = vmatprep.subr.bf16.mxu0 %v3245
  %3702 = vmatpush1.bf16.msra.mxu0 %v3244
  %3703 = vmatprep.subr.bf16.mxu0 %v3252
  %3704 = vmatpush1.bf16.msra.mxu0 %v3251
  %3705 = vmatprep.subr.bf16.mxu0 %v3259
  %3706 = vmatpush1.bf16.msra.mxu0 %v3258
  %3707 = vmatprep.subr.bf16.mxu0 %v3266
  %3708 = vmatpush1.bf16.msra.mxu0 %v3265
  %3709 = vmatprep.subr.bf16.mxu0 %v3273
  %3710 = vmatpush1.bf16.msra.mxu0 %v3272
  %3711 = vmatprep.subr.bf16.mxu0 %v3280
  %3712 = vmatpush1.bf16.msra.mxu0 %v3279
  %3713 = vmatprep.subr.bf16.mxu0 %v3287
  %3714 = vmatpush1.bf16.msra.mxu0 %v3286
  %3715 = vmatprep.subr.bf16.mxu0 %v3294
  %3716 = vmatpush1.bf16.msra.mxu0 %v3293
  %3717 = vmatprep.subr.bf16.mxu0 %v3301
  %3718 = vmatpush1.bf16.msra.mxu0 %v3300
  %3719 = vmatprep.subr.bf16.mxu0 %v3308
  %3720 = vmatpush1.bf16.msra.mxu0 %v3307
  %3721 = vmatprep.subr.bf16.mxu0 %v3315
  %3722 = vmatpush1.bf16.msra.mxu0 %v3314
  %3723 = vmatprep.subr.bf16.mxu0 %v3322
  %3724 = vmatpush1.bf16.msra.mxu0 %v3321
  %3725 = vmatprep.subr.bf16.mxu0 %v3329
  %3726 = vmatpush1.bf16.msra.mxu0 %v3328
  %3727 = vmatprep.subr.bf16.mxu0 %v3336
  %3728 = vmatpush1.bf16.msra.mxu0 %v3335
  %3729 = vmatprep.subr.bf16.mxu0 %v3343
  %3730 = vmatpush1.bf16.msra.mxu0 %v3342
  %3731 = vmatprep.subr.bf16.mxu0 %v3350
  %3732 = vmatpush1.bf16.msra.mxu0 %v3349
  %3733 = vmatprep.mubr.bf16.mxu0 %v2132
  %3734 = vmatmul.mubr.bf16.gmra.mrb[0].mxu0 %v2131
  %v3735 = vpop.f32.mrb[0].mxu0
  %v3736 = vadd.f32 %v3695, %v3735
  %v3737 = vpop.f32.mrb[0].mxu0
  %v3738 = vadd.f32 %v3697, %v3737
  %v3739 = vpop.f32.mrb[0].mxu0
  %v3740 = vpop.f32.mrb[0].mxu0
  %3741 = vdwg.mxu0
  %3742 = vmatprep.subr.bf16.mxu0 %v3135
  %3743 = vmatpush1.bf16.msra.mxu0 %v3134
  %3744 = vmatprep.subr.bf16.mxu0 %v3142
  %3745 = vmatpush1.bf16.msra.mxu0 %v3141
  %3746 = vmatprep.subr.bf16.mxu0 %v3149
  %3747 = vmatpush1.bf16.msra.mxu0 %v3148
  %3748 = vmatprep.subr.bf16.mxu0 %v3156
  %3749 = vmatpush1.bf16.msra.mxu0 %v3155
  %3750 = vmatprep.subr.bf16.mxu0 %v3163
  %3751 = vmatpush1.bf16.msra.mxu0 %v3162
  %3752 = vmatprep.subr.bf16.mxu0 %v3170
  %3753 = vmatpush1.bf16.msra.mxu0 %v3169
  %3754 = vmatprep.subr.bf16.mxu0 %v3177
  %3755 = vmatpush1.bf16.msra.mxu0 %v3176
  %3756 = vmatprep.subr.bf16.mxu0 %v3184
  %3757 = vmatpush1.bf16.msra.mxu0 %v3183
  %3758 = vmatprep.subr.bf16.mxu0 %v3191
  %3759 = vmatpush1.bf16.msra.mxu0 %v3190
  %3760 = vmatprep.subr.bf16.mxu0 %v3198
  %3761 = vmatpush1.bf16.msra.mxu0 %v3197
  %3762 = vmatprep.subr.bf16.mxu0 %v3205
  %3763 = vmatpush1.bf16.msra.mxu0 %v3204
  %3764 = vmatprep.subr.bf16.mxu0 %v3212
  %3765 = vmatpush1.bf16.msra.mxu0 %v3211
  %3766 = vmatprep.subr.bf16.mxu0 %v3219
  %3767 = vmatpush1.bf16.msra.mxu0 %v3218
  %3768 = vmatprep.subr.bf16.mxu0 %v3226
  %3769 = vmatpush1.bf16.msra.mxu0 %v3225
  %3770 = vmatprep.subr.bf16.mxu0 %v3233
  %3771 = vmatpush1.bf16.msra.mxu0 %v3232
  %3772 = vmatprep.subr.bf16.mxu0 %v3240
  %3773 = vmatpush1.bf16.msra.mxu0 %v3239
  %3774 = vmatprep.mubr.bf16.mxu0 %v2130
  %3775 = vmatmul.mubr.bf16.gmra.mrb[0].mxu0 %v2129
  %v3776 = vpop.f32.mrb[0].mxu0
  %v3777 = vadd.f32 %v2410, %v3776
  %v3778 = vpop.f32.mrb[0].mxu0
  %v3779 = vadd.f32 %v2414, %v3778
  %v3780 = vpop.f32.mrb[0].mxu0
  %v3781 = vpop.f32.mrb[0].mxu0
  %3782 = vdwg.mxu0
  %3783 = vmatprep.subr.bf16.mxu0 %v3247
  %3784 = vmatpush1.bf16.msra.mxu0 %v3246
  %3785 = vmatprep.subr.bf16.mxu0 %v3254
  %3786 = vmatpush1.bf16.msra.mxu0 %v3253
  %3787 = vmatprep.subr.bf16.mxu0 %v3261
  %3788 = vmatpush1.bf16.msra.mxu0 %v3260
  %3789 = vmatprep.subr.bf16.mxu0 %v3268
  %3790 = vmatpush1.bf16.msra.mxu0 %v3267
  %3791 = vmatprep.subr.bf16.mxu0 %v3275
  %3792 = vmatpush1.bf16.msra.mxu0 %v3274
  %3793 = vmatprep.subr.bf16.mxu0 %v3282
  %3794 = vmatpush1.bf16.msra.mxu0 %v3281
  %3795 = vmatprep.subr.bf16.mxu0 %v3289
  %3796 = vmatpush1.bf16.msra.mxu0 %v3288
  %3797 = vmatprep.subr.bf16.mxu0 %v3296
  %3798 = vmatpush1.bf16.msra.mxu0 %v3295
  %3799 = vmatprep.subr.bf16.mxu0 %v3303
  %3800 = vmatpush1.bf16.msra.mxu0 %v3302
  %3801 = vmatprep.subr.bf16.mxu0 %v3310
  %3802 = vmatpush1.bf16.msra.mxu0 %v3309
  %3803 = vmatprep.subr.bf16.mxu0 %v3317
  %3804 = vmatpush1.bf16.msra.mxu0 %v3316
  %3805 = vmatprep.subr.bf16.mxu0 %v3324
  %3806 = vmatpush1.bf16.msra.mxu0 %v3323
  %3807 = vmatprep.subr.bf16.mxu0 %v3331
  %3808 = vmatpush1.bf16.msra.mxu0 %v3330
  %3809 = vmatprep.subr.bf16.mxu0 %v3338
  %3810 = vmatpush1.bf16.msra.mxu0 %v3337
  %3811 = vmatprep.subr.bf16.mxu0 %v3345
  %3812 = vmatpush1.bf16.msra.mxu0 %v3344
  %3813 = vmatprep.subr.bf16.mxu0 %v3352
  %3814 = vmatpush1.bf16.msra.mxu0 %v3351
  %3815 = vmatprep.mubr.bf16.mxu0 %v2132
  %3816 = vmatmul.mubr.bf16.gmra.mrb[0].mxu0 %v2131
  %v3817 = vpop.f32.mrb[0].mxu0
  %v3818 = vadd.f32 %v3777, %v3817
  %v3819 = vpop.f32.mrb[0].mxu0
  %v3820 = vadd.f32 %v3779, %v3819
  %v3821 = vpop.f32.mrb[0].mxu0
  %v3822 = vpop.f32.mrb[0].mxu0
  %3823 = vdwg.mxu0
  %3824 = vmatprep.subr.bf16.mxu0 0
  %3825 = vmatpush1.bf16.msra.mxu0 %v3136
  %3826 = vmatprep.subr.bf16.mxu0 0
  %3827 = vmatpush1.bf16.msra.mxu0 %v3143
  %3828 = vmatprep.subr.bf16.mxu0 0
  %3829 = vmatpush1.bf16.msra.mxu0 %v3150
  %3830 = vmatprep.subr.bf16.mxu0 0
  %3831 = vmatpush1.bf16.msra.mxu0 %v3157
  %3832 = vmatprep.subr.bf16.mxu0 0
  %3833 = vmatpush1.bf16.msra.mxu0 %v3164
  %3834 = vmatprep.subr.bf16.mxu0 0
  %3835 = vmatpush1.bf16.msra.mxu0 %v3171
  %3836 = vmatprep.subr.bf16.mxu0 0
  %3837 = vmatpush1.bf16.msra.mxu0 %v3178
  %3838 = vmatprep.subr.bf16.mxu0 0
  %3839 = vmatpush1.bf16.msra.mxu0 %v3185
  %3840 = vmatprep.subr.bf16.mxu0 0
  %3841 = vmatpush1.bf16.msra.mxu0 %v3192
  %3842 = vmatprep.subr.bf16.mxu0 0
  %3843 = vmatpush1.bf16.msra.mxu0 %v3199
  %3844 = vmatprep.subr.bf16.mxu0 0
  %3845 = vmatpush1.bf16.msra.mxu0 %v3206
  %3846 = vmatprep.subr.bf16.mxu0 0
  %3847 = vmatpush1.bf16.msra.mxu0 %v3213
  %3848 = vmatprep.subr.bf16.mxu0 0
  %3849 = vmatpush1.bf16.msra.mxu0 %v3220
  %3850 = vmatprep.subr.bf16.mxu0 0
  %3851 = vmatpush1.bf16.msra.mxu0 %v3227
  %3852 = vmatprep.subr.bf16.mxu0 0
  %3853 = vmatpush1.bf16.msra.mxu0 %v3234
  %3854 = vmatprep.subr.bf16.mxu0 0
  %3855 = vmatpush1.bf16.msra.mxu0 %v3241
  %3856 = vmatprep.mubr.bf16.mxu0 %v2130
  %3857 = vmatmul.mubr.bf16.gmra.mrb[0].mxu0 %v2129
  %v3858 = vpop.f32.mrb[0].mxu0
  %v3859 = vadd.f32 %v2418, %v3858
  %v3860 = vpop.f32.mrb[0].mxu0
  %v3861 = vpop.f32.mrb[0].mxu0
  %v3862 = vpop.f32.mrb[0].mxu0
  %3863 = vdwg.mxu0
  %3864 = vmatprep.subr.bf16.mxu0 0
  %3865 = vmatpush1.bf16.msra.mxu0 %v3248
  %3866 = vmatprep.subr.bf16.mxu0 0
  %3867 = vmatpush1.bf16.msra.mxu0 %v3255
  %3868 = vmatprep.subr.bf16.mxu0 0
  %3869 = vmatpush1.bf16.msra.mxu0 %v3262
  %3870 = vmatprep.subr.bf16.mxu0 0
  %3871 = vmatpush1.bf16.msra.mxu0 %v3269
  %3872 = vmatprep.subr.bf16.mxu0 0
  %3873 = vmatpush1.bf16.msra.mxu0 %v3276
  %3874 = vmatprep.subr.bf16.mxu0 0
  %3875 = vmatpush1.bf16.msra.mxu0 %v3283
  %3876 = vmatprep.subr.bf16.mxu0 0
  %3877 = vmatpush1.bf16.msra.mxu0 %v3290
  %3878 = vmatprep.subr.bf16.mxu0 0
  %3879 = vmatpush1.bf16.msra.mxu0 %v3297
  %3880 = vmatprep.subr.bf16.mxu0 0
  %3881 = vmatpush1.bf16.msra.mxu0 %v3304
  %3882 = vmatprep.subr.bf16.mxu0 0
  %3883 = vmatpush1.bf16.msra.mxu0 %v3311
  %3884 = vmatprep.subr.bf16.mxu0 0
  %3885 = vmatpush1.bf16.msra.mxu0 %v3318
  %3886 = vmatprep.subr.bf16.mxu0 0
  %3887 = vmatpush1.bf16.msra.mxu0 %v3325
  %3888 = vmatprep.subr.bf16.mxu0 0
  %3889 = vmatpush1.bf16.msra.mxu0 %v3332
  %3890 = vmatprep.subr.bf16.mxu0 0
  %3891 = vmatpush1.bf16.msra.mxu0 %v3339
  %3892 = vmatprep.subr.bf16.mxu0 0
  %3893 = vmatpush1.bf16.msra.mxu0 %v3346
  %3894 = vmatprep.subr.bf16.mxu0 0
  %3895 = vmatpush1.bf16.msra.mxu0 %v3353
  %3896 = vmatprep.mubr.bf16.mxu0 %v2132
  %3897 = vmatmul.mubr.bf16.gmra.mrb[0].mxu0 %v2131
  %v3898 = vpop.f32.mrb[0].mxu0
  %v3899 = vadd.f32 %v3859, %v3898
  %v3900 = vpop.f32.mrb[0].mxu0
  %v3901 = vpop.f32.mrb[0].mxu0
  %v3902 = vpop.f32.mrb[0].mxu0
  %3903 = vdwg.mxu0
  %v3904 = vxor.u32 %v3654, 2147483648
  %v3905 = vxor.u32 %v3656, 2147483648
  %v3906 = vxor.u32 %v3736, 2147483648
  %v3907 = vxor.u32 %v3738, 2147483648
  %v3908 = vxor.u32 %v3818, 2147483648
  %v3909 = vxor.u32 %v3820, 2147483648
  %v3910 = vxor.u32 %v3899, 2147483648
  %v3911 = vmul.f32 %v3904, 1.442695
  %v3912 = vpow.pop %v3911
  %v3913 = vmul.f32 %v3905, 1.442695
  %v3914 = vpow.pop %v3913
  %v3915 = vmul.f32 %v3906, 1.442695
  %v3916 = vpow.pop %v3915
  %v3917 = vmul.f32 %v3907, 1.442695
  %v3918 = vpow.pop %v3917
  %v3919 = vmul.f32 %v3908, 1.442695
  %v3920 = vpow.pop %v3919
  %v3921 = vmul.f32 %v3909, 1.442695
  %v3922 = vpow.pop %v3921
  %v3923 = vmul.f32 %v3910, 1.442695
  %v3924 = vpow.pop %v3923
  %v3925 = vadd.f32 %v3912, 1.0
  %v3926 = vadd.f32 %v3914, 1.0
  %v3927 = vadd.f32 %v3916, 1.0
  %v3928 = vadd.f32 %v3918, 1.0
  %v3929 = vadd.f32 %v3920, 1.0
  %v3930 = vadd.f32 %v3922, 1.0
  %v3931 = vadd.f32 %v3924, 1.0
  %v3932 = vrcp.pop %v3925
  %v3933 = vmul.f32 1.0, %v3932
  %v3934 = vrcp.pop %v3926
  %v3935 = vmul.f32 1.0, %v3934
  %v3936 = vrcp.pop %v3927
  %v3937 = vmul.f32 1.0, %v3936
  %v3938 = vrcp.pop %v3928
  %v3939 = vmul.f32 1.0, %v3938
  %v3940 = vrcp.pop %v3929
  %v3941 = vmul.f32 1.0, %v3940
  %v3942 = vrcp.pop %v3930
  %v3943 = vmul.f32 1.0, %v3942
  %v3944 = vrcp.pop %v3931
  %v3945 = vmul.f32 1.0, %v3944
  %v3946 = vpack.c.bf16 %v3933, %v3933
  %v3947 = vpack.c.bf16 %v3935, %v3935
  %v3948 = vpack.c.bf16 %v3937, %v3937
  %v3949 = vpack.c.bf16 %v3939, %v3939
  %v3950 = vpack.c.bf16 %v3941, %v3941
  %v3951 = vpack.c.bf16 %v3943, %v3943
  %v3952 = vpack.c.bf16 %v3945, %v3945
  %v3960 = vunpack.c.l.b16 %v3946
  %v3961 = vunpack.c.l.b16 %v3947
  %v3962 = vunpack.c.l.b16 %v3948
  %v3963 = vunpack.c.l.b16 %v3949
  %v3964 = vunpack.c.l.b16 %v3950
  %v3965 = vunpack.c.l.b16 %v3951
  %v3966 = vunpack.c.l.b16 %v3952
  %v3967 = vpack.c.b16 %v3961, %v3960
  %v3968 = vpack.c.b16 %v3963, %v3962
  %v3969 = vpack.c.b16 %v3965, %v3964
  %v3970 = vpack.c.b16 %v3966, %v3966
  %3975 = vst [vmem:[%s14] sm:$0xff] %v3967
  %3976 = vst [vmem:[%s14 + $0x8] sm:$0xff] %v3968
  %3977 = vst [vmem:[%s14 + $0x10] sm:$0xff] %v3969
  %vm3978 = vcmask 125952
  %3979 = vst.msk [vmem:[%s14 + $0x18] sm:$0xf] %vm3978, %v3970
  // Predicated region
  $region50: #{vae_forward.1} parent=0 // pred_check
    _
  $region51: #{vae_forward.1} parent=0 // pred_check_branch
    %3981 = sbr.rel (0) target = $region53
  $region52: #{vae_forward.1} parent=0 // pred_region
    _
  $region53: #{vae_forward.1} parent=0 // pred_fallthru
    _
  // Predicated region
  $region54: #{vae_forward.1} parent=0 // pred_check
    _
  $region55: #{vae_forward.1} parent=0 // pred_check_branch
    %3983 = sbr.rel (0) target = $region57
  $region56: #{vae_forward.1} parent=0 // pred_region
    _
  $region57: #{vae_forward.1} parent=0 // pred_fallthru
    _
  // Predicated region
  $region58: #{vae_forward.1} parent=0 // pred_check
    _
  $region59: #{vae_forward.1} parent=0 // pred_check_branch
    %3985 = sbr.rel (0) target = $region61
  $region60: #{vae_forward.1} parent=0 // pred_region
    _
  $region61: #{vae_forward.1} parent=0 // pred_fallthru
    _
  // Predicated region
  $region62: #{vae_forward.1} parent=0 // pred_check
    _
  $region63: #{vae_forward.1} parent=0 // pred_check_branch
    %3987 = sbr.rel (0) target = $region65
  $region64: #{vae_forward.1} parent=0 // pred_region
    _
  $region65: #{vae_forward.1} parent=0 // pred_fallthru
    _
  // Predicated region
  $region66: #{vae_forward.1} parent=0 // pred_check
    _
  $region67: #{vae_forward.1} parent=0 // pred_check_branch
    %3989 = sbr.rel (0) target = $region69
  $region68: #{vae_forward.1} parent=0 // pred_region
    _
  $region69: #{vae_forward.1} parent=0 // pred_fallthru
    _
  // Predicated region
  $region70: #{vae_forward.1} parent=0 // pred_check
    _
  $region71: #{vae_forward.1} parent=0 // pred_check_branch
    %3991 = sbr.rel (0) target = $region73
  $region72: #{vae_forward.1} parent=0 // pred_region
    _
  $region73: #{vae_forward.1} parent=0 // pred_fallthru
    _

</llo_original>
